<compile_context>
chip_gen: v5e
topology: v5e:2x2
jax: 0.10.0
libtpu: 0.0.40
codegen_flags: <defaults>
</compile_context>

<pallas_src>
import math

import jax
import jax.numpy as jnp
from jax.experimental import pallas as pl
from jax.experimental.pallas import tpu as pltpu

# ---------------- model hyper-parameters (small, consistent with __init__) ----------------
NNEURON_LIST = (6, 10)                 # nneuron_list
D_MODEL = sum(NNEURON_LIST)            # 16
NNEURON_TOT = D_MODEL
NAREA = len(NNEURON_LIST)              # 2
NHEAD = 4
HEAD_DIM = D_MODEL // NHEAD            # 4
NUM_LAYERS = 2
DIM_FF = 32                            # dim_feedforward
NL_DIM = 4
NFACTOR = 3
NT = 8                                 # spline_basis.shape[0]
NBASIS = 5                             # spline_basis.shape[1]
BATCH = 2                              # M
# dropout = 0.0 -> all nn.Dropout layers are identity.
# decoder_architecture = 0 -> single Linear decoder_fc.
# sample_latent = False -> z = mu (no RNG needed).


# ---------------------------------- in-kernel helpers ----------------------------------
def _layer_norm(y, gamma, beta, eps=1e-5):
    mean = jnp.mean(y, axis=-1, keepdims=True)
    var = jnp.mean(jnp.square(y - mean), axis=-1, keepdims=True)
    return (y - mean) * jax.lax.rsqrt(var + eps) * gamma + beta


def _gelu_exact(x):
    # PyTorch activation='gelu' is the exact erf-based GELU.
    # TODO(synk): lax.erf has no guaranteed Mosaic lowering; erf is evaluated with the
    # Abramowitz-Stegun 7.1.26 polynomial (|abs err| < 1.5e-7, i.e. f32-exact).
    a = x * 0.7071067811865476
    ax = jnp.abs(a)
    t = 1.0 / (1.0 + 0.3275911 * ax)
    poly = t * (0.254829592 + t * (-0.284496736 + t * (1.421413741
               + t * (-1.453152027 + t * 1.061405429))))
    erf_abs = 1.0 - poly * jnp.exp(-ax * ax)
    erf = jnp.where(a >= 0.0, erf_abs, -erf_abs)
    return 0.5 * x * (1.0 + erf)


# ---------------------------------- fused forward kernel ----------------------------------
def fused_forward_kernel(
        xsrc_ref, cls_pe_ref, pe_rows_ref, bias_ref,
        wq_ref, bq_ref, wk_ref, bk_ref, wv_ref, bv_ref,
        wo_ref, bo_ref,
        w1_ref, b1_ref, w2_ref, b2_ref,
        g1_ref, be1_ref, g2_ref, be2_ref,
        pool_ref,
        wmu_ref, bmu_ref, wlv_ref, blv_ref,
        wdec_ref, bdec_ref,
        recon_ref, mu_ref, logvar_ref,
        xbuf_ref):
    f32 = jnp.float32
    B, E = cls_pe_ref.shape                  # B = true batch (attention seq len)
    TB = xsrc_ref.shape[0]                   # nt * B
    SB = B + TB                              # (nt + 1) * B flattened rows, row = s*B + b

    # ---- cls token + positional encoding, assembled in VMEM scratch ----
    xbuf_ref[pl.ds(0, B), :] = cls_pe_ref[...]
    xbuf_ref[pl.ds(B, TB), :] = xsrc_ref[...] + pe_rows_ref[...]
    x = xbuf_ref[...]                        # (SB, E)

    # Precomputed block-diagonal additive bias: query row (s,b) only attends to key
    # rows (s,c) with the same s (attention mixes over the true batch, per the
    # module's batch_first semantics). 0 on the block diagonal, -1e30 elsewhere.
    bias = bias_ref[...]                     # (SB, SB)

    for l in range(NUM_LAYERS):
        # ------------- multi-head self-attention (pre-split, pre-scaled per-head weights) -------------
        attn = jnp.zeros((SB, E), f32)
        for h in range(NHEAD):
            qh = jnp.dot(x, wq_ref[l, h], preferred_element_type=f32) + bq_ref[l, h]
            kh = jnp.dot(x, wk_ref[l, h], preferred_element_type=f32) + bk_ref[l, h]
            vh = jnp.dot(x, wv_ref[l, h], preferred_element_type=f32) + bv_ref[l, h]
            # scores = qh @ kh^T over the head dim (1/sqrt(Dh) folded into Wq/bq),
            # masked to the s-block diagonal by the additive bias.
            sc = jax.lax.dot_general(qh, kh, (((1,), (1,)), ((), ())),
                                     preferred_element_type=f32) + bias
            sc = sc - jnp.max(sc, axis=-1, keepdims=True)
            e = jnp.exp(sc)                                   # masked entries underflow to 0
            denom = jnp.sum(e, axis=-1, keepdims=True)
            r = pl.reciprocal(denom, approx=True)             # EUP slot
            r = r * (2.0 - denom * r)                         # one Newton step -> f32-accurate
            p = e * r
            oh = jnp.dot(p, vh, preferred_element_type=f32)   # (SB, HEAD_DIM)
            # per-head slice of out_proj accumulated -> no lane-axis concatenate
            attn = attn + jnp.dot(oh, wo_ref[l, h], preferred_element_type=f32)
        attn = attn + bo_ref[l]

        # ---------------- post-LN residual blocks ----------------
        x1 = _layer_norm(x + attn, g1_ref[l], be1_ref[l])
        hdn = _gelu_exact(jnp.dot(x1, w1_ref[l], preferred_element_type=f32) + b1_ref[l])
        ffn = jnp.dot(hdn, w2_ref[l], preferred_element_type=f32) + b2_ref[l]
        x = _layer_norm(x1 + ffn, g2_ref[l], be2_ref[l])

    # ---- encoded.mean(dim=0) as a constant selector matmul, then to_latent ----
    pooled = jnp.dot(pool_ref[...], x, preferred_element_type=f32)                 # (B, E)
    mu_ref[...] = jnp.dot(pooled, wmu_ref[...], preferred_element_type=f32) + bmu_ref[...]
    logvar_ref[...] = jnp.dot(pooled, wlv_ref[...], preferred_element_type=f32) + blv_ref[...]

    # ---- decoder: pre-folded (through mu, since z = mu) affine map from pooled;
    #      lane-dense (B, nneuron_tot*nt) output ----
    recon_ref[...] = jnp.dot(pooled, wdec_ref[...], preferred_element_type=f32) + bdec_ref[...]


# ---------------------------------- forward wrapper ----------------------------------
def forward(kp, src):
    M, n_tot, nt = src.shape
    S = nt + 1
    # module's src.permute(2, 0, 1); flatten (nt, M) -> rows, row index = t*M + m.
    x_t = jnp.transpose(src, (2, 0, 1)).reshape(nt * M, n_tot)

    args = (x_t, kp['cls_pe'], kp['pe_rows'], kp['attn_bias'],
            kp['wq'], kp['bq'], kp['wk'], kp['bk'], kp['wv'], kp['bv'],
            kp['wo'], kp['bo'],
            kp['w1'], kp['b1'], kp['w2'], kp['b2'],
            kp['g1'], kp['be1'], kp['g2'], kp['be2'],
            kp['pool'],
            kp['wmu'], kp['bmu'], kp['wlv'], kp['blv'],
            kp['wdec'], kp['bdec'])

    vmem_spec = pl.BlockSpec(memory_space=pltpu.MemorySpace.VMEM)
    recon_flat, mu, logvar = pl.pallas_call(
        fused_forward_kernel,
        out_shape=(
            jax.ShapeDtypeStruct((M, n_tot * nt), jnp.float32),
            jax.ShapeDtypeStruct((M, NL_DIM), jnp.float32),
            jax.ShapeDtypeStruct((M, NL_DIM), jnp.float32),
        ),
        in_specs=[vmem_spec] * len(args),
        out_specs=(vmem_spec, vmem_spec, vmem_spec),
        scratch_shapes=[pltpu.VMEM((S * M, D_MODEL), jnp.float32)],
        # Note: for large batch M one would add a grid over M with
        # dimension_semantics=("parallel",) to use both v7x TensorCores; at M=2
        # a grid only adds per-step overhead, so it is intentionally omitted.
    )(*args)

    z = mu                                        # sample_latent = False
    recon = recon_flat.reshape(M, n_tot, nt)      # contiguous split -> free reshape
    return recon, z, mu, logvar


# ---------------------------------- raw (module-layout) parameters ----------------------------------
def init_params(key, spline_basis):
    """Module-equivalent raw parameters (PyTorch tensor layouts)."""
    def nrm(k, shape, scale=0.1):
        return scale * jax.random.normal(k, shape, dtype=jnp.float32)

    keys = iter(jax.random.split(key, 64))
    raw = {'cls_token': jax.random.normal(next(keys), (1, 1, D_MODEL), dtype=jnp.float32)}

    # PositionalEncoding buffer (only the nt+1 rows the forward ever uses).
    pos = jnp.arange(NT + 1, dtype=jnp.float32)[:, None]
    div = jnp.exp(jnp.arange(0, D_MODEL, 2, dtype=jnp.float32)
                  * (-(math.log(1000.0) / D_MODEL)))
    pe = jnp.zeros((NT + 1, 1, D_MODEL), jnp.float32)
    pe = pe.at[:, 0, 0::2].set(jnp.sin(pos * div))
    pe = pe.at[:, 0, 1::2].set(jnp.cos(pos * div))
    raw['pe'] = pe

    layers = []
    for _ in range(NUM_LAYERS):
        layers.append({
            'in_proj_w': nrm(next(keys), (3 * D_MODEL, D_MODEL)),
            'in_proj_b': nrm(next(keys), (3 * D_MODEL,)),
            'out_w':     nrm(next(keys), (D_MODEL, D_MODEL)),
            'out_b':     nrm(next(keys), (D_MODEL,)),
            'lin1_w':    nrm(next(keys), (DIM_FF, D_MODEL)),
            'lin1_b':    nrm(next(keys), (DIM_FF,)),
            'lin2_w':    nrm(next(keys), (D_MODEL, DIM_FF)),
            'lin2_b':    nrm(next(keys), (D_MODEL,)),
            'ln1_g': jnp.ones((D_MODEL,), jnp.float32),
            'ln1_b': jnp.zeros((D_MODEL,), jnp.float32),
            'ln2_g': jnp.ones((D_MODEL,), jnp.float32),
            'ln2_b': jnp.zeros((D_MODEL,), jnp.float32),
        })
    raw['layers'] = layers

    raw['to_latent_w'] = nrm(next(keys), (2 * NL_DIM, D_MODEL))
    raw['to_latent_b'] = nrm(next(keys), (2 * NL_DIM,))

    P = NBASIS * NAREA * NFACTOR
    raw['dec_w'] = nrm(next(keys), (P, NL_DIM))       # decoder_fc.weight
    raw['dec_b'] = nrm(next(keys), (P,))              # decoder_fc.bias
    raw['readout'] = [(nrm(next(keys), (n, NFACTOR)), nrm(next(keys), (n,)))
                      for n in NNEURON_LIST]          # per-area Linear(nfactor, n)
    raw['spline_basis'] = spline_basis
    return raw


# ---------------------------------- one-time kernel-layout preparation ----------------------------------
def prepare_kernel_params(raw, batch):
    """Exact one-time re-layout / folding of the raw parameters for the fused kernel."""
    E, H, Dh = D_MODEL, NHEAD, HEAD_DIM
    scale = 1.0 / math.sqrt(Dh)
    per_layer = {k: [] for k in ('wq', 'bq', 'wk', 'bk', 'wv', 'bv', 'wo', 'bo',
                                 'w1', 'b1', 'w2', 'b2', 'g1', 'be1', 'g2', 'be2')}
    for lp in raw['layers']:
        Wi, bi = lp['in_proj_w'], lp['in_proj_b']
        # 1/sqrt(head_dim) folded into the query projection (exact).
        for name, Wsub, bsub in (('q', Wi[:E] * scale, bi[:E] * scale),
                                 ('k', Wi[E:2 * E], bi[E:2 * E]),
                                 ('v', Wi[2 * E:], bi[2 * E:])):
            per_layer['w' + name].append(
                jnp.stack([Wsub[h * Dh:(h + 1) * Dh].T for h in range(H)]))          # (H, E, Dh)
            per_layer['b' + name].append(
                jnp.stack([bsub[h * Dh:(h + 1) * Dh][None, :] for h in range(H)]))   # (H, 1, Dh)
        Wo = lp['out_w']
        per_layer['wo'].append(
            jnp.stack([Wo[:, h * Dh:(h + 1) * Dh].T for h in range(H)]))             # (H, Dh, E)
        per_layer['bo'].append(lp['out_b'][None, :])
        per_layer['w1'].append(lp['lin1_w'].T)                                       # (E, FF)
        per_layer['b1'].append(lp['lin1_b'][None, :])
        per_layer['w2'].append(lp['lin2_w'].T)                                       # (FF, E)
        per_layer['b2'].append(lp['lin2_b'][None, :])
        per_layer['g1'].append(lp['ln1_g'][None, :])
        per_layer['be1'].append(lp['ln1_b'][None, :])
        per_layer['g2'].append(lp['ln2_g'][None, :])
        per_layer['be2'].append(lp['ln2_b'][None, :])
    kp = {k: jnp.stack(v) for k, v in per_layer.items()}      # leading layer dim

    # cls token + positional-encoding rows in the kernel's flattened (s*B + b) order.
    pe = raw['pe']
    kp['cls_pe'] = jnp.broadcast_to(raw['cls_token'][0, 0] + pe[0, 0], (batch, E))
    kp['pe_rows'] = jnp.repeat(pe[1:, 0, :], batch, axis=0)                          # (nt*B, E)

    # Block-diagonal attention bias (row/col index = s*B + b): rows with the same s
    # attend to each other (attention over the true batch), everything else -1e30.
    S = NT + 1
    rows = jnp.arange(S * batch) // batch
    kp['attn_bias'] = jnp.where(rows[:, None] == rows[None, :],
                                0.0, -1e30).astype(jnp.float32)                      # (S*B, S*B)

    # encoded.mean(dim=0) as a constant selector matmul.
    cols = jnp.arange(S * batch)
    kp['pool'] = ((cols[None, :] % batch) ==
                  jnp.arange(batch)[:, None]).astype(jnp.float32) / S                # (B, S*B)

    # to_latent split into mu / logvar halves (avoids in-kernel lane slicing).
    Wl, bl = raw['to_latent_w'], raw['to_latent_b']
    kp['wmu'], kp['bmu'] = Wl[:NL_DIM].T, bl[:NL_DIM][None, :]
    kp['wlv'], kp['blv'] = Wl[NL_DIM:].T, bl[NL_DIM:][None, :]

    # Decoder fold (exact): decoder_fc -> spline einsum -> block-diagonal readout
    # -> (-5) -> permute(0,2,1) is affine in z, so contract it once here into a
    # single (nl_dim, nneuron_tot*nt) map; since sample_latent=False (z = mu) it
    # is then folded through the mu half of to_latent so the kernel maps pooled
    # directly to recon. Output columns are ordered n*nt + t so the kernel's flat
    # output reshapes directly to (M, nneuron_tot, nt).
    P2 = NAREA * NFACTOR
    sb = raw['spline_basis']                                                         # (nt, nbasis)
    wd3 = raw['dec_w'].reshape(P2, NBASIS, NL_DIM)
    bd2 = raw['dec_b'].reshape(P2, NBASIS)
    wbig = jnp.zeros((P2, NNEURON_TOT), jnp.float32)                                 # block-diag readout
    bbig, off = [], 0
    for a, (w_a, b_a) in enumerate(raw['readout']):
        n_a = w_a.shape[0]
        wbig = wbig.at[a * NFACTOR:(a + 1) * NFACTOR, off:off + n_a].set(w_a.T)
        bbig.append(b_a)
        off += n_a
    bbig = jnp.concatenate(bbig)                                                     # (nneuron_tot,)
    A = jnp.einsum('pbl,tb->ptl', wd3, sb)                                           # (P2, nt, nl)
    wdec_lat = jnp.einsum('pn,ptl->lnt', wbig, A).reshape(NL_DIM, NNEURON_TOT * NT)  # z -> recon
    bdec_t = jnp.einsum('pn,pt->nt', wbig, jnp.einsum('pb,tb->pt', bd2, sb))
    bdec_lat = (bdec_t + bbig[:, None] - 5.0).reshape(1, NNEURON_TOT * NT)
    kp['wdec'] = kp['wmu'] @ wdec_lat                                                # pooled -> recon
    kp['bdec'] = kp['bmu'] @ wdec_lat + bdec_lat
    return kp


# ---------------------------------- main ----------------------------------
if __name__ == "__main__":
    root = jax.random.PRNGKey(0)
    pkey, skey, xkey = jax.random.split(root, 3)

    spline_basis = jax.random.normal(skey, (NT, NBASIS), dtype=jnp.float32)
    raw_params = init_params(pkey, spline_basis)
    kparams = prepare_kernel_params(raw_params, BATCH)

    src = jax.random.normal(xkey, (BATCH, NNEURON_TOT, NT), dtype=jnp.float32)

    recon, z, mu, logvar = jax.jit(forward)(kparams, src)
    jax.block_until_ready(recon)

    assert recon.shape == (BATCH, NNEURON_TOT, NT), recon.shape
    assert z.shape == (BATCH, NL_DIM) and mu.shape == (BATCH, NL_DIM) \
        and logvar.shape == (BATCH, NL_DIM)
    assert bool(jnp.all(jnp.isfinite(recon))) and bool(jnp.all(jnp.isfinite(mu)))
    print("KERNEL_OK")
</pallas_src>

<mosaic_0001>
module attributes {stable_mosaic.version = 11 : i64} {
  func.func @fused_forward_kernel(%arg0: memref<16x16xf32, #tpu.memory_space<vmem>>, %arg1: memref<2x16xf32, #tpu.memory_space<vmem>>, %arg2: memref<16x16xf32, #tpu.memory_space<vmem>>, %arg3: memref<18x18xf32, #tpu.memory_space<vmem>>, %arg4: memref<2x4x16x4xf32, #tpu.memory_space<vmem>>, %arg5: memref<2x4x1x4xf32, #tpu.memory_space<vmem>>, %arg6: memref<2x4x16x4xf32, #tpu.memory_space<vmem>>, %arg7: memref<2x4x1x4xf32, #tpu.memory_space<vmem>>, %arg8: memref<2x4x16x4xf32, #tpu.memory_space<vmem>>, %arg9: memref<2x4x1x4xf32, #tpu.memory_space<vmem>>, %arg10: memref<2x4x4x16xf32, #tpu.memory_space<vmem>>, %arg11: memref<2x1x16xf32, #tpu.memory_space<vmem>>, %arg12: memref<2x16x32xf32, #tpu.memory_space<vmem>>, %arg13: memref<2x1x32xf32, #tpu.memory_space<vmem>>, %arg14: memref<2x32x16xf32, #tpu.memory_space<vmem>>, %arg15: memref<2x1x16xf32, #tpu.memory_space<vmem>>, %arg16: memref<2x1x16xf32, #tpu.memory_space<vmem>>, %arg17: memref<2x1x16xf32, #tpu.memory_space<vmem>>, %arg18: memref<2x1x16xf32, #tpu.memory_space<vmem>>, %arg19: memref<2x1x16xf32, #tpu.memory_space<vmem>>, %arg20: memref<2x18xf32, #tpu.memory_space<vmem>>, %arg21: memref<16x4xf32, #tpu.memory_space<vmem>>, %arg22: memref<1x4xf32, #tpu.memory_space<vmem>>, %arg23: memref<16x4xf32, #tpu.memory_space<vmem>>, %arg24: memref<1x4xf32, #tpu.memory_space<vmem>>, %arg25: memref<16x128xf32, #tpu.memory_space<vmem>>, %arg26: memref<1x128xf32, #tpu.memory_space<vmem>>, %arg27: memref<2x128xf32, #tpu.memory_space<vmem>>, %arg28: memref<2x4xf32, #tpu.memory_space<vmem>>, %arg29: memref<2x4xf32, #tpu.memory_space<vmem>>, %arg30: memref<18x16xf32, #tpu.memory_space<vmem>>) attributes {dimension_semantics = [], scalar_prefetch = 0 : i64, scratch_operands = 1 : i64, tpu.core_type = #tpu.core_type<tc>} {
    %c0 = arith.constant 0 : index
    %c0_0 = arith.constant 0 : index
    %0 = vector.load %arg1[%c0, %c0_0] : memref<2x16xf32, #tpu.memory_space<vmem>>, vector<2x16xf32>
    %c0_1 = arith.constant 0 : index
    %c0_2 = arith.constant 0 : index
    %1 = vector.load %arg30[%c0_1, %c0_2] : memref<18x16xf32, #tpu.memory_space<vmem>>, vector<2x16xf32>
    tpu.vector_store %arg30[%c0_1, %c0_2], %0 {strides = array<i32>} : memref<18x16xf32, #tpu.memory_space<vmem>>, vector<2x16xf32>,
    %c0_3 = arith.constant 0 : index
    %c0_4 = arith.constant 0 : index
    %2 = vector.load %arg0[%c0_3, %c0_4] : memref<16x16xf32, #tpu.memory_space<vmem>>, vector<16x16xf32>
    %c0_5 = arith.constant 0 : index
    %c0_6 = arith.constant 0 : index
    %3 = vector.load %arg2[%c0_5, %c0_6] : memref<16x16xf32, #tpu.memory_space<vmem>>, vector<16x16xf32>
    %4 = arith.addf %2, %3 : vector<16x16xf32>
    %c2 = arith.constant 2 : index
    %c0_7 = arith.constant 0 : index
    %5 = vector.load %arg30[%c2, %c0_7] : memref<18x16xf32, #tpu.memory_space<vmem>>, vector<16x16xf32>
    tpu.vector_store %arg30[%c2, %c0_7], %4 {strides = array<i32>} : memref<18x16xf32, #tpu.memory_space<vmem>>, vector<16x16xf32>,
    %c0_8 = arith.constant 0 : index
    %c0_9 = arith.constant 0 : index
    %6 = vector.load %arg30[%c0_8, %c0_9] : memref<18x16xf32, #tpu.memory_space<vmem>>, vector<18x16xf32>
    %c0_10 = arith.constant 0 : index
    %c0_11 = arith.constant 0 : index
    %7 = vector.load %arg3[%c0_10, %c0_11] : memref<18x18xf32, #tpu.memory_space<vmem>>, vector<18x18xf32>
    %cst = arith.constant 0.000000e+00 : f32
    %8 = vector.broadcast %cst : f32 to vector<18x16xf32>
    %c0_12 = arith.constant 0 : index
    %c0_13 = arith.constant 0 : index
    %c0_14 = arith.constant 0 : index
    %c0_15 = arith.constant 0 : index
    %9 = vector.load %arg4[%c0_12, %c0_13, %c0_14, %c0_15] : memref<2x4x16x4xf32, #tpu.memory_space<vmem>>, vector<1x1x16x4xf32>
    %10 = vector.shape_cast %9 : vector<1x1x16x4xf32> to vector<16x4xf32>
    %cst_16 = arith.constant dense<0.000000e+00> : vector<18x4xf32>
    %11 = tpu.matmul %6, %10, %cst_16 {dimension_numbers = #tpu.dot_dimension_numbers<[1], [0], [0], [1], [0, 0, 1, 1], [], []>} : vector<18x16xf32>, vector<16x4xf32>, vector<18x4xf32> -> vector<18x4xf32>
    %c0_17 = arith.constant 0 : index
    %c0_18 = arith.constant 0 : index
    %c0_19 = arith.constant 0 : index
    %c0_20 = arith.constant 0 : index
    %12 = vector.load %arg5[%c0_17, %c0_18, %c0_19, %c0_20] : memref<2x4x1x4xf32, #tpu.memory_space<vmem>>, vector<1x1x1x4xf32>
    %13 = vector.shape_cast %12 : vector<1x1x1x4xf32> to vector<1x4xf32>
    %14 = vector.broadcast %13 : vector<1x4xf32> to vector<18x4xf32>
    %15 = arith.addf %11, %14 : vector<18x4xf32>
    %c0_21 = arith.constant 0 : index
    %c0_22 = arith.constant 0 : index
    %c0_23 = arith.constant 0 : index
    %c0_24 = arith.constant 0 : index
    %16 = vector.load %arg6[%c0_21, %c0_22, %c0_23, %c0_24] : memref<2x4x16x4xf32, #tpu.memory_space<vmem>>, vector<1x1x16x4xf32>
    %17 = vector.shape_cast %16 : vector<1x1x16x4xf32> to vector<16x4xf32>
    %cst_25 = arith.constant dense<0.000000e+00> : vector<18x4xf32>
    %18 = tpu.matmul %6, %17, %cst_25 {dimension_numbers = #tpu.dot_dimension_numbers<[1], [0], [0], [1], [0, 0, 1, 1], [], []>} : vector<18x16xf32>, vector<16x4xf32>, vector<18x4xf32> -> vector<18x4xf32>
    %c0_26 = arith.constant 0 : index
    %c0_27 = arith.constant 0 : index
    %c0_28 = arith.constant 0 : index
    %c0_29 = arith.constant 0 : index
    %19 = vector.load %arg7[%c0_26, %c0_27, %c0_28, %c0_29] : memref<2x4x1x4xf32, #tpu.memory_space<vmem>>, vector<1x1x1x4xf32>
    %20 = vector.shape_cast %19 : vector<1x1x1x4xf32> to vector<1x4xf32>
    %21 = vector.broadcast %20 : vector<1x4xf32> to vector<18x4xf32>
    %22 = arith.addf %18, %21 : vector<18x4xf32>
    %c0_30 = arith.constant 0 : index
    %c0_31 = arith.constant 0 : index
    %c0_32 = arith.constant 0 : index
    %c0_33 = arith.constant 0 : index
    %23 = vector.load %arg8[%c0_30, %c0_31, %c0_32, %c0_33] : memref<2x4x16x4xf32, #tpu.memory_space<vmem>>, vector<1x1x16x4xf32>
    %24 = vector.shape_cast %23 : vector<1x1x16x4xf32> to vector<16x4xf32>
    %cst_34 = arith.constant dense<0.000000e+00> : vector<18x4xf32>
    %25 = tpu.matmul %6, %24, %cst_34 {dimension_numbers = #tpu.dot_dimension_numbers<[1], [0], [0], [1], [0, 0, 1, 1], [], []>} : vector<18x16xf32>, vector<16x4xf32>, vector<18x4xf32> -> vector<18x4xf32>
    %c0_35 = arith.constant 0 : index
    %c0_36 = arith.constant 0 : index
    %c0_37 = arith.constant 0 : index
    %c0_38 = arith.constant 0 : index
    %26 = vector.load %arg9[%c0_35, %c0_36, %c0_37, %c0_38] : memref<2x4x1x4xf32, #tpu.memory_space<vmem>>, vector<1x1x1x4xf32>
    %27 = vector.shape_cast %26 : vector<1x1x1x4xf32> to vector<1x4xf32>
    %28 = vector.broadcast %27 : vector<1x4xf32> to vector<18x4xf32>
    %29 = arith.addf %25, %28 : vector<18x4xf32>
    %cst_39 = arith.constant dense<0.000000e+00> : vector<18x18xf32>
    %30 = tpu.matmul %15, %22, %cst_39 {dimension_numbers = #tpu.dot_dimension_numbers<[1], [1], [0], [0], [0, 0, 1, 0], [], []>} : vector<18x4xf32>, vector<18x4xf32>, vector<18x18xf32> -> vector<18x18xf32>
    %31 = arith.addf %30, %7 : vector<18x18xf32>
    %cst_40 = arith.constant dense<0xFF800000> : vector<18xf32>
    %32 = vector.multi_reduction <maximumf>, %31, %cst_40 [1] : vector<18x18xf32> to vector<18xf32>
    %33 = vector.shape_cast %32 : vector<18xf32> to vector<18x1xf32>
    %34 = vector.broadcast %33 : vector<18x1xf32> to vector<18x18xf32>
    %35 = arith.subf %31, %34 : vector<18x18xf32>
    %36 = math.exp %35 : vector<18x18xf32>
    %cst_41 = arith.constant dense<0.000000e+00> : vector<18xf32>
    %37 = vector.multi_reduction <add>, %36, %cst_41 [1] : vector<18x18xf32> to vector<18xf32>
    %38 = vector.shape_cast %37 : vector<18xf32> to vector<18x1xf32>
    %39 = tpu.reciprocal %38 {approx = true} : vector<18x1xf32> -> vector<18x1xf32>
    %40 = arith.mulf %38, %39 : vector<18x1xf32>
    %cst_42 = arith.constant 2.000000e+00 : f32
    %41 = vector.broadcast %cst_42 : f32 to vector<18x1xf32>
    %42 = arith.subf %41, %40 : vector<18x1xf32>
    %43 = arith.mulf %39, %42 : vector<18x1xf32>
    %44 = vector.broadcast %43 : vector<18x1xf32> to vector<18x18xf32>
    %45 = arith.mulf %36, %44 : vector<18x18xf32>
    %cst_43 = arith.constant dense<0.000000e+00> : vector<18x4xf32>
    %46 = tpu.matmul %45, %29, %cst_43 {dimension_numbers = #tpu.dot_dimension_numbers<[1], [0], [0], [1], [0, 0, 1, 1], [], []>} : vector<18x18xf32>, vector<18x4xf32>, vector<18x4xf32> -> vector<18x4xf32>
    %c0_44 = arith.constant 0 : index
    %c0_45 = arith.constant 0 : index
    %c0_46 = arith.constant 0 : index
    %c0_47 = arith.constant 0 : index
    %47 = vector.load %arg10[%c0_44, %c0_45, %c0_46, %c0_47] : memref<2x4x4x16xf32, #tpu.memory_space<vmem>>, vector<1x1x4x16xf32>
    %48 = vector.shape_cast %47 : vector<1x1x4x16xf32> to vector<4x16xf32>
    %cst_48 = arith.constant dense<0.000000e+00> : vector<18x16xf32>
    %49 = tpu.matmul %46, %48, %cst_48 {dimension_numbers = #tpu.dot_dimension_numbers<[1], [0], [0], [1], [0, 0, 1, 1], [], []>} : vector<18x4xf32>, vector<4x16xf32>, vector<18x16xf32> -> vector<18x16xf32>
    %50 = arith.addf %8, %49 : vector<18x16xf32>
    %c0_49 = arith.constant 0 : index
    %c1 = arith.constant 1 : index
    %c0_50 = arith.constant 0 : index
    %c0_51 = arith.constant 0 : index
    %51 = vector.load %arg4[%c0_49, %c1, %c0_50, %c0_51] : memref<2x4x16x4xf32, #tpu.memory_space<vmem>>, vector<1x1x16x4xf32>
    %52 = vector.shape_cast %51 : vector<1x1x16x4xf32> to vector<16x4xf32>
    %cst_52 = arith.constant dense<0.000000e+00> : vector<18x4xf32>
    %53 = tpu.matmul %6, %52, %cst_52 {dimension_numbers = #tpu.dot_dimension_numbers<[1], [0], [0], [1], [0, 0, 1, 1], [], []>} : vector<18x16xf32>, vector<16x4xf32>, vector<18x4xf32> -> vector<18x4xf32>
    %c0_53 = arith.constant 0 : index
    %c1_54 = arith.constant 1 : index
    %c0_55 = arith.constant 0 : index
    %c0_56 = arith.constant 0 : index
    %54 = vector.load %arg5[%c0_53, %c1_54, %c0_55, %c0_56] : memref<2x4x1x4xf32, #tpu.memory_space<vmem>>, vector<1x1x1x4xf32>
    %55 = vector.shape_cast %54 : vector<1x1x1x4xf32> to vector<1x4xf32>
    %56 = vector.broadcast %55 : vector<1x4xf32> to vector<18x4xf32>
    %57 = arith.addf %53, %56 : vector<18x4xf32>
    %c0_57 = arith.constant 0 : index
    %c1_58 = arith.constant 1 : index
    %c0_59 = arith.constant 0 : index
    %c0_60 = arith.constant 0 : index
    %58 = vector.load %arg6[%c0_57, %c1_58, %c0_59, %c0_60] : memref<2x4x16x4xf32, #tpu.memory_space<vmem>>, vector<1x1x16x4xf32>
    %59 = vector.shape_cast %58 : vector<1x1x16x4xf32> to vector<16x4xf32>
    %cst_61 = arith.constant dense<0.000000e+00> : vector<18x4xf32>
    %60 = tpu.matmul %6, %59, %cst_61 {dimension_numbers = #tpu.dot_dimension_numbers<[1], [0], [0], [1], [0, 0, 1, 1], [], []>} : vector<18x16xf32>, vector<16x4xf32>, vector<18x4xf32> -> vector<18x4xf32>
    %c0_62 = arith.constant 0 : index
    %c1_63 = arith.constant 1 : index
    %c0_64 = arith.constant 0 : index
    %c0_65 = arith.constant 0 : index
    %61 = vector.load %arg7[%c0_62, %c1_63, %c0_64, %c0_65] : memref<2x4x1x4xf32, #tpu.memory_space<vmem>>, vector<1x1x1x4xf32>
    %62 = vector.shape_cast %61 : vector<1x1x1x4xf32> to vector<1x4xf32>
    %63 = vector.broadcast %62 : vector<1x4xf32> to vector<18x4xf32>
    %64 = arith.addf %60, %63 : vector<18x4xf32>
    %c0_66 = arith.constant 0 : index
    %c1_67 = arith.constant 1 : index
    %c0_68 = arith.constant 0 : index
    %c0_69 = arith.constant 0 : index
    %65 = vector.load %arg8[%c0_66, %c1_67, %c0_68, %c0_69] : memref<2x4x16x4xf32, #tpu.memory_space<vmem>>, vector<1x1x16x4xf32>
    %66 = vector.shape_cast %65 : vector<1x1x16x4xf32> to vector<16x4xf32>
    %cst_70 = arith.constant dense<0.000000e+00> : vector<18x4xf32>
    %67 = tpu.matmul %6, %66, %cst_70 {dimension_numbers = #tpu.dot_dimension_numbers<[1], [0], [0], [1], [0, 0, 1, 1], [], []>} : vector<18x16xf32>, vector<16x4xf32>, vector<18x4xf32> -> vector<18x4xf32>
    %c0_71 = arith.constant 0 : index
    %c1_72 = arith.constant 1 : index
    %c0_73 = arith.constant 0 : index
    %c0_74 = arith.constant 0 : index
    %68 = vector.load %arg9[%c0_71, %c1_72, %c0_73, %c0_74] : memref<2x4x1x4xf32, #tpu.memory_space<vmem>>, vector<1x1x1x4xf32>
    %69 = vector.shape_cast %68 : vector<1x1x1x4xf32> to vector<1x4xf32>
    %70 = vector.broadcast %69 : vector<1x4xf32> to vector<18x4xf32>
    %71 = arith.addf %67, %70 : vector<18x4xf32>
    %cst_75 = arith.constant dense<0.000000e+00> : vector<18x18xf32>
    %72 = tpu.matmul %57, %64, %cst_75 {dimension_numbers = #tpu.dot_dimension_numbers<[1], [1], [0], [0], [0, 0, 1, 0], [], []>} : vector<18x4xf32>, vector<18x4xf32>, vector<18x18xf32> -> vector<18x18xf32>
    %73 = arith.addf %72, %7 : vector<18x18xf32>
    %cst_76 = arith.constant dense<0xFF800000> : vector<18xf32>
    %74 = vector.multi_reduction <maximumf>, %73, %cst_76 [1] : vector<18x18xf32> to vector<18xf32>
    %75 = vector.shape_cast %74 : vector<18xf32> to vector<18x1xf32>
    %76 = vector.broadcast %75 : vector<18x1xf32> to vector<18x18xf32>
    %77 = arith.subf %73, %76 : vector<18x18xf32>
    %78 = math.exp %77 : vector<18x18xf32>
    %cst_77 = arith.constant dense<0.000000e+00> : vector<18xf32>
    %79 = vector.multi_reduction <add>, %78, %cst_77 [1] : vector<18x18xf32> to vector<18xf32>
    %80 = vector.shape_cast %79 : vector<18xf32> to vector<18x1xf32>
    %81 = tpu.reciprocal %80 {approx = true} : vector<18x1xf32> -> vector<18x1xf32>
    %82 = arith.mulf %80, %81 : vector<18x1xf32>
    %cst_78 = arith.constant 2.000000e+00 : f32
    %83 = vector.broadcast %cst_78 : f32 to vector<18x1xf32>
    %84 = arith.subf %83, %82 : vector<18x1xf32>
    %85 = arith.mulf %81, %84 : vector<18x1xf32>
    %86 = vector.broadcast %85 : vector<18x1xf32> to vector<18x18xf32>
    %87 = arith.mulf %78, %86 : vector<18x18xf32>
    %cst_79 = arith.constant dense<0.000000e+00> : vector<18x4xf32>
    %88 = tpu.matmul %87, %71, %cst_79 {dimension_numbers = #tpu.dot_dimension_numbers<[1], [0], [0], [1], [0, 0, 1, 1], [], []>} : vector<18x18xf32>, vector<18x4xf32>, vector<18x4xf32> -> vector<18x4xf32>
    %c0_80 = arith.constant 0 : index
    %c1_81 = arith.constant 1 : index
    %c0_82 = arith.constant 0 : index
    %c0_83 = arith.constant 0 : index
    %89 = vector.load %arg10[%c0_80, %c1_81, %c0_82, %c0_83] : memref<2x4x4x16xf32, #tpu.memory_space<vmem>>, vector<1x1x4x16xf32>
    %90 = vector.shape_cast %89 : vector<1x1x4x16xf32> to vector<4x16xf32>
    %cst_84 = arith.constant dense<0.000000e+00> : vector<18x16xf32>
    %91 = tpu.matmul %88, %90, %cst_84 {dimension_numbers = #tpu.dot_dimension_numbers<[1], [0], [0], [1], [0, 0, 1, 1], [], []>} : vector<18x4xf32>, vector<4x16xf32>, vector<18x16xf32> -> vector<18x16xf32>
    %92 = arith.addf %50, %91 : vector<18x16xf32>
    %c0_85 = arith.constant 0 : index
    %c2_86 = arith.constant 2 : index
    %c0_87 = arith.constant 0 : index
    %c0_88 = arith.constant 0 : index
    %93 = vector.load %arg4[%c0_85, %c2_86, %c0_87, %c0_88] : memref<2x4x16x4xf32, #tpu.memory_space<vmem>>, vector<1x1x16x4xf32>
    %94 = vector.shape_cast %93 : vector<1x1x16x4xf32> to vector<16x4xf32>
    %cst_89 = arith.constant dense<0.000000e+00> : vector<18x4xf32>
    %95 = tpu.matmul %6, %94, %cst_89 {dimension_numbers = #tpu.dot_dimension_numbers<[1], [0], [0], [1], [0, 0, 1, 1], [], []>} : vector<18x16xf32>, vector<16x4xf32>, vector<18x4xf32> -> vector<18x4xf32>
    %c0_90 = arith.constant 0 : index
    %c2_91 = arith.constant 2 : index
    %c0_92 = arith.constant 0 : index
    %c0_93 = arith.constant 0 : index
    %96 = vector.load %arg5[%c0_90, %c2_91, %c0_92, %c0_93] : memref<2x4x1x4xf32, #tpu.memory_space<vmem>>, vector<1x1x1x4xf32>
    %97 = vector.shape_cast %96 : vector<1x1x1x4xf32> to vector<1x4xf32>
    %98 = vector.broadcast %97 : vector<1x4xf32> to vector<18x4xf32>
    %99 = arith.addf %95, %98 : vector<18x4xf32>
    %c0_94 = arith.constant 0 : index
    %c2_95 = arith.constant 2 : index
    %c0_96 = arith.constant 0 : index
    %c0_97 = arith.constant 0 : index
    %100 = vector.load %arg6[%c0_94, %c2_95, %c0_96, %c0_97] : memref<2x4x16x4xf32, #tpu.memory_space<vmem>>, vector<1x1x16x4xf32>
    %101 = vector.shape_cast %100 : vector<1x1x16x4xf32> to vector<16x4xf32>
    %cst_98 = arith.constant dense<0.000000e+00> : vector<18x4xf32>
    %102 = tpu.matmul %6, %101, %cst_98 {dimension_numbers = #tpu.dot_dimension_numbers<[1], [0], [0], [1], [0, 0, 1, 1], [], []>} : vector<18x16xf32>, vector<16x4xf32>, vector<18x4xf32> -> vector<18x4xf32>
    %c0_99 = arith.constant 0 : index
    %c2_100 = arith.constant 2 : index
    %c0_101 = arith.constant 0 : index
    %c0_102 = arith.constant 0 : index
    %103 = vector.load %arg7[%c0_99, %c2_100, %c0_101, %c0_102] : memref<2x4x1x4xf32, #tpu.memory_space<vmem>>, vector<1x1x1x4xf32>
    %104 = vector.shape_cast %103 : vector<1x1x1x4xf32> to vector<1x4xf32>
    %105 = vector.broadcast %104 : vector<1x4xf32> to vector<18x4xf32>
    %106 = arith.addf %102, %105 : vector<18x4xf32>
    %c0_103 = arith.constant 0 : index
    %c2_104 = arith.constant 2 : index
    %c0_105 = arith.constant 0 : index
    %c0_106 = arith.constant 0 : index
    %107 = vector.load %arg8[%c0_103, %c2_104, %c0_105, %c0_106] : memref<2x4x16x4xf32, #tpu.memory_space<vmem>>, vector<1x1x16x4xf32>
    %108 = vector.shape_cast %107 : vector<1x1x16x4xf32> to vector<16x4xf32>
    %cst_107 = arith.constant dense<0.000000e+00> : vector<18x4xf32>
    %109 = tpu.matmul %6, %108, %cst_107 {dimension_numbers = #tpu.dot_dimension_numbers<[1], [0], [0], [1], [0, 0, 1, 1], [], []>} : vector<18x16xf32>, vector<16x4xf32>, vector<18x4xf32> -> vector<18x4xf32>
    %c0_108 = arith.constant 0 : index
    %c2_109 = arith.constant 2 : index
    %c0_110 = arith.constant 0 : index
    %c0_111 = arith.constant 0 : index
    %110 = vector.load %arg9[%c0_108, %c2_109, %c0_110, %c0_111] : memref<2x4x1x4xf32, #tpu.memory_space<vmem>>, vector<1x1x1x4xf32>
    %111 = vector.shape_cast %110 : vector<1x1x1x4xf32> to vector<1x4xf32>
    %112 = vector.broadcast %111 : vector<1x4xf32> to vector<18x4xf32>
    %113 = arith.addf %109, %112 : vector<18x4xf32>
    %cst_112 = arith.constant dense<0.000000e+00> : vector<18x18xf32>
    %114 = tpu.matmul %99, %106, %cst_112 {dimension_numbers = #tpu.dot_dimension_numbers<[1], [1], [0], [0], [0, 0, 1, 0], [], []>} : vector<18x4xf32>, vector<18x4xf32>, vector<18x18xf32> -> vector<18x18xf32>
    %115 = arith.addf %114, %7 : vector<18x18xf32>
    %cst_113 = arith.constant dense<0xFF800000> : vector<18xf32>
    %116 = vector.multi_reduction <maximumf>, %115, %cst_113 [1] : vector<18x18xf32> to vector<18xf32>
    %117 = vector.shape_cast %116 : vector<18xf32> to vector<18x1xf32>
    %118 = vector.broadcast %117 : vector<18x1xf32> to vector<18x18xf32>
    %119 = arith.subf %115, %118 : vector<18x18xf32>
    %120 = math.exp %119 : vector<18x18xf32>
    %cst_114 = arith.constant dense<0.000000e+00> : vector<18xf32>
    %121 = vector.multi_reduction <add>, %120, %cst_114 [1] : vector<18x18xf32> to vector<18xf32>
    %122 = vector.shape_cast %121 : vector<18xf32> to vector<18x1xf32>
    %123 = tpu.reciprocal %122 {approx = true} : vector<18x1xf32> -> vector<18x1xf32>
    %124 = arith.mulf %122, %123 : vector<18x1xf32>
    %cst_115 = arith.constant 2.000000e+00 : f32
    %125 = vector.broadcast %cst_115 : f32 to vector<18x1xf32>
    %126 = arith.subf %125, %124 : vector<18x1xf32>
    %127 = arith.mulf %123, %126 : vector<18x1xf32>
    %128 = vector.broadcast %127 : vector<18x1xf32> to vector<18x18xf32>
    %129 = arith.mulf %120, %128 : vector<18x18xf32>
    %cst_116 = arith.constant dense<0.000000e+00> : vector<18x4xf32>
    %130 = tpu.matmul %129, %113, %cst_116 {dimension_numbers = #tpu.dot_dimension_numbers<[1], [0], [0], [1], [0, 0, 1, 1], [], []>} : vector<18x18xf32>, vector<18x4xf32>, vector<18x4xf32> -> vector<18x4xf32>
    %c0_117 = arith.constant 0 : index
    %c2_118 = arith.constant 2 : index
    %c0_119 = arith.constant 0 : index
    %c0_120 = arith.constant 0 : index
    %131 = vector.load %arg10[%c0_117, %c2_118, %c0_119, %c0_120] : memref<2x4x4x16xf32, #tpu.memory_space<vmem>>, vector<1x1x4x16xf32>
    %132 = vector.shape_cast %131 : vector<1x1x4x16xf32> to vector<4x16xf32>
    %cst_121 = arith.constant dense<0.000000e+00> : vector<18x16xf32>
    %133 = tpu.matmul %130, %132, %cst_121 {dimension_numbers = #tpu.dot_dimension_numbers<[1], [0], [0], [1], [0, 0, 1, 1], [], []>} : vector<18x4xf32>, vector<4x16xf32>, vector<18x16xf32> -> vector<18x16xf32>
    %134 = arith.addf %92, %133 : vector<18x16xf32>
    %c0_122 = arith.constant 0 : index
    %c3 = arith.constant 3 : index
    %c0_123 = arith.constant 0 : index
    %c0_124 = arith.constant 0 : index
    %135 = vector.load %arg4[%c0_122, %c3, %c0_123, %c0_124] : memref<2x4x16x4xf32, #tpu.memory_space<vmem>>, vector<1x1x16x4xf32>
    %136 = vector.shape_cast %135 : vector<1x1x16x4xf32> to vector<16x4xf32>
    %cst_125 = arith.constant dense<0.000000e+00> : vector<18x4xf32>
    %137 = tpu.matmul %6, %136, %cst_125 {dimension_numbers = #tpu.dot_dimension_numbers<[1], [0], [0], [1], [0, 0, 1, 1], [], []>} : vector<18x16xf32>, vector<16x4xf32>, vector<18x4xf32> -> vector<18x4xf32>
    %c0_126 = arith.constant 0 : index
    %c3_127 = arith.constant 3 : index
    %c0_128 = arith.constant 0 : index
    %c0_129 = arith.constant 0 : index
    %138 = vector.load %arg5[%c0_126, %c3_127, %c0_128, %c0_129] : memref<2x4x1x4xf32, #tpu.memory_space<vmem>>, vector<1x1x1x4xf32>
    %139 = vector.shape_cast %138 : vector<1x1x1x4xf32> to vector<1x4xf32>
    %140 = vector.broadcast %139 : vector<1x4xf32> to vector<18x4xf32>
    %141 = arith.addf %137, %140 : vector<18x4xf32>
    %c0_130 = arith.constant 0 : index
    %c3_131 = arith.constant 3 : index
    %c0_132 = arith.constant 0 : index
    %c0_133 = arith.constant 0 : index
    %142 = vector.load %arg6[%c0_130, %c3_131, %c0_132, %c0_133] : memref<2x4x16x4xf32, #tpu.memory_space<vmem>>, vector<1x1x16x4xf32>
    %143 = vector.shape_cast %142 : vector<1x1x16x4xf32> to vector<16x4xf32>
    %cst_134 = arith.constant dense<0.000000e+00> : vector<18x4xf32>
    %144 = tpu.matmul %6, %143, %cst_134 {dimension_numbers = #tpu.dot_dimension_numbers<[1], [0], [0], [1], [0, 0, 1, 1], [], []>} : vector<18x16xf32>, vector<16x4xf32>, vector<18x4xf32> -> vector<18x4xf32>
    %c0_135 = arith.constant 0 : index
    %c3_136 = arith.constant 3 : index
    %c0_137 = arith.constant 0 : index
    %c0_138 = arith.constant 0 : index
    %145 = vector.load %arg7[%c0_135, %c3_136, %c0_137, %c0_138] : memref<2x4x1x4xf32, #tpu.memory_space<vmem>>, vector<1x1x1x4xf32>
    %146 = vector.shape_cast %145 : vector<1x1x1x4xf32> to vector<1x4xf32>
    %147 = vector.broadcast %146 : vector<1x4xf32> to vector<18x4xf32>
    %148 = arith.addf %144, %147 : vector<18x4xf32>
    %c0_139 = arith.constant 0 : index
    %c3_140 = arith.constant 3 : index
    %c0_141 = arith.constant 0 : index
    %c0_142 = arith.constant 0 : index
    %149 = vector.load %arg8[%c0_139, %c3_140, %c0_141, %c0_142] : memref<2x4x16x4xf32, #tpu.memory_space<vmem>>, vector<1x1x16x4xf32>
    %150 = vector.shape_cast %149 : vector<1x1x16x4xf32> to vector<16x4xf32>
    %cst_143 = arith.constant dense<0.000000e+00> : vector<18x4xf32>
    %151 = tpu.matmul %6, %150, %cst_143 {dimension_numbers = #tpu.dot_dimension_numbers<[1], [0], [0], [1], [0, 0, 1, 1], [], []>} : vector<18x16xf32>, vector<16x4xf32>, vector<18x4xf32> -> vector<18x4xf32>
    %c0_144 = arith.constant 0 : index
    %c3_145 = arith.constant 3 : index
    %c0_146 = arith.constant 0 : index
    %c0_147 = arith.constant 0 : index
    %152 = vector.load %arg9[%c0_144, %c3_145, %c0_146, %c0_147] : memref<2x4x1x4xf32, #tpu.memory_space<vmem>>, vector<1x1x1x4xf32>
    %153 = vector.shape_cast %152 : vector<1x1x1x4xf32> to vector<1x4xf32>
    %154 = vector.broadcast %153 : vector<1x4xf32> to vector<18x4xf32>
    %155 = arith.addf %151, %154 : vector<18x4xf32>
    %cst_148 = arith.constant dense<0.000000e+00> : vector<18x18xf32>
    %156 = tpu.matmul %141, %148, %cst_148 {dimension_numbers = #tpu.dot_dimension_numbers<[1], [1], [0], [0], [0, 0, 1, 0], [], []>} : vector<18x4xf32>, vector<18x4xf32>, vector<18x18xf32> -> vector<18x18xf32>
    %157 = arith.addf %156, %7 : vector<18x18xf32>
    %cst_149 = arith.constant dense<0xFF800000> : vector<18xf32>
    %158 = vector.multi_reduction <maximumf>, %157, %cst_149 [1] : vector<18x18xf32> to vector<18xf32>
    %159 = vector.shape_cast %158 : vector<18xf32> to vector<18x1xf32>
    %160 = vector.broadcast %159 : vector<18x1xf32> to vector<18x18xf32>
    %161 = arith.subf %157, %160 : vector<18x18xf32>
    %162 = math.exp %161 : vector<18x18xf32>
    %cst_150 = arith.constant dense<0.000000e+00> : vector<18xf32>
    %163 = vector.multi_reduction <add>, %162, %cst_150 [1] : vector<18x18xf32> to vector<18xf32>
    %164 = vector.shape_cast %163 : vector<18xf32> to vector<18x1xf32>
    %165 = tpu.reciprocal %164 {approx = true} : vector<18x1xf32> -> vector<18x1xf32>
    %166 = arith.mulf %164, %165 : vector<18x1xf32>
    %cst_151 = arith.constant 2.000000e+00 : f32
    %167 = vector.broadcast %cst_151 : f32 to vector<18x1xf32>
    %168 = arith.subf %167, %166 : vector<18x1xf32>
    %169 = arith.mulf %165, %168 : vector<18x1xf32>
    %170 = vector.broadcast %169 : vector<18x1xf32> to vector<18x18xf32>
    %171 = arith.mulf %162, %170 : vector<18x18xf32>
    %cst_152 = arith.constant dense<0.000000e+00> : vector<18x4xf32>
    %172 = tpu.matmul %171, %155, %cst_152 {dimension_numbers = #tpu.dot_dimension_numbers<[1], [0], [0], [1], [0, 0, 1, 1], [], []>} : vector<18x18xf32>, vector<18x4xf32>, vector<18x4xf32> -> vector<18x4xf32>
    %c0_153 = arith.constant 0 : index
    %c3_154 = arith.constant 3 : index
    %c0_155 = arith.constant 0 : index
    %c0_156 = arith.constant 0 : index
    %173 = vector.load %arg10[%c0_153, %c3_154, %c0_155, %c0_156] : memref<2x4x4x16xf32, #tpu.memory_space<vmem>>, vector<1x1x4x16xf32>
    %174 = vector.shape_cast %173 : vector<1x1x4x16xf32> to vector<4x16xf32>
    %cst_157 = arith.constant dense<0.000000e+00> : vector<18x16xf32>
    %175 = tpu.matmul %172, %174, %cst_157 {dimension_numbers = #tpu.dot_dimension_numbers<[1], [0], [0], [1], [0, 0, 1, 1], [], []>} : vector<18x4xf32>, vector<4x16xf32>, vector<18x16xf32> -> vector<18x16xf32>
    %176 = arith.addf %134, %175 : vector<18x16xf32>
    %c0_158 = arith.constant 0 : index
    %c0_159 = arith.constant 0 : index
    %c0_160 = arith.constant 0 : index
    %177 = vector.load %arg11[%c0_158, %c0_159, %c0_160] : memref<2x1x16xf32, #tpu.memory_space<vmem>>, vector<1x1x16xf32>
    %178 = vector.shape_cast %177 : vector<1x1x16xf32> to vector<1x16xf32>
    %179 = vector.broadcast %178 : vector<1x16xf32> to vector<18x16xf32>
    %180 = arith.addf %176, %179 : vector<18x16xf32>
    %181 = arith.addf %6, %180 : vector<18x16xf32>
    %c0_161 = arith.constant 0 : index
    %c0_162 = arith.constant 0 : index
    %c0_163 = arith.constant 0 : index
    %182 = vector.load %arg16[%c0_161, %c0_162, %c0_163] : memref<2x1x16xf32, #tpu.memory_space<vmem>>, vector<1x1x16xf32>
    %183 = vector.shape_cast %182 : vector<1x1x16xf32> to vector<1x16xf32>
    %c0_164 = arith.constant 0 : index
    %c0_165 = arith.constant 0 : index
    %c0_166 = arith.constant 0 : index
    %184 = vector.load %arg17[%c0_164, %c0_165, %c0_166] : memref<2x1x16xf32, #tpu.memory_space<vmem>>, vector<1x1x16xf32>
    %185 = vector.shape_cast %184 : vector<1x1x16xf32> to vector<1x16xf32>
    %cst_167 = arith.constant dense<0.000000e+00> : vector<18xf32>
    %186 = vector.multi_reduction <add>, %181, %cst_167 [1] : vector<18x16xf32> to vector<18xf32>
    %187 = vector.shape_cast %186 : vector<18xf32> to vector<18x1xf32>
    %cst_168 = arith.constant 1.600000e+01 : f32
    %188 = vector.broadcast %cst_168 : f32 to vector<18x1xf32>
    %189 = arith.divf %187, %188 : vector<18x1xf32>
    %190 = vector.broadcast %189 : vector<18x1xf32> to vector<18x16xf32>
    %191 = arith.subf %181, %190 : vector<18x16xf32>
    %192 = arith.mulf %191, %191 : vector<18x16xf32>
    %cst_169 = arith.constant dense<0.000000e+00> : vector<18xf32>
    %193 = vector.multi_reduction <add>, %192, %cst_169 [1] : vector<18x16xf32> to vector<18xf32>
    %194 = vector.shape_cast %193 : vector<18xf32> to vector<18x1xf32>
    %cst_170 = arith.constant 1.600000e+01 : f32
    %195 = vector.broadcast %cst_170 : f32 to vector<18x1xf32>
    %196 = arith.divf %194, %195 : vector<18x1xf32>
    %197 = vector.broadcast %189 : vector<18x1xf32> to vector<18x16xf32>
    %198 = arith.subf %181, %197 : vector<18x16xf32>
    %cst_171 = arith.constant 9.99999974E-6 : f32
    %199 = vector.broadcast %cst_171 : f32 to vector<18x1xf32>
    %200 = arith.addf %196, %199 : vector<18x1xf32>
    %201 = math.rsqrt %200 : vector<18x1xf32>
    %202 = vector.broadcast %201 : vector<18x1xf32> to vector<18x16xf32>
    %203 = arith.mulf %198, %202 : vector<18x16xf32>
    %204 = vector.broadcast %183 : vector<1x16xf32> to vector<18x16xf32>
    %205 = arith.mulf %203, %204 : vector<18x16xf32>
    %206 = vector.broadcast %185 : vector<1x16xf32> to vector<18x16xf32>
    %207 = arith.addf %205, %206 : vector<18x16xf32>
    %c0_172 = arith.constant 0 : index
    %c0_173 = arith.constant 0 : index
    %c0_174 = arith.constant 0 : index
    %208 = vector.load %arg12[%c0_172, %c0_173, %c0_174] : memref<2x16x32xf32, #tpu.memory_space<vmem>>, vector<1x16x32xf32>
    %209 = vector.shape_cast %208 : vector<1x16x32xf32> to vector<16x32xf32>
    %cst_175 = arith.constant dense<0.000000e+00> : vector<18x32xf32>
    %210 = tpu.matmul %207, %209, %cst_175 {dimension_numbers = #tpu.dot_dimension_numbers<[1], [0], [0], [1], [0, 0, 1, 1], [], []>} : vector<18x16xf32>, vector<16x32xf32>, vector<18x32xf32> -> vector<18x32xf32>
    %c0_176 = arith.constant 0 : index
    %c0_177 = arith.constant 0 : index
    %c0_178 = arith.constant 0 : index
    %211 = vector.load %arg13[%c0_176, %c0_177, %c0_178] : memref<2x1x32xf32, #tpu.memory_space<vmem>>, vector<1x1x32xf32>
    %212 = vector.shape_cast %211 : vector<1x1x32xf32> to vector<1x32xf32>
    %213 = vector.broadcast %212 : vector<1x32xf32> to vector<18x32xf32>
    %214 = arith.addf %210, %213 : vector<18x32xf32>
    %cst_179 = arith.constant 0.707106769 : f32
    %215 = vector.broadcast %cst_179 : f32 to vector<18x32xf32>
    %216 = arith.mulf %214, %215 : vector<18x32xf32>
    %217 = math.absf %216 : vector<18x32xf32>
    %cst_180 = arith.constant 0.327591091 : f32
    %218 = vector.broadcast %cst_180 : f32 to vector<18x32xf32>
    %219 = arith.mulf %218, %217 : vector<18x32xf32>
    %cst_181 = arith.constant 1.000000e+00 : f32
    %220 = vector.broadcast %cst_181 : f32 to vector<18x32xf32>
    %221 = arith.addf %220, %219 : vector<18x32xf32>
    %cst_182 = arith.constant 1.000000e+00 : f32
    %222 = vector.broadcast %cst_182 : f32 to vector<18x32xf32>
    %223 = arith.divf %222, %221 : vector<18x32xf32>
    %cst_183 = arith.constant 1.06140542 : f32
    %224 = vector.broadcast %cst_183 : f32 to vector<18x32xf32>
    %225 = arith.mulf %223, %224 : vector<18x32xf32>
    %cst_184 = arith.constant -1.45315206 : f32
    %226 = vector.broadcast %cst_184 : f32 to vector<18x32xf32>
    %227 = arith.addf %226, %225 : vector<18x32xf32>
    %228 = arith.mulf %223, %227 : vector<18x32xf32>
    %cst_185 = arith.constant 1.42141378 : f32
    %229 = vector.broadcast %cst_185 : f32 to vector<18x32xf32>
    %230 = arith.addf %229, %228 : vector<18x32xf32>
    %231 = arith.mulf %223, %230 : vector<18x32xf32>
    %cst_186 = arith.constant -0.284496725 : f32
    %232 = vector.broadcast %cst_186 : f32 to vector<18x32xf32>
    %233 = arith.addf %232, %231 : vector<18x32xf32>
    %234 = arith.mulf %223, %233 : vector<18x32xf32>
    %cst_187 = arith.constant 0.254829586 : f32
    %235 = vector.broadcast %cst_187 : f32 to vector<18x32xf32>
    %236 = arith.addf %235, %234 : vector<18x32xf32>
    %237 = arith.mulf %223, %236 : vector<18x32xf32>
    %cst_188 = arith.constant 0.000000e+00 : f32
    %238 = vector.broadcast %cst_188 : f32 to vector<18x32xf32>
    %239 = arith.subf %238, %217 : vector<18x32xf32>
    %240 = arith.mulf %239, %217 : vector<18x32xf32>
    %241 = math.exp %240 : vector<18x32xf32>
    %242 = arith.mulf %237, %241 : vector<18x32xf32>
    %cst_189 = arith.constant 1.000000e+00 : f32
    %243 = vector.broadcast %cst_189 : f32 to vector<18x32xf32>
    %244 = arith.subf %243, %242 : vector<18x32xf32>
    %cst_190 = arith.constant 0.000000e+00 : f32
    %245 = vector.broadcast %cst_190 : f32 to vector<18x32xf32>
    %246 = arith.cmpf oge, %216, %245 : vector<18x32xf32>
    %cst_191 = arith.constant 0.000000e+00 : f32
    %247 = vector.broadcast %cst_191 : f32 to vector<18x32xf32>
    %248 = arith.subf %247, %244 : vector<18x32xf32>
    %249 = arith.select %246, %244, %248 : vector<18x32xi1>, vector<18x32xf32>
    %cst_192 = arith.constant 5.000000e-01 : f32
    %250 = vector.broadcast %cst_192 : f32 to vector<18x32xf32>
    %251 = arith.mulf %250, %214 : vector<18x32xf32>
    %cst_193 = arith.constant 1.000000e+00 : f32
    %252 = vector.broadcast %cst_193 : f32 to vector<18x32xf32>
    %253 = arith.addf %252, %249 : vector<18x32xf32>
    %254 = arith.mulf %251, %253 : vector<18x32xf32>
    %c0_194 = arith.constant 0 : index
    %c0_195 = arith.constant 0 : index
    %c0_196 = arith.constant 0 : index
    %255 = vector.load %arg14[%c0_194, %c0_195, %c0_196] : memref<2x32x16xf32, #tpu.memory_space<vmem>>, vector<1x32x16xf32>
    %256 = vector.shape_cast %255 : vector<1x32x16xf32> to vector<32x16xf32>
    %cst_197 = arith.constant dense<0.000000e+00> : vector<18x16xf32>
    %257 = tpu.matmul %254, %256, %cst_197 {dimension_numbers = #tpu.dot_dimension_numbers<[1], [0], [0], [1], [0, 0, 1, 1], [], []>} : vector<18x32xf32>, vector<32x16xf32>, vector<18x16xf32> -> vector<18x16xf32>
    %c0_198 = arith.constant 0 : index
    %c0_199 = arith.constant 0 : index
    %c0_200 = arith.constant 0 : index
    %258 = vector.load %arg15[%c0_198, %c0_199, %c0_200] : memref<2x1x16xf32, #tpu.memory_space<vmem>>, vector<1x1x16xf32>
    %259 = vector.shape_cast %258 : vector<1x1x16xf32> to vector<1x16xf32>
    %260 = vector.broadcast %259 : vector<1x16xf32> to vector<18x16xf32>
    %261 = arith.addf %257, %260 : vector<18x16xf32>
    %262 = arith.addf %207, %261 : vector<18x16xf32>
    %c0_201 = arith.constant 0 : index
    %c0_202 = arith.constant 0 : index
    %c0_203 = arith.constant 0 : index
    %263 = vector.load %arg18[%c0_201, %c0_202, %c0_203] : memref<2x1x16xf32, #tpu.memory_space<vmem>>, vector<1x1x16xf32>
    %264 = vector.shape_cast %263 : vector<1x1x16xf32> to vector<1x16xf32>
    %c0_204 = arith.constant 0 : index
    %c0_205 = arith.constant 0 : index
    %c0_206 = arith.constant 0 : index
    %265 = vector.load %arg19[%c0_204, %c0_205, %c0_206] : memref<2x1x16xf32, #tpu.memory_space<vmem>>, vector<1x1x16xf32>
    %266 = vector.shape_cast %265 : vector<1x1x16xf32> to vector<1x16xf32>
    %cst_207 = arith.constant dense<0.000000e+00> : vector<18xf32>
    %267 = vector.multi_reduction <add>, %262, %cst_207 [1] : vector<18x16xf32> to vector<18xf32>
    %268 = vector.shape_cast %267 : vector<18xf32> to vector<18x1xf32>
    %cst_208 = arith.constant 1.600000e+01 : f32
    %269 = vector.broadcast %cst_208 : f32 to vector<18x1xf32>
    %270 = arith.divf %268, %269 : vector<18x1xf32>
    %271 = vector.broadcast %270 : vector<18x1xf32> to vector<18x16xf32>
    %272 = arith.subf %262, %271 : vector<18x16xf32>
    %273 = arith.mulf %272, %272 : vector<18x16xf32>
    %cst_209 = arith.constant dense<0.000000e+00> : vector<18xf32>
    %274 = vector.multi_reduction <add>, %273, %cst_209 [1] : vector<18x16xf32> to vector<18xf32>
    %275 = vector.shape_cast %274 : vector<18xf32> to vector<18x1xf32>
    %cst_210 = arith.constant 1.600000e+01 : f32
    %276 = vector.broadcast %cst_210 : f32 to vector<18x1xf32>
    %277 = arith.divf %275, %276 : vector<18x1xf32>
    %278 = vector.broadcast %270 : vector<18x1xf32> to vector<18x16xf32>
    %279 = arith.subf %262, %278 : vector<18x16xf32>
    %cst_211 = arith.constant 9.99999974E-6 : f32
    %280 = vector.broadcast %cst_211 : f32 to vector<18x1xf32>
    %281 = arith.addf %277, %280 : vector<18x1xf32>
    %282 = math.rsqrt %281 : vector<18x1xf32>
    %283 = vector.broadcast %282 : vector<18x1xf32> to vector<18x16xf32>
    %284 = arith.mulf %279, %283 : vector<18x16xf32>
    %285 = vector.broadcast %264 : vector<1x16xf32> to vector<18x16xf32>
    %286 = arith.mulf %284, %285 : vector<18x16xf32>
    %287 = vector.broadcast %266 : vector<1x16xf32> to vector<18x16xf32>
    %288 = arith.addf %286, %287 : vector<18x16xf32>
    %cst_212 = arith.constant 0.000000e+00 : f32
    %289 = vector.broadcast %cst_212 : f32 to vector<18x16xf32>
    %c1_213 = arith.constant 1 : index
    %c0_214 = arith.constant 0 : index
    %c0_215 = arith.constant 0 : index
    %c0_216 = arith.constant 0 : index
    %290 = vector.load %arg4[%c1_213, %c0_214, %c0_215, %c0_216] : memref<2x4x16x4xf32, #tpu.memory_space<vmem>>, vector<1x1x16x4xf32>
    %291 = vector.shape_cast %290 : vector<1x1x16x4xf32> to vector<16x4xf32>
    %cst_217 = arith.constant dense<0.000000e+00> : vector<18x4xf32>
    %292 = tpu.matmul %288, %291, %cst_217 {dimension_numbers = #tpu.dot_dimension_numbers<[1], [0], [0], [1], [0, 0, 1, 1], [], []>} : vector<18x16xf32>, vector<16x4xf32>, vector<18x4xf32> -> vector<18x4xf32>
    %c1_218 = arith.constant 1 : index
    %c0_219 = arith.constant 0 : index
    %c0_220 = arith.constant 0 : index
    %c0_221 = arith.constant 0 : index
    %293 = vector.load %arg5[%c1_218, %c0_219, %c0_220, %c0_221] : memref<2x4x1x4xf32, #tpu.memory_space<vmem>>, vector<1x1x1x4xf32>
    %294 = vector.shape_cast %293 : vector<1x1x1x4xf32> to vector<1x4xf32>
    %295 = vector.broadcast %294 : vector<1x4xf32> to vector<18x4xf32>
    %296 = arith.addf %292, %295 : vector<18x4xf32>
    %c1_222 = arith.constant 1 : index
    %c0_223 = arith.constant 0 : index
    %c0_224 = arith.constant 0 : index
    %c0_225 = arith.constant 0 : index
    %297 = vector.load %arg6[%c1_222, %c0_223, %c0_224, %c0_225] : memref<2x4x16x4xf32, #tpu.memory_space<vmem>>, vector<1x1x16x4xf32>
    %298 = vector.shape_cast %297 : vector<1x1x16x4xf32> to vector<16x4xf32>
    %cst_226 = arith.constant dense<0.000000e+00> : vector<18x4xf32>
    %299 = tpu.matmul %288, %298, %cst_226 {dimension_numbers = #tpu.dot_dimension_numbers<[1], [0], [0], [1], [0, 0, 1, 1], [], []>} : vector<18x16xf32>, vector<16x4xf32>, vector<18x4xf32> -> vector<18x4xf32>
    %c1_227 = arith.constant 1 : index
    %c0_228 = arith.constant 0 : index
    %c0_229 = arith.constant 0 : index
    %c0_230 = arith.constant 0 : index
    %300 = vector.load %arg7[%c1_227, %c0_228, %c0_229, %c0_230] : memref<2x4x1x4xf32, #tpu.memory_space<vmem>>, vector<1x1x1x4xf32>
    %301 = vector.shape_cast %300 : vector<1x1x1x4xf32> to vector<1x4xf32>
    %302 = vector.broadcast %301 : vector<1x4xf32> to vector<18x4xf32>
    %303 = arith.addf %299, %302 : vector<18x4xf32>
    %c1_231 = arith.constant 1 : index
    %c0_232 = arith.constant 0 : index
    %c0_233 = arith.constant 0 : index
    %c0_234 = arith.constant 0 : index
    %304 = vector.load %arg8[%c1_231, %c0_232, %c0_233, %c0_234] : memref<2x4x16x4xf32, #tpu.memory_space<vmem>>, vector<1x1x16x4xf32>
    %305 = vector.shape_cast %304 : vector<1x1x16x4xf32> to vector<16x4xf32>
    %cst_235 = arith.constant dense<0.000000e+00> : vector<18x4xf32>
    %306 = tpu.matmul %288, %305, %cst_235 {dimension_numbers = #tpu.dot_dimension_numbers<[1], [0], [0], [1], [0, 0, 1, 1], [], []>} : vector<18x16xf32>, vector<16x4xf32>, vector<18x4xf32> -> vector<18x4xf32>
    %c1_236 = arith.constant 1 : index
    %c0_237 = arith.constant 0 : index
    %c0_238 = arith.constant 0 : index
    %c0_239 = arith.constant 0 : index
    %307 = vector.load %arg9[%c1_236, %c0_237, %c0_238, %c0_239] : memref<2x4x1x4xf32, #tpu.memory_space<vmem>>, vector<1x1x1x4xf32>
    %308 = vector.shape_cast %307 : vector<1x1x1x4xf32> to vector<1x4xf32>
    %309 = vector.broadcast %308 : vector<1x4xf32> to vector<18x4xf32>
    %310 = arith.addf %306, %309 : vector<18x4xf32>
    %cst_240 = arith.constant dense<0.000000e+00> : vector<18x18xf32>
    %311 = tpu.matmul %296, %303, %cst_240 {dimension_numbers = #tpu.dot_dimension_numbers<[1], [1], [0], [0], [0, 0, 1, 0], [], []>} : vector<18x4xf32>, vector<18x4xf32>, vector<18x18xf32> -> vector<18x18xf32>
    %312 = arith.addf %311, %7 : vector<18x18xf32>
    %cst_241 = arith.constant dense<0xFF800000> : vector<18xf32>
    %313 = vector.multi_reduction <maximumf>, %312, %cst_241 [1] : vector<18x18xf32> to vector<18xf32>
    %314 = vector.shape_cast %313 : vector<18xf32> to vector<18x1xf32>
    %315 = vector.broadcast %314 : vector<18x1xf32> to vector<18x18xf32>
    %316 = arith.subf %312, %315 : vector<18x18xf32>
    %317 = math.exp %316 : vector<18x18xf32>
    %cst_242 = arith.constant dense<0.000000e+00> : vector<18xf32>
    %318 = vector.multi_reduction <add>, %317, %cst_242 [1] : vector<18x18xf32> to vector<18xf32>
    %319 = vector.shape_cast %318 : vector<18xf32> to vector<18x1xf32>
    %320 = tpu.reciprocal %319 {approx = true} : vector<18x1xf32> -> vector<18x1xf32>
    %321 = arith.mulf %319, %320 : vector<18x1xf32>
    %cst_243 = arith.constant 2.000000e+00 : f32
    %322 = vector.broadcast %cst_243 : f32 to vector<18x1xf32>
    %323 = arith.subf %322, %321 : vector<18x1xf32>
    %324 = arith.mulf %320, %323 : vector<18x1xf32>
    %325 = vector.broadcast %324 : vector<18x1xf32> to vector<18x18xf32>
    %326 = arith.mulf %317, %325 : vector<18x18xf32>
    %cst_244 = arith.constant dense<0.000000e+00> : vector<18x4xf32>
    %327 = tpu.matmul %326, %310, %cst_244 {dimension_numbers = #tpu.dot_dimension_numbers<[1], [0], [0], [1], [0, 0, 1, 1], [], []>} : vector<18x18xf32>, vector<18x4xf32>, vector<18x4xf32> -> vector<18x4xf32>
    %c1_245 = arith.constant 1 : index
    %c0_246 = arith.constant 0 : index
    %c0_247 = arith.constant 0 : index
    %c0_248 = arith.constant 0 : index
    %328 = vector.load %arg10[%c1_245, %c0_246, %c0_247, %c0_248] : memref<2x4x4x16xf32, #tpu.memory_space<vmem>>, vector<1x1x4x16xf32>
    %329 = vector.shape_cast %328 : vector<1x1x4x16xf32> to vector<4x16xf32>
    %cst_249 = arith.constant dense<0.000000e+00> : vector<18x16xf32>
    %330 = tpu.matmul %327, %329, %cst_249 {dimension_numbers = #tpu.dot_dimension_numbers<[1], [0], [0], [1], [0, 0, 1, 1], [], []>} : vector<18x4xf32>, vector<4x16xf32>, vector<18x16xf32> -> vector<18x16xf32>
    %331 = arith.addf %289, %330 : vector<18x16xf32>
    %c1_250 = arith.constant 1 : index
    %c1_251 = arith.constant 1 : index
    %c0_252 = arith.constant 0 : index
    %c0_253 = arith.constant 0 : index
    %332 = vector.load %arg4[%c1_250, %c1_251, %c0_252, %c0_253] : memref<2x4x16x4xf32, #tpu.memory_space<vmem>>, vector<1x1x16x4xf32>
    %333 = vector.shape_cast %332 : vector<1x1x16x4xf32> to vector<16x4xf32>
    %cst_254 = arith.constant dense<0.000000e+00> : vector<18x4xf32>
    %334 = tpu.matmul %288, %333, %cst_254 {dimension_numbers = #tpu.dot_dimension_numbers<[1], [0], [0], [1], [0, 0, 1, 1], [], []>} : vector<18x16xf32>, vector<16x4xf32>, vector<18x4xf32> -> vector<18x4xf32>
    %c1_255 = arith.constant 1 : index
    %c1_256 = arith.constant 1 : index
    %c0_257 = arith.constant 0 : index
    %c0_258 = arith.constant 0 : index
    %335 = vector.load %arg5[%c1_255, %c1_256, %c0_257, %c0_258] : memref<2x4x1x4xf32, #tpu.memory_space<vmem>>, vector<1x1x1x4xf32>
    %336 = vector.shape_cast %335 : vector<1x1x1x4xf32> to vector<1x4xf32>
    %337 = vector.broadcast %336 : vector<1x4xf32> to vector<18x4xf32>
    %338 = arith.addf %334, %337 : vector<18x4xf32>
    %c1_259 = arith.constant 1 : index
    %c1_260 = arith.constant 1 : index
    %c0_261 = arith.constant 0 : index
    %c0_262 = arith.constant 0 : index
    %339 = vector.load %arg6[%c1_259, %c1_260, %c0_261, %c0_262] : memref<2x4x16x4xf32, #tpu.memory_space<vmem>>, vector<1x1x16x4xf32>
    %340 = vector.shape_cast %339 : vector<1x1x16x4xf32> to vector<16x4xf32>
    %cst_263 = arith.constant dense<0.000000e+00> : vector<18x4xf32>
    %341 = tpu.matmul %288, %340, %cst_263 {dimension_numbers = #tpu.dot_dimension_numbers<[1], [0], [0], [1], [0, 0, 1, 1], [], []>} : vector<18x16xf32>, vector<16x4xf32>, vector<18x4xf32> -> vector<18x4xf32>
    %c1_264 = arith.constant 1 : index
    %c1_265 = arith.constant 1 : index
    %c0_266 = arith.constant 0 : index
    %c0_267 = arith.constant 0 : index
    %342 = vector.load %arg7[%c1_264, %c1_265, %c0_266, %c0_267] : memref<2x4x1x4xf32, #tpu.memory_space<vmem>>, vector<1x1x1x4xf32>
    %343 = vector.shape_cast %342 : vector<1x1x1x4xf32> to vector<1x4xf32>
    %344 = vector.broadcast %343 : vector<1x4xf32> to vector<18x4xf32>
    %345 = arith.addf %341, %344 : vector<18x4xf32>
    %c1_268 = arith.constant 1 : index
    %c1_269 = arith.constant 1 : index
    %c0_270 = arith.constant 0 : index
    %c0_271 = arith.constant 0 : index
    %346 = vector.load %arg8[%c1_268, %c1_269, %c0_270, %c0_271] : memref<2x4x16x4xf32, #tpu.memory_space<vmem>>, vector<1x1x16x4xf32>
    %347 = vector.shape_cast %346 : vector<1x1x16x4xf32> to vector<16x4xf32>
    %cst_272 = arith.constant dense<0.000000e+00> : vector<18x4xf32>
    %348 = tpu.matmul %288, %347, %cst_272 {dimension_numbers = #tpu.dot_dimension_numbers<[1], [0], [0], [1], [0, 0, 1, 1], [], []>} : vector<18x16xf32>, vector<16x4xf32>, vector<18x4xf32> -> vector<18x4xf32>
    %c1_273 = arith.constant 1 : index
    %c1_274 = arith.constant 1 : index
    %c0_275 = arith.constant 0 : index
    %c0_276 = arith.constant 0 : index
    %349 = vector.load %arg9[%c1_273, %c1_274, %c0_275, %c0_276] : memref<2x4x1x4xf32, #tpu.memory_space<vmem>>, vector<1x1x1x4xf32>
    %350 = vector.shape_cast %349 : vector<1x1x1x4xf32> to vector<1x4xf32>
    %351 = vector.broadcast %350 : vector<1x4xf32> to vector<18x4xf32>
    %352 = arith.addf %348, %351 : vector<18x4xf32>
    %cst_277 = arith.constant dense<0.000000e+00> : vector<18x18xf32>
    %353 = tpu.matmul %338, %345, %cst_277 {dimension_numbers = #tpu.dot_dimension_numbers<[1], [1], [0], [0], [0, 0, 1, 0], [], []>} : vector<18x4xf32>, vector<18x4xf32>, vector<18x18xf32> -> vector<18x18xf32>
    %354 = arith.addf %353, %7 : vector<18x18xf32>
    %cst_278 = arith.constant dense<0xFF800000> : vector<18xf32>
    %355 = vector.multi_reduction <maximumf>, %354, %cst_278 [1] : vector<18x18xf32> to vector<18xf32>
    %356 = vector.shape_cast %355 : vector<18xf32> to vector<18x1xf32>
    %357 = vector.broadcast %356 : vector<18x1xf32> to vector<18x18xf32>
    %358 = arith.subf %354, %357 : vector<18x18xf32>
    %359 = math.exp %358 : vector<18x18xf32>
    %cst_279 = arith.constant dense<0.000000e+00> : vector<18xf32>
    %360 = vector.multi_reduction <add>, %359, %cst_279 [1] : vector<18x18xf32> to vector<18xf32>
    %361 = vector.shape_cast %360 : vector<18xf32> to vector<18x1xf32>
    %362 = tpu.reciprocal %361 {approx = true} : vector<18x1xf32> -> vector<18x1xf32>
    %363 = arith.mulf %361, %362 : vector<18x1xf32>
    %cst_280 = arith.constant 2.000000e+00 : f32
    %364 = vector.broadcast %cst_280 : f32 to vector<18x1xf32>
    %365 = arith.subf %364, %363 : vector<18x1xf32>
    %366 = arith.mulf %362, %365 : vector<18x1xf32>
    %367 = vector.broadcast %366 : vector<18x1xf32> to vector<18x18xf32>
    %368 = arith.mulf %359, %367 : vector<18x18xf32>
    %cst_281 = arith.constant dense<0.000000e+00> : vector<18x4xf32>
    %369 = tpu.matmul %368, %352, %cst_281 {dimension_numbers = #tpu.dot_dimension_numbers<[1], [0], [0], [1], [0, 0, 1, 1], [], []>} : vector<18x18xf32>, vector<18x4xf32>, vector<18x4xf32> -> vector<18x4xf32>
    %c1_282 = arith.constant 1 : index
    %c1_283 = arith.constant 1 : index
    %c0_284 = arith.constant 0 : index
    %c0_285 = arith.constant 0 : index
    %370 = vector.load %arg10[%c1_282, %c1_283, %c0_284, %c0_285] : memref<2x4x4x16xf32, #tpu.memory_space<vmem>>, vector<1x1x4x16xf32>
    %371 = vector.shape_cast %370 : vector<1x1x4x16xf32> to vector<4x16xf32>
    %cst_286 = arith.constant dense<0.000000e+00> : vector<18x16xf32>
    %372 = tpu.matmul %369, %371, %cst_286 {dimension_numbers = #tpu.dot_dimension_numbers<[1], [0], [0], [1], [0, 0, 1, 1], [], []>} : vector<18x4xf32>, vector<4x16xf32>, vector<18x16xf32> -> vector<18x16xf32>
    %373 = arith.addf %331, %372 : vector<18x16xf32>
    %c1_287 = arith.constant 1 : index
    %c2_288 = arith.constant 2 : index
    %c0_289 = arith.constant 0 : index
    %c0_290 = arith.constant 0 : index
    %374 = vector.load %arg4[%c1_287, %c2_288, %c0_289, %c0_290] : memref<2x4x16x4xf32, #tpu.memory_space<vmem>>, vector<1x1x16x4xf32>
    %375 = vector.shape_cast %374 : vector<1x1x16x4xf32> to vector<16x4xf32>
    %cst_291 = arith.constant dense<0.000000e+00> : vector<18x4xf32>
    %376 = tpu.matmul %288, %375, %cst_291 {dimension_numbers = #tpu.dot_dimension_numbers<[1], [0], [0], [1], [0, 0, 1, 1], [], []>} : vector<18x16xf32>, vector<16x4xf32>, vector<18x4xf32> -> vector<18x4xf32>
    %c1_292 = arith.constant 1 : index
    %c2_293 = arith.constant 2 : index
    %c0_294 = arith.constant 0 : index
    %c0_295 = arith.constant 0 : index
    %377 = vector.load %arg5[%c1_292, %c2_293, %c0_294, %c0_295] : memref<2x4x1x4xf32, #tpu.memory_space<vmem>>, vector<1x1x1x4xf32>
    %378 = vector.shape_cast %377 : vector<1x1x1x4xf32> to vector<1x4xf32>
    %379 = vector.broadcast %378 : vector<1x4xf32> to vector<18x4xf32>
    %380 = arith.addf %376, %379 : vector<18x4xf32>
    %c1_296 = arith.constant 1 : index
    %c2_297 = arith.constant 2 : index
    %c0_298 = arith.constant 0 : index
    %c0_299 = arith.constant 0 : index
    %381 = vector.load %arg6[%c1_296, %c2_297, %c0_298, %c0_299] : memref<2x4x16x4xf32, #tpu.memory_space<vmem>>, vector<1x1x16x4xf32>
    %382 = vector.shape_cast %381 : vector<1x1x16x4xf32> to vector<16x4xf32>
    %cst_300 = arith.constant dense<0.000000e+00> : vector<18x4xf32>
    %383 = tpu.matmul %288, %382, %cst_300 {dimension_numbers = #tpu.dot_dimension_numbers<[1], [0], [0], [1], [0, 0, 1, 1], [], []>} : vector<18x16xf32>, vector<16x4xf32>, vector<18x4xf32> -> vector<18x4xf32>
    %c1_301 = arith.constant 1 : index
    %c2_302 = arith.constant 2 : index
    %c0_303 = arith.constant 0 : index
    %c0_304 = arith.constant 0 : index
    %384 = vector.load %arg7[%c1_301, %c2_302, %c0_303, %c0_304] : memref<2x4x1x4xf32, #tpu.memory_space<vmem>>, vector<1x1x1x4xf32>
    %385 = vector.shape_cast %384 : vector<1x1x1x4xf32> to vector<1x4xf32>
    %386 = vector.broadcast %385 : vector<1x4xf32> to vector<18x4xf32>
    %387 = arith.addf %383, %386 : vector<18x4xf32>
    %c1_305 = arith.constant 1 : index
    %c2_306 = arith.constant 2 : index
    %c0_307 = arith.constant 0 : index
    %c0_308 = arith.constant 0 : index
    %388 = vector.load %arg8[%c1_305, %c2_306, %c0_307, %c0_308] : memref<2x4x16x4xf32, #tpu.memory_space<vmem>>, vector<1x1x16x4xf32>
    %389 = vector.shape_cast %388 : vector<1x1x16x4xf32> to vector<16x4xf32>
    %cst_309 = arith.constant dense<0.000000e+00> : vector<18x4xf32>
    %390 = tpu.matmul %288, %389, %cst_309 {dimension_numbers = #tpu.dot_dimension_numbers<[1], [0], [0], [1], [0, 0, 1, 1], [], []>} : vector<18x16xf32>, vector<16x4xf32>, vector<18x4xf32> -> vector<18x4xf32>
    %c1_310 = arith.constant 1 : index
    %c2_311 = arith.constant 2 : index
    %c0_312 = arith.constant 0 : index
    %c0_313 = arith.constant 0 : index
    %391 = vector.load %arg9[%c1_310, %c2_311, %c0_312, %c0_313] : memref<2x4x1x4xf32, #tpu.memory_space<vmem>>, vector<1x1x1x4xf32>
    %392 = vector.shape_cast %391 : vector<1x1x1x4xf32> to vector<1x4xf32>
    %393 = vector.broadcast %392 : vector<1x4xf32> to vector<18x4xf32>
    %394 = arith.addf %390, %393 : vector<18x4xf32>
    %cst_314 = arith.constant dense<0.000000e+00> : vector<18x18xf32>
    %395 = tpu.matmul %380, %387, %cst_314 {dimension_numbers = #tpu.dot_dimension_numbers<[1], [1], [0], [0], [0, 0, 1, 0], [], []>} : vector<18x4xf32>, vector<18x4xf32>, vector<18x18xf32> -> vector<18x18xf32>
    %396 = arith.addf %395, %7 : vector<18x18xf32>
    %cst_315 = arith.constant dense<0xFF800000> : vector<18xf32>
    %397 = vector.multi_reduction <maximumf>, %396, %cst_315 [1] : vector<18x18xf32> to vector<18xf32>
    %398 = vector.shape_cast %397 : vector<18xf32> to vector<18x1xf32>
    %399 = vector.broadcast %398 : vector<18x1xf32> to vector<18x18xf32>
    %400 = arith.subf %396, %399 : vector<18x18xf32>
    %401 = math.exp %400 : vector<18x18xf32>
    %cst_316 = arith.constant dense<0.000000e+00> : vector<18xf32>
    %402 = vector.multi_reduction <add>, %401, %cst_316 [1] : vector<18x18xf32> to vector<18xf32>
    %403 = vector.shape_cast %402 : vector<18xf32> to vector<18x1xf32>
    %404 = tpu.reciprocal %403 {approx = true} : vector<18x1xf32> -> vector<18x1xf32>
    %405 = arith.mulf %403, %404 : vector<18x1xf32>
    %cst_317 = arith.constant 2.000000e+00 : f32
    %406 = vector.broadcast %cst_317 : f32 to vector<18x1xf32>
    %407 = arith.subf %406, %405 : vector<18x1xf32>
    %408 = arith.mulf %404, %407 : vector<18x1xf32>
    %409 = vector.broadcast %408 : vector<18x1xf32> to vector<18x18xf32>
    %410 = arith.mulf %401, %409 : vector<18x18xf32>
    %cst_318 = arith.constant dense<0.000000e+00> : vector<18x4xf32>
    %411 = tpu.matmul %410, %394, %cst_318 {dimension_numbers = #tpu.dot_dimension_numbers<[1], [0], [0], [1], [0, 0, 1, 1], [], []>} : vector<18x18xf32>, vector<18x4xf32>, vector<18x4xf32> -> vector<18x4xf32>
    %c1_319 = arith.constant 1 : index
    %c2_320 = arith.constant 2 : index
    %c0_321 = arith.constant 0 : index
    %c0_322 = arith.constant 0 : index
    %412 = vector.load %arg10[%c1_319, %c2_320, %c0_321, %c0_322] : memref<2x4x4x16xf32, #tpu.memory_space<vmem>>, vector<1x1x4x16xf32>
    %413 = vector.shape_cast %412 : vector<1x1x4x16xf32> to vector<4x16xf32>
    %cst_323 = arith.constant dense<0.000000e+00> : vector<18x16xf32>
    %414 = tpu.matmul %411, %413, %cst_323 {dimension_numbers = #tpu.dot_dimension_numbers<[1], [0], [0], [1], [0, 0, 1, 1], [], []>} : vector<18x4xf32>, vector<4x16xf32>, vector<18x16xf32> -> vector<18x16xf32>
    %415 = arith.addf %373, %414 : vector<18x16xf32>
    %c1_324 = arith.constant 1 : index
    %c3_325 = arith.constant 3 : index
    %c0_326 = arith.constant 0 : index
    %c0_327 = arith.constant 0 : index
    %416 = vector.load %arg4[%c1_324, %c3_325, %c0_326, %c0_327] : memref<2x4x16x4xf32, #tpu.memory_space<vmem>>, vector<1x1x16x4xf32>
    %417 = vector.shape_cast %416 : vector<1x1x16x4xf32> to vector<16x4xf32>
    %cst_328 = arith.constant dense<0.000000e+00> : vector<18x4xf32>
    %418 = tpu.matmul %288, %417, %cst_328 {dimension_numbers = #tpu.dot_dimension_numbers<[1], [0], [0], [1], [0, 0, 1, 1], [], []>} : vector<18x16xf32>, vector<16x4xf32>, vector<18x4xf32> -> vector<18x4xf32>
    %c1_329 = arith.constant 1 : index
    %c3_330 = arith.constant 3 : index
    %c0_331 = arith.constant 0 : index
    %c0_332 = arith.constant 0 : index
    %419 = vector.load %arg5[%c1_329, %c3_330, %c0_331, %c0_332] : memref<2x4x1x4xf32, #tpu.memory_space<vmem>>, vector<1x1x1x4xf32>
    %420 = vector.shape_cast %419 : vector<1x1x1x4xf32> to vector<1x4xf32>
    %421 = vector.broadcast %420 : vector<1x4xf32> to vector<18x4xf32>
    %422 = arith.addf %418, %421 : vector<18x4xf32>
    %c1_333 = arith.constant 1 : index
    %c3_334 = arith.constant 3 : index
    %c0_335 = arith.constant 0 : index
    %c0_336 = arith.constant 0 : index
    %423 = vector.load %arg6[%c1_333, %c3_334, %c0_335, %c0_336] : memref<2x4x16x4xf32, #tpu.memory_space<vmem>>, vector<1x1x16x4xf32>
    %424 = vector.shape_cast %423 : vector<1x1x16x4xf32> to vector<16x4xf32>
    %cst_337 = arith.constant dense<0.000000e+00> : vector<18x4xf32>
    %425 = tpu.matmul %288, %424, %cst_337 {dimension_numbers = #tpu.dot_dimension_numbers<[1], [0], [0], [1], [0, 0, 1, 1], [], []>} : vector<18x16xf32>, vector<16x4xf32>, vector<18x4xf32> -> vector<18x4xf32>
    %c1_338 = arith.constant 1 : index
    %c3_339 = arith.constant 3 : index
    %c0_340 = arith.constant 0 : index
    %c0_341 = arith.constant 0 : index
    %426 = vector.load %arg7[%c1_338, %c3_339, %c0_340, %c0_341] : memref<2x4x1x4xf32, #tpu.memory_space<vmem>>, vector<1x1x1x4xf32>
    %427 = vector.shape_cast %426 : vector<1x1x1x4xf32> to vector<1x4xf32>
    %428 = vector.broadcast %427 : vector<1x4xf32> to vector<18x4xf32>
    %429 = arith.addf %425, %428 : vector<18x4xf32>
    %c1_342 = arith.constant 1 : index
    %c3_343 = arith.constant 3 : index
    %c0_344 = arith.constant 0 : index
    %c0_345 = arith.constant 0 : index
    %430 = vector.load %arg8[%c1_342, %c3_343, %c0_344, %c0_345] : memref<2x4x16x4xf32, #tpu.memory_space<vmem>>, vector<1x1x16x4xf32>
    %431 = vector.shape_cast %430 : vector<1x1x16x4xf32> to vector<16x4xf32>
    %cst_346 = arith.constant dense<0.000000e+00> : vector<18x4xf32>
    %432 = tpu.matmul %288, %431, %cst_346 {dimension_numbers = #tpu.dot_dimension_numbers<[1], [0], [0], [1], [0, 0, 1, 1], [], []>} : vector<18x16xf32>, vector<16x4xf32>, vector<18x4xf32> -> vector<18x4xf32>
    %c1_347 = arith.constant 1 : index
    %c3_348 = arith.constant 3 : index
    %c0_349 = arith.constant 0 : index
    %c0_350 = arith.constant 0 : index
    %433 = vector.load %arg9[%c1_347, %c3_348, %c0_349, %c0_350] : memref<2x4x1x4xf32, #tpu.memory_space<vmem>>, vector<1x1x1x4xf32>
    %434 = vector.shape_cast %433 : vector<1x1x1x4xf32> to vector<1x4xf32>
    %435 = vector.broadcast %434 : vector<1x4xf32> to vector<18x4xf32>
    %436 = arith.addf %432, %435 : vector<18x4xf32>
    %cst_351 = arith.constant dense<0.000000e+00> : vector<18x18xf32>
    %437 = tpu.matmul %422, %429, %cst_351 {dimension_numbers = #tpu.dot_dimension_numbers<[1], [1], [0], [0], [0, 0, 1, 0], [], []>} : vector<18x4xf32>, vector<18x4xf32>, vector<18x18xf32> -> vector<18x18xf32>
    %438 = arith.addf %437, %7 : vector<18x18xf32>
    %cst_352 = arith.constant dense<0xFF800000> : vector<18xf32>
    %439 = vector.multi_reduction <maximumf>, %438, %cst_352 [1] : vector<18x18xf32> to vector<18xf32>
    %440 = vector.shape_cast %439 : vector<18xf32> to vector<18x1xf32>
    %441 = vector.broadcast %440 : vector<18x1xf32> to vector<18x18xf32>
    %442 = arith.subf %438, %441 : vector<18x18xf32>
    %443 = math.exp %442 : vector<18x18xf32>
    %cst_353 = arith.constant dense<0.000000e+00> : vector<18xf32>
    %444 = vector.multi_reduction <add>, %443, %cst_353 [1] : vector<18x18xf32> to vector<18xf32>
    %445 = vector.shape_cast %444 : vector<18xf32> to vector<18x1xf32>
    %446 = tpu.reciprocal %445 {approx = true} : vector<18x1xf32> -> vector<18x1xf32>
    %447 = arith.mulf %445, %446 : vector<18x1xf32>
    %cst_354 = arith.constant 2.000000e+00 : f32
    %448 = vector.broadcast %cst_354 : f32 to vector<18x1xf32>
    %449 = arith.subf %448, %447 : vector<18x1xf32>
    %450 = arith.mulf %446, %449 : vector<18x1xf32>
    %451 = vector.broadcast %450 : vector<18x1xf32> to vector<18x18xf32>
    %452 = arith.mulf %443, %451 : vector<18x18xf32>
    %cst_355 = arith.constant dense<0.000000e+00> : vector<18x4xf32>
    %453 = tpu.matmul %452, %436, %cst_355 {dimension_numbers = #tpu.dot_dimension_numbers<[1], [0], [0], [1], [0, 0, 1, 1], [], []>} : vector<18x18xf32>, vector<18x4xf32>, vector<18x4xf32> -> vector<18x4xf32>
    %c1_356 = arith.constant 1 : index
    %c3_357 = arith.constant 3 : index
    %c0_358 = arith.constant 0 : index
    %c0_359 = arith.constant 0 : index
    %454 = vector.load %arg10[%c1_356, %c3_357, %c0_358, %c0_359] : memref<2x4x4x16xf32, #tpu.memory_space<vmem>>, vector<1x1x4x16xf32>
    %455 = vector.shape_cast %454 : vector<1x1x4x16xf32> to vector<4x16xf32>
    %cst_360 = arith.constant dense<0.000000e+00> : vector<18x16xf32>
    %456 = tpu.matmul %453, %455, %cst_360 {dimension_numbers = #tpu.dot_dimension_numbers<[1], [0], [0], [1], [0, 0, 1, 1], [], []>} : vector<18x4xf32>, vector<4x16xf32>, vector<18x16xf32> -> vector<18x16xf32>
    %457 = arith.addf %415, %456 : vector<18x16xf32>
    %c1_361 = arith.constant 1 : index
    %c0_362 = arith.constant 0 : index
    %c0_363 = arith.constant 0 : index
    %458 = vector.load %arg11[%c1_361, %c0_362, %c0_363] : memref<2x1x16xf32, #tpu.memory_space<vmem>>, vector<1x1x16xf32>
    %459 = vector.shape_cast %458 : vector<1x1x16xf32> to vector<1x16xf32>
    %460 = vector.broadcast %459 : vector<1x16xf32> to vector<18x16xf32>
    %461 = arith.addf %457, %460 : vector<18x16xf32>
    %462 = arith.addf %288, %461 : vector<18x16xf32>
    %c1_364 = arith.constant 1 : index
    %c0_365 = arith.constant 0 : index
    %c0_366 = arith.constant 0 : index
    %463 = vector.load %arg16[%c1_364, %c0_365, %c0_366] : memref<2x1x16xf32, #tpu.memory_space<vmem>>, vector<1x1x16xf32>
    %464 = vector.shape_cast %463 : vector<1x1x16xf32> to vector<1x16xf32>
    %c1_367 = arith.constant 1 : index
    %c0_368 = arith.constant 0 : index
    %c0_369 = arith.constant 0 : index
    %465 = vector.load %arg17[%c1_367, %c0_368, %c0_369] : memref<2x1x16xf32, #tpu.memory_space<vmem>>, vector<1x1x16xf32>
    %466 = vector.shape_cast %465 : vector<1x1x16xf32> to vector<1x16xf32>
    %cst_370 = arith.constant dense<0.000000e+00> : vector<18xf32>
    %467 = vector.multi_reduction <add>, %462, %cst_370 [1] : vector<18x16xf32> to vector<18xf32>
    %468 = vector.shape_cast %467 : vector<18xf32> to vector<18x1xf32>
    %cst_371 = arith.constant 1.600000e+01 : f32
    %469 = vector.broadcast %cst_371 : f32 to vector<18x1xf32>
    %470 = arith.divf %468, %469 : vector<18x1xf32>
    %471 = vector.broadcast %470 : vector<18x1xf32> to vector<18x16xf32>
    %472 = arith.subf %462, %471 : vector<18x16xf32>
    %473 = arith.mulf %472, %472 : vector<18x16xf32>
    %cst_372 = arith.constant dense<0.000000e+00> : vector<18xf32>
    %474 = vector.multi_reduction <add>, %473, %cst_372 [1] : vector<18x16xf32> to vector<18xf32>
    %475 = vector.shape_cast %474 : vector<18xf32> to vector<18x1xf32>
    %cst_373 = arith.constant 1.600000e+01 : f32
    %476 = vector.broadcast %cst_373 : f32 to vector<18x1xf32>
    %477 = arith.divf %475, %476 : vector<18x1xf32>
    %478 = vector.broadcast %470 : vector<18x1xf32> to vector<18x16xf32>
    %479 = arith.subf %462, %478 : vector<18x16xf32>
    %cst_374 = arith.constant 9.99999974E-6 : f32
    %480 = vector.broadcast %cst_374 : f32 to vector<18x1xf32>
    %481 = arith.addf %477, %480 : vector<18x1xf32>
    %482 = math.rsqrt %481 : vector<18x1xf32>
    %483 = vector.broadcast %482 : vector<18x1xf32> to vector<18x16xf32>
    %484 = arith.mulf %479, %483 : vector<18x16xf32>
    %485 = vector.broadcast %464 : vector<1x16xf32> to vector<18x16xf32>
    %486 = arith.mulf %484, %485 : vector<18x16xf32>
    %487 = vector.broadcast %466 : vector<1x16xf32> to vector<18x16xf32>
    %488 = arith.addf %486, %487 : vector<18x16xf32>
    %c1_375 = arith.constant 1 : index
    %c0_376 = arith.constant 0 : index
    %c0_377 = arith.constant 0 : index
    %489 = vector.load %arg12[%c1_375, %c0_376, %c0_377] : memref<2x16x32xf32, #tpu.memory_space<vmem>>, vector<1x16x32xf32>
    %490 = vector.shape_cast %489 : vector<1x16x32xf32> to vector<16x32xf32>
    %cst_378 = arith.constant dense<0.000000e+00> : vector<18x32xf32>
    %491 = tpu.matmul %488, %490, %cst_378 {dimension_numbers = #tpu.dot_dimension_numbers<[1], [0], [0], [1], [0, 0, 1, 1], [], []>} : vector<18x16xf32>, vector<16x32xf32>, vector<18x32xf32> -> vector<18x32xf32>
    %c1_379 = arith.constant 1 : index
    %c0_380 = arith.constant 0 : index
    %c0_381 = arith.constant 0 : index
    %492 = vector.load %arg13[%c1_379, %c0_380, %c0_381] : memref<2x1x32xf32, #tpu.memory_space<vmem>>, vector<1x1x32xf32>
    %493 = vector.shape_cast %492 : vector<1x1x32xf32> to vector<1x32xf32>
    %494 = vector.broadcast %493 : vector<1x32xf32> to vector<18x32xf32>
    %495 = arith.addf %491, %494 : vector<18x32xf32>
    %cst_382 = arith.constant 0.707106769 : f32
    %496 = vector.broadcast %cst_382 : f32 to vector<18x32xf32>
    %497 = arith.mulf %495, %496 : vector<18x32xf32>
    %498 = math.absf %497 : vector<18x32xf32>
    %cst_383 = arith.constant 0.327591091 : f32
    %499 = vector.broadcast %cst_383 : f32 to vector<18x32xf32>
    %500 = arith.mulf %499, %498 : vector<18x32xf32>
    %cst_384 = arith.constant 1.000000e+00 : f32
    %501 = vector.broadcast %cst_384 : f32 to vector<18x32xf32>
    %502 = arith.addf %501, %500 : vector<18x32xf32>
    %cst_385 = arith.constant 1.000000e+00 : f32
    %503 = vector.broadcast %cst_385 : f32 to vector<18x32xf32>
    %504 = arith.divf %503, %502 : vector<18x32xf32>
    %cst_386 = arith.constant 1.06140542 : f32
    %505 = vector.broadcast %cst_386 : f32 to vector<18x32xf32>
    %506 = arith.mulf %504, %505 : vector<18x32xf32>
    %cst_387 = arith.constant -1.45315206 : f32
    %507 = vector.broadcast %cst_387 : f32 to vector<18x32xf32>
    %508 = arith.addf %507, %506 : vector<18x32xf32>
    %509 = arith.mulf %504, %508 : vector<18x32xf32>
    %cst_388 = arith.constant 1.42141378 : f32
    %510 = vector.broadcast %cst_388 : f32 to vector<18x32xf32>
    %511 = arith.addf %510, %509 : vector<18x32xf32>
    %512 = arith.mulf %504, %511 : vector<18x32xf32>
    %cst_389 = arith.constant -0.284496725 : f32
    %513 = vector.broadcast %cst_389 : f32 to vector<18x32xf32>
    %514 = arith.addf %513, %512 : vector<18x32xf32>
    %515 = arith.mulf %504, %514 : vector<18x32xf32>
    %cst_390 = arith.constant 0.254829586 : f32
    %516 = vector.broadcast %cst_390 : f32 to vector<18x32xf32>
    %517 = arith.addf %516, %515 : vector<18x32xf32>
    %518 = arith.mulf %504, %517 : vector<18x32xf32>
    %cst_391 = arith.constant 0.000000e+00 : f32
    %519 = vector.broadcast %cst_391 : f32 to vector<18x32xf32>
    %520 = arith.subf %519, %498 : vector<18x32xf32>
    %521 = arith.mulf %520, %498 : vector<18x32xf32>
    %522 = math.exp %521 : vector<18x32xf32>
    %523 = arith.mulf %518, %522 : vector<18x32xf32>
    %cst_392 = arith.constant 1.000000e+00 : f32
    %524 = vector.broadcast %cst_392 : f32 to vector<18x32xf32>
    %525 = arith.subf %524, %523 : vector<18x32xf32>
    %cst_393 = arith.constant 0.000000e+00 : f32
    %526 = vector.broadcast %cst_393 : f32 to vector<18x32xf32>
    %527 = arith.cmpf oge, %497, %526 : vector<18x32xf32>
    %cst_394 = arith.constant 0.000000e+00 : f32
    %528 = vector.broadcast %cst_394 : f32 to vector<18x32xf32>
    %529 = arith.subf %528, %525 : vector<18x32xf32>
    %530 = arith.select %527, %525, %529 : vector<18x32xi1>, vector<18x32xf32>
    %cst_395 = arith.constant 5.000000e-01 : f32
    %531 = vector.broadcast %cst_395 : f32 to vector<18x32xf32>
    %532 = arith.mulf %531, %495 : vector<18x32xf32>
    %cst_396 = arith.constant 1.000000e+00 : f32
    %533 = vector.broadcast %cst_396 : f32 to vector<18x32xf32>
    %534 = arith.addf %533, %530 : vector<18x32xf32>
    %535 = arith.mulf %532, %534 : vector<18x32xf32>
    %c1_397 = arith.constant 1 : index
    %c0_398 = arith.constant 0 : index
    %c0_399 = arith.constant 0 : index
    %536 = vector.load %arg14[%c1_397, %c0_398, %c0_399] : memref<2x32x16xf32, #tpu.memory_space<vmem>>, vector<1x32x16xf32>
    %537 = vector.shape_cast %536 : vector<1x32x16xf32> to vector<32x16xf32>
    %cst_400 = arith.constant dense<0.000000e+00> : vector<18x16xf32>
    %538 = tpu.matmul %535, %537, %cst_400 {dimension_numbers = #tpu.dot_dimension_numbers<[1], [0], [0], [1], [0, 0, 1, 1], [], []>} : vector<18x32xf32>, vector<32x16xf32>, vector<18x16xf32> -> vector<18x16xf32>
    %c1_401 = arith.constant 1 : index
    %c0_402 = arith.constant 0 : index
    %c0_403 = arith.constant 0 : index
    %539 = vector.load %arg15[%c1_401, %c0_402, %c0_403] : memref<2x1x16xf32, #tpu.memory_space<vmem>>, vector<1x1x16xf32>
    %540 = vector.shape_cast %539 : vector<1x1x16xf32> to vector<1x16xf32>
    %541 = vector.broadcast %540 : vector<1x16xf32> to vector<18x16xf32>
    %542 = arith.addf %538, %541 : vector<18x16xf32>
    %543 = arith.addf %488, %542 : vector<18x16xf32>
    %c1_404 = arith.constant 1 : index
    %c0_405 = arith.constant 0 : index
    %c0_406 = arith.constant 0 : index
    %544 = vector.load %arg18[%c1_404, %c0_405, %c0_406] : memref<2x1x16xf32, #tpu.memory_space<vmem>>, vector<1x1x16xf32>
    %545 = vector.shape_cast %544 : vector<1x1x16xf32> to vector<1x16xf32>
    %c1_407 = arith.constant 1 : index
    %c0_408 = arith.constant 0 : index
    %c0_409 = arith.constant 0 : index
    %546 = vector.load %arg19[%c1_407, %c0_408, %c0_409] : memref<2x1x16xf32, #tpu.memory_space<vmem>>, vector<1x1x16xf32>
    %547 = vector.shape_cast %546 : vector<1x1x16xf32> to vector<1x16xf32>
    %cst_410 = arith.constant dense<0.000000e+00> : vector<18xf32>
    %548 = vector.multi_reduction <add>, %543, %cst_410 [1] : vector<18x16xf32> to vector<18xf32>
    %549 = vector.shape_cast %548 : vector<18xf32> to vector<18x1xf32>
    %cst_411 = arith.constant 1.600000e+01 : f32
    %550 = vector.broadcast %cst_411 : f32 to vector<18x1xf32>
    %551 = arith.divf %549, %550 : vector<18x1xf32>
    %552 = vector.broadcast %551 : vector<18x1xf32> to vector<18x16xf32>
    %553 = arith.subf %543, %552 : vector<18x16xf32>
    %554 = arith.mulf %553, %553 : vector<18x16xf32>
    %cst_412 = arith.constant dense<0.000000e+00> : vector<18xf32>
    %555 = vector.multi_reduction <add>, %554, %cst_412 [1] : vector<18x16xf32> to vector<18xf32>
    %556 = vector.shape_cast %555 : vector<18xf32> to vector<18x1xf32>
    %cst_413 = arith.constant 1.600000e+01 : f32
    %557 = vector.broadcast %cst_413 : f32 to vector<18x1xf32>
    %558 = arith.divf %556, %557 : vector<18x1xf32>
    %559 = vector.broadcast %551 : vector<18x1xf32> to vector<18x16xf32>
    %560 = arith.subf %543, %559 : vector<18x16xf32>
    %cst_414 = arith.constant 9.99999974E-6 : f32
    %561 = vector.broadcast %cst_414 : f32 to vector<18x1xf32>
    %562 = arith.addf %558, %561 : vector<18x1xf32>
    %563 = math.rsqrt %562 : vector<18x1xf32>
    %564 = vector.broadcast %563 : vector<18x1xf32> to vector<18x16xf32>
    %565 = arith.mulf %560, %564 : vector<18x16xf32>
    %566 = vector.broadcast %545 : vector<1x16xf32> to vector<18x16xf32>
    %567 = arith.mulf %565, %566 : vector<18x16xf32>
    %568 = vector.broadcast %547 : vector<1x16xf32> to vector<18x16xf32>
    %569 = arith.addf %567, %568 : vector<18x16xf32>
    %c0_415 = arith.constant 0 : index
    %c0_416 = arith.constant 0 : index
    %570 = vector.load %arg20[%c0_415, %c0_416] : memref<2x18xf32, #tpu.memory_space<vmem>>, vector<2x18xf32>
    %cst_417 = arith.constant dense<0.000000e+00> : vector<2x16xf32>
    %571 = tpu.matmul %570, %569, %cst_417 {dimension_numbers = #tpu.dot_dimension_numbers<[1], [0], [0], [1], [0, 0, 1, 1], [], []>} : vector<2x18xf32>, vector<18x16xf32>, vector<2x16xf32> -> vector<2x16xf32>
    %c0_418 = arith.constant 0 : index
    %c0_419 = arith.constant 0 : index
    %572 = vector.load %arg21[%c0_418, %c0_419] : memref<16x4xf32, #tpu.memory_space<vmem>>, vector<16x4xf32>
    %cst_420 = arith.constant dense<0.000000e+00> : vector<2x4xf32>
    %573 = tpu.matmul %571, %572, %cst_420 {dimension_numbers = #tpu.dot_dimension_numbers<[1], [0], [0], [1], [0, 0, 1, 1], [], []>} : vector<2x16xf32>, vector<16x4xf32>, vector<2x4xf32> -> vector<2x4xf32>
    %c0_421 = arith.constant 0 : index
    %c0_422 = arith.constant 0 : index
    %574 = vector.load %arg22[%c0_421, %c0_422] : memref<1x4xf32, #tpu.memory_space<vmem>>, vector<1x4xf32>
    %575 = vector.broadcast %574 : vector<1x4xf32> to vector<2x4xf32>
    %576 = arith.addf %573, %575 : vector<2x4xf32>
    %c0_423 = arith.constant 0 : index
    %c0_424 = arith.constant 0 : index
    %577 = vector.load %arg28[%c0_423, %c0_424] : memref<2x4xf32, #tpu.memory_space<vmem>>, vector<2x4xf32>
    tpu.vector_store %arg28[%c0_423, %c0_424], %576 {strides = array<i32>} : memref<2x4xf32, #tpu.memory_space<vmem>>, vector<2x4xf32>,
    %c0_425 = arith.constant 0 : index
    %c0_426 = arith.constant 0 : index
    %578 = vector.load %arg23[%c0_425, %c0_426] : memref<16x4xf32, #tpu.memory_space<vmem>>, vector<16x4xf32>
    %cst_427 = arith.constant dense<0.000000e+00> : vector<2x4xf32>
    %579 = tpu.matmul %571, %578, %cst_427 {dimension_numbers = #tpu.dot_dimension_numbers<[1], [0], [0], [1], [0, 0, 1, 1], [], []>} : vector<2x16xf32>, vector<16x4xf32>, vector<2x4xf32> -> vector<2x4xf32>
    %c0_428 = arith.constant 0 : index
    %c0_429 = arith.constant 0 : index
    %580 = vector.load %arg24[%c0_428, %c0_429] : memref<1x4xf32, #tpu.memory_space<vmem>>, vector<1x4xf32>
    %581 = vector.broadcast %580 : vector<1x4xf32> to vector<2x4xf32>
    %582 = arith.addf %579, %581 : vector<2x4xf32>
    %c0_430 = arith.constant 0 : index
    %c0_431 = arith.constant 0 : index
    %583 = vector.load %arg29[%c0_430, %c0_431] : memref<2x4xf32, #tpu.memory_space<vmem>>, vector<2x4xf32>
    tpu.vector_store %arg29[%c0_430, %c0_431], %582 {strides = array<i32>} : memref<2x4xf32, #tpu.memory_space<vmem>>, vector<2x4xf32>,
    %c0_432 = arith.constant 0 : index
    %c0_433 = arith.constant 0 : index
    %584 = vector.load %arg25[%c0_432, %c0_433] : memref<16x128xf32, #tpu.memory_space<vmem>>, vector<16x128xf32>
    %cst_434 = arith.constant dense<0.000000e+00> : vector<2x128xf32>
    %585 = tpu.matmul %571, %584, %cst_434 {dimension_numbers = #tpu.dot_dimension_numbers<[1], [0], [0], [1], [0, 0, 1, 1], [], []>} : vector<2x16xf32>, vector<16x128xf32>, vector<2x128xf32> -> vector<2x128xf32>
    %c0_435 = arith.constant 0 : index
    %c0_436 = arith.constant 0 : index
    %586 = vector.load %arg26[%c0_435, %c0_436] : memref<1x128xf32, #tpu.memory_space<vmem>>, vector<1x128xf32>
    %587 = vector.broadcast %586 : vector<1x128xf32> to vector<2x128xf32>
    %588 = arith.addf %585, %587 : vector<2x128xf32>
    %c0_437 = arith.constant 0 : index
    %c0_438 = arith.constant 0 : index
    %589 = vector.load %arg27[%c0_437, %c0_438] : memref<2x128xf32, #tpu.memory_space<vmem>>, vector<2x128xf32>
    tpu.vector_store %arg27[%c0_437, %c0_438], %588 {strides = array<i32>} : memref<2x128xf32, #tpu.memory_space<vmem>>, vector<2x128xf32>,
    return
  }
}

</mosaic_0001>

<llo_original>
// kernel: forward.1
$region0: #{forward.1}
  #allocation0 [shape = 'u32[]', space=smem, size = 0x4, offset = 0x4, fixed_abs, tag = 'smem constant byte address 0x4 - core index']
  #allocation1 [shape = 'u32[72,128]{1,0:T(1,128)}', space=vmem, size = 0x9000, scoped, tag = 'internal scratch']
  #allocation2 [shape = 'f32[18,16]{1,0:T(8,128)}', space=vmem, size = 0x3000, scoped, tag = 'scratch operand']
  %s0 = inlined_call_operand.smem [shape: u32[30], index: -1, kind: input, shape index: {}]
  %s1 = sld [smem:[%s0]]
  %s2 = scalar_lea.smem %s0, 1
  %s3 = sld [smem:[%s2]]
  %s4 = scalar_lea.smem %s0, 2
  %s5 = sld [smem:[%s4]]
  %s6 = scalar_lea.smem %s0, 3
  %s7 = sld [smem:[%s6]]
  %s8 = scalar_lea.smem %s0, 4
  %s9 = sld [smem:[%s8]]
  %s10 = scalar_lea.smem %s0, 5
  %s11 = sld [smem:[%s10]]
  %s12 = scalar_lea.smem %s0, 6
  %s13 = sld [smem:[%s12]]
  %s14 = scalar_lea.smem %s0, 7
  %s15 = sld [smem:[%s14]]
  %s16 = scalar_lea.smem %s0, 8
  %s17 = sld [smem:[%s16]]
  %s18 = scalar_lea.smem %s0, 9
  %s19 = sld [smem:[%s18]]
  %s20 = scalar_lea.smem %s0, 10
  %s21 = sld [smem:[%s20]]
  %s22 = scalar_lea.smem %s0, 11
  %s23 = sld [smem:[%s22]]
  %s24 = scalar_lea.smem %s0, 12
  %s25 = sld [smem:[%s24]]
  %s26 = scalar_lea.smem %s0, 13
  %s27 = sld [smem:[%s26]]
  %s28 = scalar_lea.smem %s0, 14
  %s29 = sld [smem:[%s28]]
  %s30 = scalar_lea.smem %s0, 15
  %s31 = sld [smem:[%s30]]
  %s32 = scalar_lea.smem %s0, 16
  %s33 = sld [smem:[%s32]]
  %s34 = scalar_lea.smem %s0, 17
  %s35 = sld [smem:[%s34]]
  %s36 = scalar_lea.smem %s0, 18
  %s37 = sld [smem:[%s36]]
  %s38 = scalar_lea.smem %s0, 19
  %s39 = sld [smem:[%s38]]
  %s40 = scalar_lea.smem %s0, 20
  %s41 = sld [smem:[%s40]]
  %s42 = scalar_lea.smem %s0, 21
  %s43 = sld [smem:[%s42]]
  %s44 = scalar_lea.smem %s0, 22
  %s45 = sld [smem:[%s44]]
  %s46 = scalar_lea.smem %s0, 23
  %s47 = sld [smem:[%s46]]
  %s48 = scalar_lea.smem %s0, 24
  %s49 = sld [smem:[%s48]]
  %s50 = scalar_lea.smem %s0, 25
  %s51 = sld [smem:[%s50]]
  %s52 = scalar_lea.smem %s0, 26
  %s53 = sld [smem:[%s52]]
  %s54 = scalar_lea.smem %s0, 27
  %s55 = sld [smem:[%s54]]
  %s56 = scalar_lea.smem %s0, 28
  %s57 = sld [smem:[%s56]]
  %s58 = scalar_lea.smem %s0, 29
  %s59 = sld [smem:[%s58]]
  %60 = xla_tuple %s55, %s57, %s59
  %s61 = sld [smem:[#allocation0]]
  $region134: #{forward.1} parent=0
    _
  %s63 = ssub.s32 1, %s61
  %s64 = scalar_select 0, %s63, %s61
  $region1: #{forward.1} parent=0
    #allocation3 [shape = 'u8[1024]{0}', space=vmem, size = 0x400, scoped, tag = 'output window, operand 2, single buffered']
    #allocation4 [shape = 's32[1]{0}', space=sflag, size = 0x4, scoped, tag = 'scoped memory for forward.1']
    %65 = vsyncpa [#allocation4], 0
    // Predicated region
    $region2: #{forward.1} parent=1 // pred_check
      _
    $region3: #{forward.1} parent=1 // pred_check_branch
      %67 = sbr.rel (0) target = $region5
    $region4: #{forward.1} parent=1 // pred_region
      _
    $region5: #{forward.1} parent=1 // pred_fallthru
      _
    // Predicated region
    $region6: #{forward.1} parent=1 // pred_check
      _
    $region7: #{forward.1} parent=1 // pred_check_branch
      %69 = sbr.rel (0) target = $region9
    $region8: #{forward.1} parent=1 // pred_region
      _
    $region9: #{forward.1} parent=1 // pred_fallthru
      _
    // Predicated region
    $region10: #{forward.1} parent=1 // pred_check
      _
    $region11: #{forward.1} parent=1 // pred_check_branch
      %71 = sbr.rel (0) target = $region13
    $region12: #{forward.1} parent=1 // pred_region
      _
    $region13: #{forward.1} parent=1 // pred_fallthru
      _
    // Predicated region
    $region14: #{forward.1} parent=1 // pred_check
      _
    $region15: #{forward.1} parent=1 // pred_check_branch
      %73 = sbr.rel (0) target = $region17
    $region16: #{forward.1} parent=1 // pred_region
      _
    $region17: #{forward.1} parent=1 // pred_fallthru
      _
    // Predicated region
    $region18: #{forward.1} parent=1 // pred_check
      _
    $region19: #{forward.1} parent=1 // pred_check_branch
      %75 = sbr.rel (0) target = $region21
    $region20: #{forward.1} parent=1 // pred_region
      _
    $region21: #{forward.1} parent=1 // pred_fallthru
      _
    // Predicated region
    $region22: #{forward.1} parent=1 // pred_check
      _
    $region23: #{forward.1} parent=1 // pred_check_branch
      %77 = sbr.rel (0) target = $region25
    $region24: #{forward.1} parent=1 // pred_region
      _
    $region25: #{forward.1} parent=1 // pred_fallthru
      _
    // Predicated region
    $region26: #{forward.1} parent=1 // pred_check
      _
    $region27: #{forward.1} parent=1 // pred_check_branch
      %79 = sbr.rel (0) target = $region29
    $region28: #{forward.1} parent=1 // pred_region
      _
    $region29: #{forward.1} parent=1 // pred_fallthru
      _
    // Predicated region
    $region30: #{forward.1} parent=1 // pred_check
      _
    $region31: #{forward.1} parent=1 // pred_check_branch
      %81 = sbr.rel (0) target = $region33
    $region32: #{forward.1} parent=1 // pred_region
      _
    $region33: #{forward.1} parent=1 // pred_fallthru
      _
    // Predicated region
    $region34: #{forward.1} parent=1 // pred_check
      _
    $region35: #{forward.1} parent=1 // pred_check_branch
      %83 = sbr.rel (0) target = $region37
    $region36: #{forward.1} parent=1 // pred_region
      _
    $region37: #{forward.1} parent=1 // pred_fallthru
      _
    // Predicated region
    $region38: #{forward.1} parent=1 // pred_check
      _
    $region39: #{forward.1} parent=1 // pred_check_branch
      %85 = sbr.rel (0) target = $region41
    $region40: #{forward.1} parent=1 // pred_region
      _
    $region41: #{forward.1} parent=1 // pred_fallthru
      _
    // Predicated region
    $region42: #{forward.1} parent=1 // pred_check
      _
    $region43: #{forward.1} parent=1 // pred_check_branch
      %87 = sbr.rel (0) target = $region45
    $region44: #{forward.1} parent=1 // pred_region
      _
    $region45: #{forward.1} parent=1 // pred_fallthru
      _
    // Predicated region
    $region46: #{forward.1} parent=1 // pred_check
      _
    $region47: #{forward.1} parent=1 // pred_check_branch
      %89 = sbr.rel (0) target = $region49
    $region48: #{forward.1} parent=1 // pred_region
      _
    $region49: #{forward.1} parent=1 // pred_fallthru
      _
    // Predicated region
    $region50: #{forward.1} parent=1 // pred_check
      _
    $region51: #{forward.1} parent=1 // pred_check_branch
      %91 = sbr.rel (0) target = $region53
    $region52: #{forward.1} parent=1 // pred_region
      _
    $region53: #{forward.1} parent=1 // pred_fallthru
      _
    // Predicated region
    $region54: #{forward.1} parent=1 // pred_check
      _
    $region55: #{forward.1} parent=1 // pred_check_branch
      %93 = sbr.rel (0) target = $region57
    $region56: #{forward.1} parent=1 // pred_region
      _
    $region57: #{forward.1} parent=1 // pred_fallthru
      _
    // Predicated region
    $region58: #{forward.1} parent=1 // pred_check
      _
    $region59: #{forward.1} parent=1 // pred_check_branch
      %95 = sbr.rel (0) target = $region61
    $region60: #{forward.1} parent=1 // pred_region
      _
    $region61: #{forward.1} parent=1 // pred_fallthru
      _
    // Predicated region
    $region62: #{forward.1} parent=1 // pred_check
      _
    $region63: #{forward.1} parent=1 // pred_check_branch
      %97 = sbr.rel (0) target = $region65
    $region64: #{forward.1} parent=1 // pred_region
      _
    $region65: #{forward.1} parent=1 // pred_fallthru
      _
    // Predicated region
    $region66: #{forward.1} parent=1 // pred_check
      _
    $region67: #{forward.1} parent=1 // pred_check_branch
      %99 = sbr.rel (0) target = $region69
    $region68: #{forward.1} parent=1 // pred_region
      _
    $region69: #{forward.1} parent=1 // pred_fallthru
      _
    // Predicated region
    $region70: #{forward.1} parent=1 // pred_check
      _
    $region71: #{forward.1} parent=1 // pred_check_branch
      %101 = sbr.rel (0) target = $region73
    $region72: #{forward.1} parent=1 // pred_region
      _
    $region73: #{forward.1} parent=1 // pred_fallthru
      _
    // Predicated region
    $region74: #{forward.1} parent=1 // pred_check
      _
    $region75: #{forward.1} parent=1 // pred_check_branch
      %103 = sbr.rel (0) target = $region77
    $region76: #{forward.1} parent=1 // pred_region
      _
    $region77: #{forward.1} parent=1 // pred_fallthru
      _
    // Predicated region
    $region78: #{forward.1} parent=1 // pred_check
      _
    $region79: #{forward.1} parent=1 // pred_check_branch
      %105 = sbr.rel (0) target = $region81
    $region80: #{forward.1} parent=1 // pred_region
      _
    $region81: #{forward.1} parent=1 // pred_fallthru
      _
    // Predicated region
    $region82: #{forward.1} parent=1 // pred_check
      _
    $region83: #{forward.1} parent=1 // pred_check_branch
      %107 = sbr.rel (0) target = $region85
    $region84: #{forward.1} parent=1 // pred_region
      _
    $region85: #{forward.1} parent=1 // pred_fallthru
      _
    // Predicated region
    $region86: #{forward.1} parent=1 // pred_check
      _
    $region87: #{forward.1} parent=1 // pred_check_branch
      %109 = sbr.rel (0) target = $region89
    $region88: #{forward.1} parent=1 // pred_region
      _
    $region89: #{forward.1} parent=1 // pred_fallthru
      _
    // Predicated region
    $region90: #{forward.1} parent=1 // pred_check
      _
    $region91: #{forward.1} parent=1 // pred_check_branch
      %111 = sbr.rel (0) target = $region93
    $region92: #{forward.1} parent=1 // pred_region
      _
    $region93: #{forward.1} parent=1 // pred_fallthru
      _
    // Predicated region
    $region94: #{forward.1} parent=1 // pred_check
      _
    $region95: #{forward.1} parent=1 // pred_check_branch
      %113 = sbr.rel (0) target = $region97
    $region96: #{forward.1} parent=1 // pred_region
      _
    $region97: #{forward.1} parent=1 // pred_fallthru
      _
    // Predicated region
    $region98: #{forward.1} parent=1 // pred_check
      _
    $region99: #{forward.1} parent=1 // pred_check_branch
      %115 = sbr.rel (0) target = $region101
    $region100: #{forward.1} parent=1 // pred_region
      _
    $region101: #{forward.1} parent=1 // pred_fallthru
      _
    // Predicated region
    $region102: #{forward.1} parent=1 // pred_check
      _
    $region103: #{forward.1} parent=1 // pred_check_branch
      %117 = sbr.rel (0) target = $region105
    $region104: #{forward.1} parent=1 // pred_region
      _
    $region105: #{forward.1} parent=1 // pred_fallthru
      _
    // Predicated region
    $region106: #{forward.1} parent=1 // pred_check
      _
    $region107: #{forward.1} parent=1 // pred_check_branch
      %119 = sbr.rel (0) target = $region109
    $region108: #{forward.1} parent=1 // pred_region
      _
    $region109: #{forward.1} parent=1 // pred_fallthru
      _
    %v120 = vld [vmem:[%s3] sm:$0x3]
    %vm121 = vcmask 123904
    %122 = vst.msk [vmem:[#allocation2] sm:$0x3] %vm121, %v120
    %v123 = vld [vmem:[%s1] sm:$0xff]
    %v124 = vld [vmem:[%s1 + $0x8] sm:$0xff]
    %v125 = vld [vmem:[%s5] sm:$0xff]
    %v126 = vld [vmem:[%s5 + $0x8] sm:$0xff]
    %v127 = vadd.f32 %v123, %v125
    %v128 = vadd.f32 %v124, %v126
    %vm129 = vcmask 130048
    %130 = vst.msk [vmem:[#allocation2 + $0x2] sm:$0xff] %vm129, %v127
    %131 = vst.msk [vmem:[#allocation2 + $0xa] sm:$0xff] %vm129, %v128
    %v132 = vld [vmem:[#allocation2] sm:$0xff]
    %v133 = vld [vmem:[#allocation2 + $0x8] sm:$0xff]
    %v134 = vld [vmem:[#allocation2 + $0x10] sm:$0x3]
    %v135 = vld [vmem:[%s7] sm:$0xff]
    %v136 = vld [vmem:[%s7 + $0x8] sm:$0xff]
    %v137 = vld [vmem:[%s7 + $0x10] sm:$0x3]
    %v138 = vld [vmem:[%s9] sm:$0xff]
    %v139 = vld [vmem:[%s9 + $0x8] sm:$0xff]
    %v140 = vld [vmem:[%s11] sm:$0x1]
    %v142 = vperm.slane %v140, 0
    %v145 = vsel %vm129, %v132, 0
    %v148 = vsel %vm129, %v133, 0
    %v151 = vsel %vm129, %v134, 0
    %153 = vmatpush.msra.mxu0 0.0
    %154 = vmatpush.msra.mxu0 0.0
    %155 = vmatpush.msra.mxu0 0.0
    %156 = vmatpush.msra.mxu0 0.0
    %157 = vmatpush.msra.mxu0 0.0
    %158 = vmatpush.msra.mxu0 0.0
    %159 = vmatpush.msra.mxu0 0.0
    %160 = vmatpush.msra.mxu0 0.0
    %161 = vmatpush.msra.mxu0 0.0
    %162 = vmatpush.msra.mxu0 0.0
    %163 = vmatpush.msra.mxu0 0.0
    %164 = vmatpush.msra.mxu0 0.0
    %165 = vmatpush.msra.mxu0 0.0
    %166 = vmatpush.msra.mxu0 0.0
    %167 = vmatpush.msra.mxu0 %v139
    %168 = vmatpush.msra.mxu0 %v138
    %169 = vmatmul.f32.gmra.mxu0 %v145
    %v170 = vpop.f32.mrf.mxu0
    %v171 = vadd.f32 %v142, %v170
    %172 = vmatmul.f32.gmra.mxu0 %v148
    %v173 = vpop.f32.mrf.mxu0
    %v174 = vadd.f32 %v142, %v173
    %175 = vmatmul.f32.gmra.mxu0 %v151
    %v176 = vpop.f32.mrf.mxu0
    %v177 = vadd.f32 %v142, %v176
    %178 = vdwg.mxu0
    %v179 = vld [vmem:[%s13] sm:$0xff]
    %v180 = vld [vmem:[%s13 + $0x8] sm:$0xff]
    %v181 = vld [vmem:[%s15] sm:$0x1]
    %v183 = vperm.slane %v181, 0
    %185 = vmatpush.msra.mxu0 0.0
    %186 = vmatpush.msra.mxu0 0.0
    %187 = vmatpush.msra.mxu0 0.0
    %188 = vmatpush.msra.mxu0 0.0
    %189 = vmatpush.msra.mxu0 0.0
    %190 = vmatpush.msra.mxu0 0.0
    %191 = vmatpush.msra.mxu0 0.0
    %192 = vmatpush.msra.mxu0 0.0
    %193 = vmatpush.msra.mxu0 0.0
    %194 = vmatpush.msra.mxu0 0.0
    %195 = vmatpush.msra.mxu0 0.0
    %196 = vmatpush.msra.mxu0 0.0
    %197 = vmatpush.msra.mxu0 0.0
    %198 = vmatpush.msra.mxu0 0.0
    %199 = vmatpush.msra.mxu0 %v180
    %200 = vmatpush.msra.mxu0 %v179
    %201 = vmatmul.f32.gmra.mxu0 %v145
    %v202 = vpop.f32.mrf.mxu0
    %v203 = vadd.f32 %v183, %v202
    %204 = vmatmul.f32.gmra.mxu0 %v148
    %v205 = vpop.f32.mrf.mxu0
    %v206 = vadd.f32 %v183, %v205
    %207 = vmatmul.f32.gmra.mxu0 %v151
    %v208 = vpop.f32.mrf.mxu0
    %v209 = vadd.f32 %v183, %v208
    %210 = vdwg.mxu0
    %v211 = vld [vmem:[%s17] sm:$0xff]
    %v212 = vld [vmem:[%s17 + $0x8] sm:$0xff]
    %v213 = vld [vmem:[%s19] sm:$0x1]
    %v215 = vperm.slane %v213, 0
    %217 = vmatpush.msra.mxu0 0.0
    %218 = vmatpush.msra.mxu0 0.0
    %219 = vmatpush.msra.mxu0 0.0
    %220 = vmatpush.msra.mxu0 0.0
    %221 = vmatpush.msra.mxu0 0.0
    %222 = vmatpush.msra.mxu0 0.0
    %223 = vmatpush.msra.mxu0 0.0
    %224 = vmatpush.msra.mxu0 0.0
    %225 = vmatpush.msra.mxu0 0.0
    %226 = vmatpush.msra.mxu0 0.0
    %227 = vmatpush.msra.mxu0 0.0
    %228 = vmatpush.msra.mxu0 0.0
    %229 = vmatpush.msra.mxu0 0.0
    %230 = vmatpush.msra.mxu0 0.0
    %231 = vmatpush.msra.mxu0 %v212
    %232 = vmatpush.msra.mxu0 %v211
    %233 = vmatmul.f32.gmra.mxu0 %v145
    %v234 = vpop.f32.mrf.mxu0
    %v235 = vadd.f32 %v215, %v234
    %236 = vmatmul.f32.gmra.mxu0 %v148
    %v237 = vpop.f32.mrf.mxu0
    %v238 = vadd.f32 %v215, %v237
    %239 = vmatmul.f32.gmra.mxu0 %v151
    %v240 = vpop.f32.mrf.mxu0
    %v241 = vadd.f32 %v215, %v240
    %242 = vdwg.mxu0
    %vm243 = vcmask 31744
    %v245 = vsel %vm243, %v171, 0
    %v248 = vsel %vm243, %v174, 0
    %v251 = vsel %vm243, %v177, 0
    %v254 = vsel %vm243, %v203, 0
    %v257 = vsel %vm243, %v206, 0
    %v260 = vsel %vm243, %v209, 0
    %262 = vmatpush.xpose.msra.mxu0 0.0
    %263 = vmatpush.xpose.msra.mxu0 0.0
    %264 = vmatpush.xpose.msra.mxu0 0.0
    %265 = vmatpush.xpose.msra.mxu0 0.0
    %266 = vmatpush.xpose.msra.mxu0 0.0
    %267 = vmatpush.xpose.msra.mxu0 0.0
    %268 = vmatpush.xpose.msra.mxu0 0.0
    %269 = vmatpush.xpose.msra.mxu0 0.0
    %270 = vmatpush.xpose.msra.mxu0 0.0
    %271 = vmatpush.xpose.msra.mxu0 0.0
    %272 = vmatpush.xpose.msra.mxu0 0.0
    %273 = vmatpush.xpose.msra.mxu0 0.0
    %274 = vmatpush.xpose.msra.mxu0 0.0
    %275 = vmatpush.xpose.msra.mxu0 %v260
    %276 = vmatpush.xpose.msra.mxu0 %v257
    %277 = vmatpush.xpose.msra.mxu0 %v254
    %278 = vmatmul.f32.gmra.mxu0 %v245
    %v279 = vpop.f32.mrf.mxu0
    %v280 = vadd.f32 %v135, %v279
    %281 = vmatmul.f32.gmra.mxu0 %v248
    %v282 = vpop.f32.mrf.mxu0
    %v283 = vadd.f32 %v136, %v282
    %284 = vmatmul.f32.gmra.mxu0 %v251
    %v285 = vpop.f32.mrf.mxu0
    %v286 = vadd.f32 %v137, %v285
    %287 = vdwg.mxu0
    %vm288 = vcmask 146432
    %v289 = vsel %vm288, %v280, -inf
    %290 = vmax.xlane.f32.xlu0 %v289
    %v291 = vpop.xlane.xlu0 %290
    %v292 = vsel %vm288, %v283, -inf
    %293 = vmax.xlane.f32.xlu0 %v292
    %v294 = vpop.xlane.xlu0 %293
    %vm295 = vcmask 140288
    %v296 = vsel %vm295, %v286, -inf
    %297 = vmax.xlane.f32.xlu0 %v296
    %v298 = vpop.xlane.xlu0 %297
    %v299 = vsub.f32 %v280, %v291
    %v300 = vsub.f32 %v283, %v294
    %v301 = vsub.f32 %v286, %v298
    %v302 = vmul.f32 %v299, 1.442695
    %v303 = vpow.pop %v302
    %v304 = vmul.f32 %v300, 1.442695
    %v305 = vpow.pop %v304
    %v306 = vmul.f32 %v301, 1.442695
    %v307 = vpow.pop %v306
    %v308 = vsel %vm288, %v303, 0.0
    %309 = vadd.xlane.f32.xlu0 %v308
    %v310 = vpop.xlane.xlu0 %309
    %v311 = vsel %vm288, %v305, 0.0
    %312 = vadd.xlane.f32.xlu0 %v311
    %v313 = vpop.xlane.xlu0 %312
    %v314 = vsel %vm295, %v307, 0.0
    %315 = vadd.xlane.f32.xlu0 %v314
    %v316 = vpop.xlane.xlu0 %315
    %v317 = vrcp.pop %v310
    %v318 = vrcp.pop %v313
    %v319 = vrcp.pop %v316
    %v320 = vmul.f32 %v310, %v317
    %v321 = vmul.f32 %v313, %v318
    %v322 = vmul.f32 %v316, %v319
    %v323 = vsub.f32 2.0, %v320
    %v324 = vsub.f32 2.0, %v321
    %v325 = vsub.f32 2.0, %v322
    %v326 = vmul.f32 %v317, %v323
    %v327 = vmul.f32 %v318, %v324
    %v328 = vmul.f32 %v319, %v325
    %v329 = vmul.f32 %v303, %v326
    %v330 = vmul.f32 %v305, %v327
    %v331 = vmul.f32 %v307, %v328
    %v333 = vsel %vm288, %v329, 0
    %v336 = vsel %vm288, %v330, 0
    %v339 = vsel %vm288, %v331, 0
    %vm341 = vcmask 1041408
    %v343 = vsel %vm341, %v241, 0
    %345 = vmatpush.msra.mxu0 0.0
    %346 = vmatpush.msra.mxu0 0.0
    %347 = vmatpush.msra.mxu0 0.0
    %348 = vmatpush.msra.mxu0 0.0
    %349 = vmatpush.msra.mxu0 0.0
    %350 = vmatpush.msra.mxu0 0.0
    %351 = vmatpush.msra.mxu0 0.0
    %352 = vmatpush.msra.mxu0 0.0
    %353 = vmatpush.msra.mxu0 0.0
    %354 = vmatpush.msra.mxu0 0.0
    %355 = vmatpush.msra.mxu0 0.0
    %356 = vmatpush.msra.mxu0 0.0
    %357 = vmatpush.msra.mxu0 0.0
    %358 = vmatpush.msra.mxu0 %v343
    %359 = vmatpush.msra.mxu0 %v238
    %360 = vmatpush.msra.mxu0 %v235
    %361 = vmatmul.f32.gmra.mxu0 %v333
    %v362 = vpop.f32.mrf.mxu0
    %v363 = vadd.f32 0.0, %v362
    %364 = vmatmul.f32.gmra.mxu0 %v336
    %v365 = vpop.f32.mrf.mxu0
    %v366 = vadd.f32 0.0, %v365
    %367 = vmatmul.f32.gmra.mxu0 %v339
    %v368 = vpop.f32.mrf.mxu0
    %v369 = vadd.f32 0.0, %v368
    %370 = vdwg.mxu0
    %v371 = vld [vmem:[%s21] sm:$0xf]
    %s372 = scalar_lea.vmem %s9, 16
    %v373 = vld [vmem:[%s372] sm:$0xff]
    %v374 = vld [vmem:[%s372 + $0x8] sm:$0xff]
    %s375 = scalar_lea.vmem %s11, 1
    %v376 = vld [vmem:[%s375] sm:$0x1]
    %v378 = vperm.slane %v376, 0
    %380 = vmatpush.msra.mxu0 0.0
    %381 = vmatpush.msra.mxu0 0.0
    %382 = vmatpush.msra.mxu0 0.0
    %383 = vmatpush.msra.mxu0 0.0
    %384 = vmatpush.msra.mxu0 0.0
    %385 = vmatpush.msra.mxu0 0.0
    %386 = vmatpush.msra.mxu0 0.0
    %387 = vmatpush.msra.mxu0 0.0
    %388 = vmatpush.msra.mxu0 0.0
    %389 = vmatpush.msra.mxu0 0.0
    %390 = vmatpush.msra.mxu0 0.0
    %391 = vmatpush.msra.mxu0 0.0
    %392 = vmatpush.msra.mxu0 0.0
    %393 = vmatpush.msra.mxu0 0.0
    %394 = vmatpush.msra.mxu0 %v374
    %395 = vmatpush.msra.mxu0 %v373
    %396 = vmatmul.f32.gmra.mxu0 %v145
    %v397 = vpop.f32.mrf.mxu0
    %v398 = vadd.f32 %v378, %v397
    %399 = vmatmul.f32.gmra.mxu0 %v148
    %v400 = vpop.f32.mrf.mxu0
    %v401 = vadd.f32 %v378, %v400
    %402 = vmatmul.f32.gmra.mxu0 %v151
    %v403 = vpop.f32.mrf.mxu0
    %v404 = vadd.f32 %v378, %v403
    %405 = vdwg.mxu0
    %s406 = scalar_lea.vmem %s13, 16
    %v407 = vld [vmem:[%s406] sm:$0xff]
    %v408 = vld [vmem:[%s406 + $0x8] sm:$0xff]
    %s409 = scalar_lea.vmem %s15, 1
    %v410 = vld [vmem:[%s409] sm:$0x1]
    %v412 = vperm.slane %v410, 0
    %414 = vmatpush.msra.mxu0 0.0
    %415 = vmatpush.msra.mxu0 0.0
    %416 = vmatpush.msra.mxu0 0.0
    %417 = vmatpush.msra.mxu0 0.0
    %418 = vmatpush.msra.mxu0 0.0
    %419 = vmatpush.msra.mxu0 0.0
    %420 = vmatpush.msra.mxu0 0.0
    %421 = vmatpush.msra.mxu0 0.0
    %422 = vmatpush.msra.mxu0 0.0
    %423 = vmatpush.msra.mxu0 0.0
    %424 = vmatpush.msra.mxu0 0.0
    %425 = vmatpush.msra.mxu0 0.0
    %426 = vmatpush.msra.mxu0 0.0
    %427 = vmatpush.msra.mxu0 0.0
    %428 = vmatpush.msra.mxu0 %v408
    %429 = vmatpush.msra.mxu0 %v407
    %430 = vmatmul.f32.gmra.mxu0 %v145
    %v431 = vpop.f32.mrf.mxu0
    %v432 = vadd.f32 %v412, %v431
    %433 = vmatmul.f32.gmra.mxu0 %v148
    %v434 = vpop.f32.mrf.mxu0
    %v435 = vadd.f32 %v412, %v434
    %436 = vmatmul.f32.gmra.mxu0 %v151
    %v437 = vpop.f32.mrf.mxu0
    %v438 = vadd.f32 %v412, %v437
    %439 = vdwg.mxu0
    %s440 = scalar_lea.vmem %s17, 16
    %v441 = vld [vmem:[%s440] sm:$0xff]
    %v442 = vld [vmem:[%s440 + $0x8] sm:$0xff]
    %s443 = scalar_lea.vmem %s19, 1
    %v444 = vld [vmem:[%s443] sm:$0x1]
    %v446 = vperm.slane %v444, 0
    %448 = vmatpush.msra.mxu0 0.0
    %449 = vmatpush.msra.mxu0 0.0
    %450 = vmatpush.msra.mxu0 0.0
    %451 = vmatpush.msra.mxu0 0.0
    %452 = vmatpush.msra.mxu0 0.0
    %453 = vmatpush.msra.mxu0 0.0
    %454 = vmatpush.msra.mxu0 0.0
    %455 = vmatpush.msra.mxu0 0.0
    %456 = vmatpush.msra.mxu0 0.0
    %457 = vmatpush.msra.mxu0 0.0
    %458 = vmatpush.msra.mxu0 0.0
    %459 = vmatpush.msra.mxu0 0.0
    %460 = vmatpush.msra.mxu0 0.0
    %461 = vmatpush.msra.mxu0 0.0
    %462 = vmatpush.msra.mxu0 %v442
    %463 = vmatpush.msra.mxu0 %v441
    %464 = vmatmul.f32.gmra.mxu0 %v145
    %v465 = vpop.f32.mrf.mxu0
    %v466 = vadd.f32 %v446, %v465
    %467 = vmatmul.f32.gmra.mxu0 %v148
    %v468 = vpop.f32.mrf.mxu0
    %v469 = vadd.f32 %v446, %v468
    %470 = vmatmul.f32.gmra.mxu0 %v151
    %v471 = vpop.f32.mrf.mxu0
    %v472 = vadd.f32 %v446, %v471
    %473 = vdwg.mxu0
    %v475 = vsel %vm243, %v398, 0
    %v478 = vsel %vm243, %v401, 0
    %v481 = vsel %vm243, %v404, 0
    %v484 = vsel %vm243, %v432, 0
    %v487 = vsel %vm243, %v435, 0
    %v490 = vsel %vm243, %v438, 0
    %492 = vmatpush.xpose.msra.mxu0 0.0
    %493 = vmatpush.xpose.msra.mxu0 0.0
    %494 = vmatpush.xpose.msra.mxu0 0.0
    %495 = vmatpush.xpose.msra.mxu0 0.0
    %496 = vmatpush.xpose.msra.mxu0 0.0
    %497 = vmatpush.xpose.msra.mxu0 0.0
    %498 = vmatpush.xpose.msra.mxu0 0.0
    %499 = vmatpush.xpose.msra.mxu0 0.0
    %500 = vmatpush.xpose.msra.mxu0 0.0
    %501 = vmatpush.xpose.msra.mxu0 0.0
    %502 = vmatpush.xpose.msra.mxu0 0.0
    %503 = vmatpush.xpose.msra.mxu0 0.0
    %504 = vmatpush.xpose.msra.mxu0 0.0
    %505 = vmatpush.xpose.msra.mxu0 %v490
    %506 = vmatpush.xpose.msra.mxu0 %v487
    %507 = vmatpush.xpose.msra.mxu0 %v484
    %508 = vmatmul.f32.gmra.mxu0 %v475
    %v509 = vpop.f32.mrf.mxu0
    %v510 = vadd.f32 %v135, %v509
    %511 = vmatmul.f32.gmra.mxu0 %v478
    %v512 = vpop.f32.mrf.mxu0
    %v513 = vadd.f32 %v136, %v512
    %514 = vmatmul.f32.gmra.mxu0 %v481
    %v515 = vpop.f32.mrf.mxu0
    %v516 = vadd.f32 %v137, %v515
    %517 = vdwg.mxu0
    %v518 = vsel %vm288, %v510, -inf
    %519 = vmax.xlane.f32.xlu0 %v518
    %v520 = vpop.xlane.xlu0 %519
    %v521 = vsel %vm288, %v513, -inf
    %522 = vmax.xlane.f32.xlu0 %v521
    %v523 = vpop.xlane.xlu0 %522
    %v524 = vsel %vm295, %v516, -inf
    %525 = vmax.xlane.f32.xlu0 %v524
    %v526 = vpop.xlane.xlu0 %525
    %v527 = vsub.f32 %v510, %v520
    %v528 = vsub.f32 %v513, %v523
    %v529 = vsub.f32 %v516, %v526
    %v530 = vmul.f32 %v527, 1.442695
    %v531 = vpow.pop %v530
    %v532 = vmul.f32 %v528, 1.442695
    %v533 = vpow.pop %v532
    %v534 = vmul.f32 %v529, 1.442695
    %v535 = vpow.pop %v534
    %v536 = vsel %vm288, %v531, 0.0
    %537 = vadd.xlane.f32.xlu0 %v536
    %v538 = vpop.xlane.xlu0 %537
    %v539 = vsel %vm288, %v533, 0.0
    %540 = vadd.xlane.f32.xlu0 %v539
    %v541 = vpop.xlane.xlu0 %540
    %v542 = vsel %vm295, %v535, 0.0
    %543 = vadd.xlane.f32.xlu0 %v542
    %v544 = vpop.xlane.xlu0 %543
    %v545 = vrcp.pop %v538
    %v546 = vrcp.pop %v541
    %v547 = vrcp.pop %v544
    %v548 = vmul.f32 %v538, %v545
    %v549 = vmul.f32 %v541, %v546
    %v550 = vmul.f32 %v544, %v547
    %v551 = vsub.f32 2.0, %v548
    %v552 = vsub.f32 2.0, %v549
    %v553 = vsub.f32 2.0, %v550
    %v554 = vmul.f32 %v545, %v551
    %v555 = vmul.f32 %v546, %v552
    %v556 = vmul.f32 %v547, %v553
    %v557 = vmul.f32 %v531, %v554
    %v558 = vmul.f32 %v533, %v555
    %v559 = vmul.f32 %v535, %v556
    %v561 = vsel %vm288, %v557, 0
    %v564 = vsel %vm288, %v558, 0
    %v567 = vsel %vm288, %v559, 0
    %v570 = vsel %vm341, %v472, 0
    %572 = vmatpush.msra.mxu0 0.0
    %573 = vmatpush.msra.mxu0 0.0
    %574 = vmatpush.msra.mxu0 0.0
    %575 = vmatpush.msra.mxu0 0.0
    %576 = vmatpush.msra.mxu0 0.0
    %577 = vmatpush.msra.mxu0 0.0
    %578 = vmatpush.msra.mxu0 0.0
    %579 = vmatpush.msra.mxu0 0.0
    %580 = vmatpush.msra.mxu0 0.0
    %581 = vmatpush.msra.mxu0 0.0
    %582 = vmatpush.msra.mxu0 0.0
    %583 = vmatpush.msra.mxu0 0.0
    %584 = vmatpush.msra.mxu0 0.0
    %585 = vmatpush.msra.mxu0 %v570
    %586 = vmatpush.msra.mxu0 %v469
    %587 = vmatpush.msra.mxu0 %v466
    %588 = vmatmul.f32.gmra.mxu0 %v561
    %v589 = vpop.f32.mrf.mxu0
    %v590 = vadd.f32 0.0, %v589
    %591 = vmatmul.f32.gmra.mxu0 %v564
    %v592 = vpop.f32.mrf.mxu0
    %v593 = vadd.f32 0.0, %v592
    %594 = vmatmul.f32.gmra.mxu0 %v567
    %v595 = vpop.f32.mrf.mxu0
    %v596 = vadd.f32 0.0, %v595
    %597 = vdwg.mxu0
    %s598 = scalar_lea.vmem %s21, 4
    %v599 = vld [vmem:[%s598] sm:$0xf]
    %v601 = vsel %vm243, %v590, 0
    %v604 = vsel %vm243, %v593, 0
    %v607 = vsel %vm243, %v596, 0
    %vm609 = vcmask 1043456
    %v611 = vsel %vm609, %v599, 0
    %613 = vmatpush.msra.mxu0 0.0
    %614 = vmatpush.msra.mxu0 0.0
    %615 = vmatpush.msra.mxu0 0.0
    %616 = vmatpush.msra.mxu0 0.0
    %617 = vmatpush.msra.mxu0 0.0
    %618 = vmatpush.msra.mxu0 0.0
    %619 = vmatpush.msra.mxu0 0.0
    %620 = vmatpush.msra.mxu0 0.0
    %621 = vmatpush.msra.mxu0 0.0
    %622 = vmatpush.msra.mxu0 0.0
    %623 = vmatpush.msra.mxu0 0.0
    %624 = vmatpush.msra.mxu0 0.0
    %625 = vmatpush.msra.mxu0 0.0
    %626 = vmatpush.msra.mxu0 0.0
    %627 = vmatpush.msra.mxu0 0.0
    %628 = vmatpush.msra.mxu0 %v611
    %629 = vmatmul.f32.gmra.mxu0 %v601
    %v630 = vpop.f32.mrf.mxu0
    %v631 = vadd.f32 0.0, %v630
    %632 = vmatmul.f32.gmra.mxu0 %v604
    %v633 = vpop.f32.mrf.mxu0
    %v634 = vadd.f32 0.0, %v633
    %635 = vmatmul.f32.gmra.mxu0 %v607
    %v636 = vpop.f32.mrf.mxu0
    %v637 = vadd.f32 0.0, %v636
    %638 = vdwg.mxu0
    %v640 = vsel %vm243, %v363, 0
    %v643 = vsel %vm243, %v366, 0
    %v646 = vsel %vm243, %v369, 0
    %v649 = vsel %vm609, %v371, 0
    %651 = vmatpush.msra.mxu0 0.0
    %652 = vmatpush.msra.mxu0 0.0
    %653 = vmatpush.msra.mxu0 0.0
    %654 = vmatpush.msra.mxu0 0.0
    %655 = vmatpush.msra.mxu0 0.0
    %656 = vmatpush.msra.mxu0 0.0
    %657 = vmatpush.msra.mxu0 0.0
    %658 = vmatpush.msra.mxu0 0.0
    %659 = vmatpush.msra.mxu0 0.0
    %660 = vmatpush.msra.mxu0 0.0
    %661 = vmatpush.msra.mxu0 0.0
    %662 = vmatpush.msra.mxu0 0.0
    %663 = vmatpush.msra.mxu0 0.0
    %664 = vmatpush.msra.mxu0 0.0
    %665 = vmatpush.msra.mxu0 0.0
    %666 = vmatpush.msra.mxu0 %v649
    %667 = vmatmul.f32.gmra.mxu0 %v640
    %v668 = vpop.f32.mrf.mxu0
    %v669 = vadd.f32 %v631, %v668
    %670 = vmatmul.f32.gmra.mxu0 %v643
    %v671 = vpop.f32.mrf.mxu0
    %v672 = vadd.f32 %v634, %v671
    %673 = vmatmul.f32.gmra.mxu0 %v646
    %v674 = vpop.f32.mrf.mxu0
    %v675 = vadd.f32 %v637, %v674
    %676 = vdwg.mxu0
    %s677 = scalar_lea.vmem %s9, 32
    %v678 = vld [vmem:[%s677] sm:$0xff]
    %v679 = vld [vmem:[%s677 + $0x8] sm:$0xff]
    %s680 = scalar_lea.vmem %s11, 2
    %v681 = vld [vmem:[%s680] sm:$0x1]
    %v683 = vperm.slane %v681, 0
    %685 = vmatpush.msra.mxu0 0.0
    %686 = vmatpush.msra.mxu0 0.0
    %687 = vmatpush.msra.mxu0 0.0
    %688 = vmatpush.msra.mxu0 0.0
    %689 = vmatpush.msra.mxu0 0.0
    %690 = vmatpush.msra.mxu0 0.0
    %691 = vmatpush.msra.mxu0 0.0
    %692 = vmatpush.msra.mxu0 0.0
    %693 = vmatpush.msra.mxu0 0.0
    %694 = vmatpush.msra.mxu0 0.0
    %695 = vmatpush.msra.mxu0 0.0
    %696 = vmatpush.msra.mxu0 0.0
    %697 = vmatpush.msra.mxu0 0.0
    %698 = vmatpush.msra.mxu0 0.0
    %699 = vmatpush.msra.mxu0 %v679
    %700 = vmatpush.msra.mxu0 %v678
    %701 = vmatmul.f32.gmra.mxu0 %v145
    %v702 = vpop.f32.mrf.mxu0
    %v703 = vadd.f32 %v683, %v702
    %704 = vmatmul.f32.gmra.mxu0 %v148
    %v705 = vpop.f32.mrf.mxu0
    %v706 = vadd.f32 %v683, %v705
    %707 = vmatmul.f32.gmra.mxu0 %v151
    %v708 = vpop.f32.mrf.mxu0
    %v709 = vadd.f32 %v683, %v708
    %710 = vdwg.mxu0
    %s711 = scalar_lea.vmem %s13, 32
    %v712 = vld [vmem:[%s711] sm:$0xff]
    %v713 = vld [vmem:[%s711 + $0x8] sm:$0xff]
    %s714 = scalar_lea.vmem %s15, 2
    %v715 = vld [vmem:[%s714] sm:$0x1]
    %v717 = vperm.slane %v715, 0
    %719 = vmatpush.msra.mxu0 0.0
    %720 = vmatpush.msra.mxu0 0.0
    %721 = vmatpush.msra.mxu0 0.0
    %722 = vmatpush.msra.mxu0 0.0
    %723 = vmatpush.msra.mxu0 0.0
    %724 = vmatpush.msra.mxu0 0.0
    %725 = vmatpush.msra.mxu0 0.0
    %726 = vmatpush.msra.mxu0 0.0
    %727 = vmatpush.msra.mxu0 0.0
    %728 = vmatpush.msra.mxu0 0.0
    %729 = vmatpush.msra.mxu0 0.0
    %730 = vmatpush.msra.mxu0 0.0
    %731 = vmatpush.msra.mxu0 0.0
    %732 = vmatpush.msra.mxu0 0.0
    %733 = vmatpush.msra.mxu0 %v713
    %734 = vmatpush.msra.mxu0 %v712
    %735 = vmatmul.f32.gmra.mxu0 %v145
    %v736 = vpop.f32.mrf.mxu0
    %v737 = vadd.f32 %v717, %v736
    %738 = vmatmul.f32.gmra.mxu0 %v148
    %v739 = vpop.f32.mrf.mxu0
    %v740 = vadd.f32 %v717, %v739
    %741 = vmatmul.f32.gmra.mxu0 %v151
    %v742 = vpop.f32.mrf.mxu0
    %v743 = vadd.f32 %v717, %v742
    %744 = vdwg.mxu0
    %s745 = scalar_lea.vmem %s17, 32
    %v746 = vld [vmem:[%s745] sm:$0xff]
    %v747 = vld [vmem:[%s745 + $0x8] sm:$0xff]
    %s748 = scalar_lea.vmem %s19, 2
    %v749 = vld [vmem:[%s748] sm:$0x1]
    %v751 = vperm.slane %v749, 0
    %753 = vmatpush.msra.mxu0 0.0
    %754 = vmatpush.msra.mxu0 0.0
    %755 = vmatpush.msra.mxu0 0.0
    %756 = vmatpush.msra.mxu0 0.0
    %757 = vmatpush.msra.mxu0 0.0
    %758 = vmatpush.msra.mxu0 0.0
    %759 = vmatpush.msra.mxu0 0.0
    %760 = vmatpush.msra.mxu0 0.0
    %761 = vmatpush.msra.mxu0 0.0
    %762 = vmatpush.msra.mxu0 0.0
    %763 = vmatpush.msra.mxu0 0.0
    %764 = vmatpush.msra.mxu0 0.0
    %765 = vmatpush.msra.mxu0 0.0
    %766 = vmatpush.msra.mxu0 0.0
    %767 = vmatpush.msra.mxu0 %v747
    %768 = vmatpush.msra.mxu0 %v746
    %769 = vmatmul.f32.gmra.mxu0 %v145
    %v770 = vpop.f32.mrf.mxu0
    %v771 = vadd.f32 %v751, %v770
    %772 = vmatmul.f32.gmra.mxu0 %v148
    %v773 = vpop.f32.mrf.mxu0
    %v774 = vadd.f32 %v751, %v773
    %775 = vmatmul.f32.gmra.mxu0 %v151
    %v776 = vpop.f32.mrf.mxu0
    %v777 = vadd.f32 %v751, %v776
    %778 = vdwg.mxu0
    %v780 = vsel %vm243, %v703, 0
    %v783 = vsel %vm243, %v706, 0
    %v786 = vsel %vm243, %v709, 0
    %v789 = vsel %vm243, %v737, 0
    %v792 = vsel %vm243, %v740, 0
    %v795 = vsel %vm243, %v743, 0
    %797 = vmatpush.xpose.msra.mxu0 0.0
    %798 = vmatpush.xpose.msra.mxu0 0.0
    %799 = vmatpush.xpose.msra.mxu0 0.0
    %800 = vmatpush.xpose.msra.mxu0 0.0
    %801 = vmatpush.xpose.msra.mxu0 0.0
    %802 = vmatpush.xpose.msra.mxu0 0.0
    %803 = vmatpush.xpose.msra.mxu0 0.0
    %804 = vmatpush.xpose.msra.mxu0 0.0
    %805 = vmatpush.xpose.msra.mxu0 0.0
    %806 = vmatpush.xpose.msra.mxu0 0.0
    %807 = vmatpush.xpose.msra.mxu0 0.0
    %808 = vmatpush.xpose.msra.mxu0 0.0
    %809 = vmatpush.xpose.msra.mxu0 0.0
    %810 = vmatpush.xpose.msra.mxu0 %v795
    %811 = vmatpush.xpose.msra.mxu0 %v792
    %812 = vmatpush.xpose.msra.mxu0 %v789
    %813 = vmatmul.f32.gmra.mxu0 %v780
    %v814 = vpop.f32.mrf.mxu0
    %v815 = vadd.f32 %v135, %v814
    %816 = vmatmul.f32.gmra.mxu0 %v783
    %v817 = vpop.f32.mrf.mxu0
    %v818 = vadd.f32 %v136, %v817
    %819 = vmatmul.f32.gmra.mxu0 %v786
    %v820 = vpop.f32.mrf.mxu0
    %v821 = vadd.f32 %v137, %v820
    %822 = vdwg.mxu0
    %v823 = vsel %vm288, %v815, -inf
    %824 = vmax.xlane.f32.xlu0 %v823
    %v825 = vpop.xlane.xlu0 %824
    %v826 = vsel %vm288, %v818, -inf
    %827 = vmax.xlane.f32.xlu0 %v826
    %v828 = vpop.xlane.xlu0 %827
    %v829 = vsel %vm295, %v821, -inf
    %830 = vmax.xlane.f32.xlu0 %v829
    %v831 = vpop.xlane.xlu0 %830
    %v832 = vsub.f32 %v815, %v825
    %v833 = vsub.f32 %v818, %v828
    %v834 = vsub.f32 %v821, %v831
    %v835 = vmul.f32 %v832, 1.442695
    %v836 = vpow.pop %v835
    %v837 = vmul.f32 %v833, 1.442695
    %v838 = vpow.pop %v837
    %v839 = vmul.f32 %v834, 1.442695
    %v840 = vpow.pop %v839
    %v841 = vsel %vm288, %v836, 0.0
    %842 = vadd.xlane.f32.xlu0 %v841
    %v843 = vpop.xlane.xlu0 %842
    %v844 = vsel %vm288, %v838, 0.0
    %845 = vadd.xlane.f32.xlu0 %v844
    %v846 = vpop.xlane.xlu0 %845
    %v847 = vsel %vm295, %v840, 0.0
    %848 = vadd.xlane.f32.xlu0 %v847
    %v849 = vpop.xlane.xlu0 %848
    %v850 = vrcp.pop %v843
    %v851 = vrcp.pop %v846
    %v852 = vrcp.pop %v849
    %v853 = vmul.f32 %v843, %v850
    %v854 = vmul.f32 %v846, %v851
    %v855 = vmul.f32 %v849, %v852
    %v856 = vsub.f32 2.0, %v853
    %v857 = vsub.f32 2.0, %v854
    %v858 = vsub.f32 2.0, %v855
    %v859 = vmul.f32 %v850, %v856
    %v860 = vmul.f32 %v851, %v857
    %v861 = vmul.f32 %v852, %v858
    %v862 = vmul.f32 %v836, %v859
    %v863 = vmul.f32 %v838, %v860
    %v864 = vmul.f32 %v840, %v861
    %v866 = vsel %vm288, %v862, 0
    %v869 = vsel %vm288, %v863, 0
    %v872 = vsel %vm288, %v864, 0
    %v875 = vsel %vm341, %v777, 0
    %877 = vmatpush.msra.mxu0 0.0
    %878 = vmatpush.msra.mxu0 0.0
    %879 = vmatpush.msra.mxu0 0.0
    %880 = vmatpush.msra.mxu0 0.0
    %881 = vmatpush.msra.mxu0 0.0
    %882 = vmatpush.msra.mxu0 0.0
    %883 = vmatpush.msra.mxu0 0.0
    %884 = vmatpush.msra.mxu0 0.0
    %885 = vmatpush.msra.mxu0 0.0
    %886 = vmatpush.msra.mxu0 0.0
    %887 = vmatpush.msra.mxu0 0.0
    %888 = vmatpush.msra.mxu0 0.0
    %889 = vmatpush.msra.mxu0 0.0
    %890 = vmatpush.msra.mxu0 %v875
    %891 = vmatpush.msra.mxu0 %v774
    %892 = vmatpush.msra.mxu0 %v771
    %893 = vmatmul.f32.gmra.mxu0 %v866
    %v894 = vpop.f32.mrf.mxu0
    %v895 = vadd.f32 0.0, %v894
    %896 = vmatmul.f32.gmra.mxu0 %v869
    %v897 = vpop.f32.mrf.mxu0
    %v898 = vadd.f32 0.0, %v897
    %899 = vmatmul.f32.gmra.mxu0 %v872
    %v900 = vpop.f32.mrf.mxu0
    %v901 = vadd.f32 0.0, %v900
    %902 = vdwg.mxu0
    %s903 = scalar_lea.vmem %s21, 8
    %v904 = vld [vmem:[%s903] sm:$0xf]
    %v906 = vsel %vm243, %v895, 0
    %v909 = vsel %vm243, %v898, 0
    %v912 = vsel %vm243, %v901, 0
    %v915 = vsel %vm609, %v904, 0
    %917 = vmatpush.msra.mxu0 0.0
    %918 = vmatpush.msra.mxu0 0.0
    %919 = vmatpush.msra.mxu0 0.0
    %920 = vmatpush.msra.mxu0 0.0
    %921 = vmatpush.msra.mxu0 0.0
    %922 = vmatpush.msra.mxu0 0.0
    %923 = vmatpush.msra.mxu0 0.0
    %924 = vmatpush.msra.mxu0 0.0
    %925 = vmatpush.msra.mxu0 0.0
    %926 = vmatpush.msra.mxu0 0.0
    %927 = vmatpush.msra.mxu0 0.0
    %928 = vmatpush.msra.mxu0 0.0
    %929 = vmatpush.msra.mxu0 0.0
    %930 = vmatpush.msra.mxu0 0.0
    %931 = vmatpush.msra.mxu0 0.0
    %932 = vmatpush.msra.mxu0 %v915
    %933 = vmatmul.f32.gmra.mxu0 %v906
    %v934 = vpop.f32.mrf.mxu0
    %v935 = vadd.f32 0.0, %v934
    %936 = vmatmul.f32.gmra.mxu0 %v909
    %v937 = vpop.f32.mrf.mxu0
    %v938 = vadd.f32 0.0, %v937
    %939 = vmatmul.f32.gmra.mxu0 %v912
    %v940 = vpop.f32.mrf.mxu0
    %v941 = vadd.f32 0.0, %v940
    %942 = vdwg.mxu0
    %v943 = vadd.f32 %v669, %v935
    %v944 = vadd.f32 %v672, %v938
    %v945 = vadd.f32 %v675, %v941
    %s946 = scalar_lea.vmem %s9, 48
    %v947 = vld [vmem:[%s946] sm:$0xff]
    %v948 = vld [vmem:[%s946 + $0x8] sm:$0xff]
    %s949 = scalar_lea.vmem %s11, 3
    %v950 = vld [vmem:[%s949] sm:$0x1]
    %v952 = vperm.slane %v950, 0
    %954 = vmatpush.msra.mxu0 0.0
    %955 = vmatpush.msra.mxu0 0.0
    %956 = vmatpush.msra.mxu0 0.0
    %957 = vmatpush.msra.mxu0 0.0
    %958 = vmatpush.msra.mxu0 0.0
    %959 = vmatpush.msra.mxu0 0.0
    %960 = vmatpush.msra.mxu0 0.0
    %961 = vmatpush.msra.mxu0 0.0
    %962 = vmatpush.msra.mxu0 0.0
    %963 = vmatpush.msra.mxu0 0.0
    %964 = vmatpush.msra.mxu0 0.0
    %965 = vmatpush.msra.mxu0 0.0
    %966 = vmatpush.msra.mxu0 0.0
    %967 = vmatpush.msra.mxu0 0.0
    %968 = vmatpush.msra.mxu0 %v948
    %969 = vmatpush.msra.mxu0 %v947
    %970 = vmatmul.f32.gmra.mxu0 %v145
    %v971 = vpop.f32.mrf.mxu0
    %v972 = vadd.f32 %v952, %v971
    %973 = vmatmul.f32.gmra.mxu0 %v148
    %v974 = vpop.f32.mrf.mxu0
    %v975 = vadd.f32 %v952, %v974
    %976 = vmatmul.f32.gmra.mxu0 %v151
    %v977 = vpop.f32.mrf.mxu0
    %v978 = vadd.f32 %v952, %v977
    %979 = vdwg.mxu0
    %s980 = scalar_lea.vmem %s13, 48
    %v981 = vld [vmem:[%s980] sm:$0xff]
    %v982 = vld [vmem:[%s980 + $0x8] sm:$0xff]
    %s983 = scalar_lea.vmem %s15, 3
    %v984 = vld [vmem:[%s983] sm:$0x1]
    %v986 = vperm.slane %v984, 0
    %988 = vmatpush.msra.mxu0 0.0
    %989 = vmatpush.msra.mxu0 0.0
    %990 = vmatpush.msra.mxu0 0.0
    %991 = vmatpush.msra.mxu0 0.0
    %992 = vmatpush.msra.mxu0 0.0
    %993 = vmatpush.msra.mxu0 0.0
    %994 = vmatpush.msra.mxu0 0.0
    %995 = vmatpush.msra.mxu0 0.0
    %996 = vmatpush.msra.mxu0 0.0
    %997 = vmatpush.msra.mxu0 0.0
    %998 = vmatpush.msra.mxu0 0.0
    %999 = vmatpush.msra.mxu0 0.0
    %1000 = vmatpush.msra.mxu0 0.0
    %1001 = vmatpush.msra.mxu0 0.0
    %1002 = vmatpush.msra.mxu0 %v982
    %1003 = vmatpush.msra.mxu0 %v981
    %1004 = vmatmul.f32.gmra.mxu0 %v145
    %v1005 = vpop.f32.mrf.mxu0
    %v1006 = vadd.f32 %v986, %v1005
    %1007 = vmatmul.f32.gmra.mxu0 %v148
    %v1008 = vpop.f32.mrf.mxu0
    %v1009 = vadd.f32 %v986, %v1008
    %1010 = vmatmul.f32.gmra.mxu0 %v151
    %v1011 = vpop.f32.mrf.mxu0
    %v1012 = vadd.f32 %v986, %v1011
    %1013 = vdwg.mxu0
    %s1014 = scalar_lea.vmem %s17, 48
    %v1015 = vld [vmem:[%s1014] sm:$0xff]
    %v1016 = vld [vmem:[%s1014 + $0x8] sm:$0xff]
    %s1017 = scalar_lea.vmem %s19, 3
    %v1018 = vld [vmem:[%s1017] sm:$0x1]
    %v1020 = vperm.slane %v1018, 0
    %1022 = vmatpush.msra.mxu0 0.0
    %1023 = vmatpush.msra.mxu0 0.0
    %1024 = vmatpush.msra.mxu0 0.0
    %1025 = vmatpush.msra.mxu0 0.0
    %1026 = vmatpush.msra.mxu0 0.0
    %1027 = vmatpush.msra.mxu0 0.0
    %1028 = vmatpush.msra.mxu0 0.0
    %1029 = vmatpush.msra.mxu0 0.0
    %1030 = vmatpush.msra.mxu0 0.0
    %1031 = vmatpush.msra.mxu0 0.0
    %1032 = vmatpush.msra.mxu0 0.0
    %1033 = vmatpush.msra.mxu0 0.0
    %1034 = vmatpush.msra.mxu0 0.0
    %1035 = vmatpush.msra.mxu0 0.0
    %1036 = vmatpush.msra.mxu0 %v1016
    %1037 = vmatpush.msra.mxu0 %v1015
    %1038 = vmatmul.f32.gmra.mxu0 %v145
    %v1039 = vpop.f32.mrf.mxu0
    %v1040 = vadd.f32 %v1020, %v1039
    %1041 = vmatmul.f32.gmra.mxu0 %v148
    %v1042 = vpop.f32.mrf.mxu0
    %v1043 = vadd.f32 %v1020, %v1042
    %1044 = vmatmul.f32.gmra.mxu0 %v151
    %v1045 = vpop.f32.mrf.mxu0
    %v1046 = vadd.f32 %v1020, %v1045
    %1047 = vdwg.mxu0
    %v1049 = vsel %vm243, %v972, 0
    %v1052 = vsel %vm243, %v975, 0
    %v1055 = vsel %vm243, %v978, 0
    %v1058 = vsel %vm243, %v1006, 0
    %v1061 = vsel %vm243, %v1009, 0
    %v1064 = vsel %vm243, %v1012, 0
    %1066 = vmatpush.xpose.msra.mxu0 0.0
    %1067 = vmatpush.xpose.msra.mxu0 0.0
    %1068 = vmatpush.xpose.msra.mxu0 0.0
    %1069 = vmatpush.xpose.msra.mxu0 0.0
    %1070 = vmatpush.xpose.msra.mxu0 0.0
    %1071 = vmatpush.xpose.msra.mxu0 0.0
    %1072 = vmatpush.xpose.msra.mxu0 0.0
    %1073 = vmatpush.xpose.msra.mxu0 0.0
    %1074 = vmatpush.xpose.msra.mxu0 0.0
    %1075 = vmatpush.xpose.msra.mxu0 0.0
    %1076 = vmatpush.xpose.msra.mxu0 0.0
    %1077 = vmatpush.xpose.msra.mxu0 0.0
    %1078 = vmatpush.xpose.msra.mxu0 0.0
    %1079 = vmatpush.xpose.msra.mxu0 %v1064
    %1080 = vmatpush.xpose.msra.mxu0 %v1061
    %1081 = vmatpush.xpose.msra.mxu0 %v1058
    %1082 = vmatmul.f32.gmra.mxu0 %v1049
    %v1083 = vpop.f32.mrf.mxu0
    %v1084 = vadd.f32 %v135, %v1083
    %1085 = vmatmul.f32.gmra.mxu0 %v1052
    %v1086 = vpop.f32.mrf.mxu0
    %v1087 = vadd.f32 %v136, %v1086
    %1088 = vmatmul.f32.gmra.mxu0 %v1055
    %v1089 = vpop.f32.mrf.mxu0
    %v1090 = vadd.f32 %v137, %v1089
    %1091 = vdwg.mxu0
    %v1092 = vsel %vm288, %v1084, -inf
    %1093 = vmax.xlane.f32.xlu0 %v1092
    %v1094 = vpop.xlane.xlu0 %1093
    %v1095 = vsel %vm288, %v1087, -inf
    %1096 = vmax.xlane.f32.xlu0 %v1095
    %v1097 = vpop.xlane.xlu0 %1096
    %v1098 = vsel %vm295, %v1090, -inf
    %1099 = vmax.xlane.f32.xlu0 %v1098
    %v1100 = vpop.xlane.xlu0 %1099
    %v1101 = vsub.f32 %v1084, %v1094
    %v1102 = vsub.f32 %v1087, %v1097
    %v1103 = vsub.f32 %v1090, %v1100
    %v1104 = vmul.f32 %v1101, 1.442695
    %v1105 = vpow.pop %v1104
    %v1106 = vmul.f32 %v1102, 1.442695
    %v1107 = vpow.pop %v1106
    %v1108 = vmul.f32 %v1103, 1.442695
    %v1109 = vpow.pop %v1108
    %v1110 = vsel %vm288, %v1105, 0.0
    %1111 = vadd.xlane.f32.xlu0 %v1110
    %v1112 = vpop.xlane.xlu0 %1111
    %v1113 = vsel %vm288, %v1107, 0.0
    %1114 = vadd.xlane.f32.xlu0 %v1113
    %v1115 = vpop.xlane.xlu0 %1114
    %v1116 = vsel %vm295, %v1109, 0.0
    %1117 = vadd.xlane.f32.xlu0 %v1116
    %v1118 = vpop.xlane.xlu0 %1117
    %v1119 = vrcp.pop %v1112
    %v1120 = vrcp.pop %v1115
    %v1121 = vrcp.pop %v1118
    %v1122 = vmul.f32 %v1112, %v1119
    %v1123 = vmul.f32 %v1115, %v1120
    %v1124 = vmul.f32 %v1118, %v1121
    %v1125 = vsub.f32 2.0, %v1122
    %v1126 = vsub.f32 2.0, %v1123
    %v1127 = vsub.f32 2.0, %v1124
    %v1128 = vmul.f32 %v1119, %v1125
    %v1129 = vmul.f32 %v1120, %v1126
    %v1130 = vmul.f32 %v1121, %v1127
    %v1131 = vmul.f32 %v1105, %v1128
    %v1132 = vmul.f32 %v1107, %v1129
    %v1133 = vmul.f32 %v1109, %v1130
    %v1135 = vsel %vm288, %v1131, 0
    %v1138 = vsel %vm288, %v1132, 0
    %v1141 = vsel %vm288, %v1133, 0
    %v1144 = vsel %vm341, %v1046, 0
    %1146 = vmatpush.msra.mxu0 0.0
    %1147 = vmatpush.msra.mxu0 0.0
    %1148 = vmatpush.msra.mxu0 0.0
    %1149 = vmatpush.msra.mxu0 0.0
    %1150 = vmatpush.msra.mxu0 0.0
    %1151 = vmatpush.msra.mxu0 0.0
    %1152 = vmatpush.msra.mxu0 0.0
    %1153 = vmatpush.msra.mxu0 0.0
    %1154 = vmatpush.msra.mxu0 0.0
    %1155 = vmatpush.msra.mxu0 0.0
    %1156 = vmatpush.msra.mxu0 0.0
    %1157 = vmatpush.msra.mxu0 0.0
    %1158 = vmatpush.msra.mxu0 0.0
    %1159 = vmatpush.msra.mxu0 %v1144
    %1160 = vmatpush.msra.mxu0 %v1043
    %1161 = vmatpush.msra.mxu0 %v1040
    %1162 = vmatmul.f32.gmra.mxu0 %v1135
    %v1163 = vpop.f32.mrf.mxu0
    %v1164 = vadd.f32 0.0, %v1163
    %1165 = vmatmul.f32.gmra.mxu0 %v1138
    %v1166 = vpop.f32.mrf.mxu0
    %v1167 = vadd.f32 0.0, %v1166
    %1168 = vmatmul.f32.gmra.mxu0 %v1141
    %v1169 = vpop.f32.mrf.mxu0
    %v1170 = vadd.f32 0.0, %v1169
    %1171 = vdwg.mxu0
    %s1172 = scalar_lea.vmem %s21, 12
    %v1173 = vld [vmem:[%s1172] sm:$0xf]
    %v1175 = vsel %vm243, %v1164, 0
    %v1178 = vsel %vm243, %v1167, 0
    %v1181 = vsel %vm243, %v1170, 0
    %v1184 = vsel %vm609, %v1173, 0
    %1186 = vmatpush.msra.mxu0 0.0
    %1187 = vmatpush.msra.mxu0 0.0
    %1188 = vmatpush.msra.mxu0 0.0
    %1189 = vmatpush.msra.mxu0 0.0
    %1190 = vmatpush.msra.mxu0 0.0
    %1191 = vmatpush.msra.mxu0 0.0
    %1192 = vmatpush.msra.mxu0 0.0
    %1193 = vmatpush.msra.mxu0 0.0
    %1194 = vmatpush.msra.mxu0 0.0
    %1195 = vmatpush.msra.mxu0 0.0
    %1196 = vmatpush.msra.mxu0 0.0
    %1197 = vmatpush.msra.mxu0 0.0
    %1198 = vmatpush.msra.mxu0 0.0
    %1199 = vmatpush.msra.mxu0 0.0
    %1200 = vmatpush.msra.mxu0 0.0
    %1201 = vmatpush.msra.mxu0 %v1184
    %1202 = vmatmul.f32.gmra.mxu0 %v1175
    %v1203 = vpop.f32.mrf.mxu0
    %v1204 = vadd.f32 0.0, %v1203
    %1205 = vmatmul.f32.gmra.mxu0 %v1178
    %v1206 = vpop.f32.mrf.mxu0
    %v1207 = vadd.f32 0.0, %v1206
    %1208 = vmatmul.f32.gmra.mxu0 %v1181
    %v1209 = vpop.f32.mrf.mxu0
    %v1210 = vadd.f32 0.0, %v1209
    %1211 = vdwg.mxu0
    %v1212 = vadd.f32 %v943, %v1204
    %v1213 = vadd.f32 %v944, %v1207
    %v1214 = vadd.f32 %v945, %v1210
    %v1215 = vld [vmem:[%s23] sm:$0x1]
    %v1217 = vperm.slane %v1215, 0
    %v1219 = vadd.f32 %v1212, %v1217
    %v1220 = vadd.f32 %v1213, %v1217
    %v1221 = vadd.f32 %v1214, %v1217
    %v1222 = vadd.f32 %v132, %v1219
    %v1223 = vadd.f32 %v133, %v1220
    %v1224 = vadd.f32 %v134, %v1221
    %v1225 = vld [vmem:[%s33] sm:$0x1]
    %v1226 = vld [vmem:[%s35] sm:$0x1]
    %v1227 = vsel %vm129, %v1222, 0.0
    %1228 = vadd.xlane.f32.xlu0 %v1227
    %v1229 = vpop.xlane.xlu0 %1228
    %v1230 = vsel %vm129, %v1223, 0.0
    %1231 = vadd.xlane.f32.xlu0 %v1230
    %v1232 = vpop.xlane.xlu0 %1231
    %v1233 = vsel %vm121, %v1224, 0.0
    %1234 = vadd.xlane.f32.xlu0 %v1233
    %v1235 = vpop.xlane.xlu0 %1234
    %v1236 = vrcp.pop 16.0
    %v1237 = vmul.f32 16.0, %v1236
    %v1238 = vsub.f32 1.0, %v1237
    %v1239 = vmul.f32 %v1236, %v1238
    %v1240 = vadd.f32 %v1236, %v1239
    %vm1241 = vweird.f32 %v1236
    %v1242 = vsel %vm1241, %v1236, %v1240
    %v1243 = vmul.f32 %v1229, %v1242
    %v1244 = vmul.f32 %v1232, %v1242
    %v1245 = vmul.f32 %v1235, %v1242
    %v1246 = vsub.f32 %v1222, %v1243
    %v1247 = vsub.f32 %v1223, %v1244
    %v1248 = vsub.f32 %v1224, %v1245
    %v1249 = vmul.f32 %v1246, %v1246
    %v1250 = vmul.f32 %v1247, %v1247
    %v1251 = vmul.f32 %v1248, %v1248
    %v1252 = vsel %vm129, %v1249, 0.0
    %1253 = vadd.xlane.f32.xlu0 %v1252
    %v1254 = vpop.xlane.xlu0 %1253
    %v1255 = vsel %vm129, %v1250, 0.0
    %1256 = vadd.xlane.f32.xlu0 %v1255
    %v1257 = vpop.xlane.xlu0 %1256
    %v1258 = vsel %vm121, %v1251, 0.0
    %1259 = vadd.xlane.f32.xlu0 %v1258
    %v1260 = vpop.xlane.xlu0 %1259
    %v1261 = vmul.f32 %v1254, %v1242
    %v1262 = vmul.f32 %v1257, %v1242
    %v1263 = vmul.f32 %v1260, %v1242
    %v1264 = vadd.f32 %v1261, 1e-05
    %v1265 = vadd.f32 %v1262, 1e-05
    %v1266 = vadd.f32 %v1263, 1e-05
    %v1267 = vrsqrt.pop %v1264
    %v1268 = vmul.f32 %v1267, %v1264
    %v1269 = vmul.f32 %v1268, %v1267
    %v1270 = vmul.f32 0.5, %v1269
    %v1271 = vsub.f32 1.5, %v1270
    %v1272 = vmul.f32 %v1267, %v1271
    %vm1273 = vweird.f32 %v1264
    %vm1274 = vweird.f32 %v1267
    %vm1275 = vmor %vm1273, %vm1274
    %v1276 = vsel %vm1275, %v1267, %v1272
    %v1277 = vrsqrt.pop %v1265
    %v1278 = vmul.f32 %v1277, %v1265
    %v1279 = vmul.f32 %v1278, %v1277
    %v1280 = vmul.f32 0.5, %v1279
    %v1281 = vsub.f32 1.5, %v1280
    %v1282 = vmul.f32 %v1277, %v1281
    %vm1283 = vweird.f32 %v1265
    %vm1284 = vweird.f32 %v1277
    %vm1285 = vmor %vm1283, %vm1284
    %v1286 = vsel %vm1285, %v1277, %v1282
    %v1287 = vrsqrt.pop %v1266
    %v1288 = vmul.f32 %v1287, %v1266
    %v1289 = vmul.f32 %v1288, %v1287
    %v1290 = vmul.f32 0.5, %v1289
    %v1291 = vsub.f32 1.5, %v1290
    %v1292 = vmul.f32 %v1287, %v1291
    %vm1293 = vweird.f32 %v1266
    %vm1294 = vweird.f32 %v1287
    %vm1295 = vmor %vm1293, %vm1294
    %v1296 = vsel %vm1295, %v1287, %v1292
    %v1297 = vmul.f32 %v1246, %v1276
    %v1298 = vmul.f32 %v1247, %v1286
    %v1299 = vmul.f32 %v1248, %v1296
    %v1301 = vperm.slane %v1225, 0
    %v1303 = vmul.f32 %v1297, %v1301
    %v1304 = vmul.f32 %v1298, %v1301
    %v1305 = vmul.f32 %v1299, %v1301
    %v1307 = vperm.slane %v1226, 0
    %v1309 = vadd.f32 %v1303, %v1307
    %v1310 = vadd.f32 %v1304, %v1307
    %v1311 = vadd.f32 %v1305, %v1307
    %v1312 = vld [vmem:[%s25] sm:$0xff]
    %v1313 = vld [vmem:[%s25 + $0x8] sm:$0xff]
    %v1314 = vld [vmem:[%s27] sm:$0x1]
    %v1316 = vperm.slane %v1314, 0
    %v1319 = vsel %vm129, %v1309, 0
    %v1322 = vsel %vm129, %v1310, 0
    %v1325 = vsel %vm129, %v1311, 0
    %1327 = vmatpush.msra.mxu0 0.0
    %1328 = vmatpush.msra.mxu0 0.0
    %1329 = vmatpush.msra.mxu0 0.0
    %1330 = vmatpush.msra.mxu0 0.0
    %1331 = vmatpush.msra.mxu0 0.0
    %1332 = vmatpush.msra.mxu0 0.0
    %1333 = vmatpush.msra.mxu0 0.0
    %1334 = vmatpush.msra.mxu0 0.0
    %1335 = vmatpush.msra.mxu0 0.0
    %1336 = vmatpush.msra.mxu0 0.0
    %1337 = vmatpush.msra.mxu0 0.0
    %1338 = vmatpush.msra.mxu0 0.0
    %1339 = vmatpush.msra.mxu0 0.0
    %1340 = vmatpush.msra.mxu0 0.0
    %1341 = vmatpush.msra.mxu0 %v1313
    %1342 = vmatpush.msra.mxu0 %v1312
    %1343 = vmatmul.f32.gmra.mxu0 %v1319
    %v1344 = vpop.f32.mrf.mxu0
    %v1345 = vadd.f32 %v1316, %v1344
    %1346 = vmatmul.f32.gmra.mxu0 %v1322
    %v1347 = vpop.f32.mrf.mxu0
    %v1348 = vadd.f32 %v1316, %v1347
    %1349 = vmatmul.f32.gmra.mxu0 %v1325
    %v1350 = vpop.f32.mrf.mxu0
    %v1351 = vadd.f32 %v1316, %v1350
    %1352 = vdwg.mxu0
    %v1353 = vmul.f32 %v1345, 0.70710677
    %v1354 = vmul.f32 %v1348, 0.70710677
    %v1355 = vmul.f32 %v1351, 0.70710677
    %v1356 = vand.u32 2147483647, %v1353
    %v1357 = vand.u32 2147483647, %v1354
    %v1358 = vand.u32 2147483647, %v1355
    %v1359 = vmul.f32 %v1356, 0.3275911
    %v1360 = vmul.f32 %v1357, 0.3275911
    %v1361 = vmul.f32 %v1358, 0.3275911
    %v1362 = vadd.f32 %v1359, 1.0
    %v1363 = vadd.f32 %v1360, 1.0
    %v1364 = vadd.f32 %v1361, 1.0
    %v1365 = vrcp.pop %v1362
    %v1366 = vmul.f32 %v1362, %v1365
    %v1367 = vsub.f32 1.0, %v1366
    %v1368 = vmul.f32 %v1365, %v1367
    %v1369 = vadd.f32 %v1365, %v1368
    %vm1370 = vweird.f32 %v1362
    %vm1371 = vweird.f32 %v1365
    %vm1372 = vmor %vm1370, %vm1371
    %v1373 = vsel %vm1372, %v1365, %v1369
    %v1374 = vand.u32 2147483647, %v1362
    %vm1375 = vcmp.eq.f32.partialorder %v1374, 8.507059e+37
    %v1376 = vand.u32 %v1362, 2147483648
    %v1377 = vor.u32 1.1754944e-38, %v1376
    %v1378 = vsel %vm1375, %v1377, %v1373
    %v1379 = vmul.f32 1.0, %v1378
    %v1380 = vrcp.pop %v1363
    %v1381 = vmul.f32 %v1363, %v1380
    %v1382 = vsub.f32 1.0, %v1381
    %v1383 = vmul.f32 %v1380, %v1382
    %v1384 = vadd.f32 %v1380, %v1383
    %vm1385 = vweird.f32 %v1363
    %vm1386 = vweird.f32 %v1380
    %vm1387 = vmor %vm1385, %vm1386
    %v1388 = vsel %vm1387, %v1380, %v1384
    %v1389 = vand.u32 2147483647, %v1363
    %vm1390 = vcmp.eq.f32.partialorder %v1389, 8.507059e+37
    %v1391 = vand.u32 %v1363, 2147483648
    %v1392 = vor.u32 1.1754944e-38, %v1391
    %v1393 = vsel %vm1390, %v1392, %v1388
    %v1394 = vmul.f32 1.0, %v1393
    %v1395 = vrcp.pop %v1364
    %v1396 = vmul.f32 %v1364, %v1395
    %v1397 = vsub.f32 1.0, %v1396
    %v1398 = vmul.f32 %v1395, %v1397
    %v1399 = vadd.f32 %v1395, %v1398
    %vm1400 = vweird.f32 %v1364
    %vm1401 = vweird.f32 %v1395
    %vm1402 = vmor %vm1400, %vm1401
    %v1403 = vsel %vm1402, %v1395, %v1399
    %v1404 = vand.u32 2147483647, %v1364
    %vm1405 = vcmp.eq.f32.partialorder %v1404, 8.507059e+37
    %v1406 = vand.u32 %v1364, 2147483648
    %v1407 = vor.u32 1.1754944e-38, %v1406
    %v1408 = vsel %vm1405, %v1407, %v1403
    %v1409 = vmul.f32 1.0, %v1408
    %v1410 = vmul.f32 %v1379, 1.0614054
    %v1411 = vmul.f32 %v1394, 1.0614054
    %v1412 = vmul.f32 %v1409, 1.0614054
    %v1413 = vadd.f32 %v1410, -1.4531521
    %v1414 = vadd.f32 %v1411, -1.4531521
    %v1415 = vadd.f32 %v1412, -1.4531521
    %v1416 = vmul.f32 %v1379, %v1413
    %v1417 = vmul.f32 %v1394, %v1414
    %v1418 = vmul.f32 %v1409, %v1415
    %v1419 = vadd.f32 %v1416, 1.4214138
    %v1420 = vadd.f32 %v1417, 1.4214138
    %v1421 = vadd.f32 %v1418, 1.4214138
    %v1422 = vmul.f32 %v1379, %v1419
    %v1423 = vmul.f32 %v1394, %v1420
    %v1424 = vmul.f32 %v1409, %v1421
    %v1425 = vadd.f32 %v1422, -0.28449672
    %v1426 = vadd.f32 %v1423, -0.28449672
    %v1427 = vadd.f32 %v1424, -0.28449672
    %v1428 = vmul.f32 %v1379, %v1425
    %v1429 = vmul.f32 %v1394, %v1426
    %v1430 = vmul.f32 %v1409, %v1427
    %v1431 = vadd.f32 %v1428, 0.2548296
    %v1432 = vadd.f32 %v1429, 0.2548296
    %v1433 = vadd.f32 %v1430, 0.2548296
    %v1434 = vmul.f32 %v1379, %v1431
    %v1435 = vmul.f32 %v1394, %v1432
    %v1436 = vmul.f32 %v1409, %v1433
    %v1437 = vsub.f32 0.0, %v1356
    %v1438 = vsub.f32 0.0, %v1357
    %v1439 = vsub.f32 0.0, %v1358
    %v1440 = vmul.f32 %v1437, %v1356
    %v1441 = vmul.f32 %v1438, %v1357
    %v1442 = vmul.f32 %v1439, %v1358
    %v1443 = vmul.f32 %v1440, 1.442695
    %v1444 = vpow.pop %v1443
    %v1445 = vmul.f32 %v1441, 1.442695
    %v1446 = vpow.pop %v1445
    %v1447 = vmul.f32 %v1442, 1.442695
    %v1448 = vpow.pop %v1447
    %v1449 = vmul.f32 %v1434, %v1444
    %v1450 = vmul.f32 %v1435, %v1446
    %v1451 = vmul.f32 %v1436, %v1448
    %v1452 = vsub.f32 1.0, %v1449
    %v1453 = vsub.f32 1.0, %v1450
    %v1454 = vsub.f32 1.0, %v1451
    %vm1455 = vcmp.ge.f32.partialorder %v1353, 0.0
    %vm1456 = vcmp.ge.f32.partialorder %v1354, 0.0
    %vm1457 = vcmp.ge.f32.partialorder %v1355, 0.0
    %v1458 = vsub.f32 0.0, %v1452
    %v1459 = vsub.f32 0.0, %v1453
    %v1460 = vsub.f32 0.0, %v1454
    %v1461 = vsel %vm1455, %v1452, %v1458
    %v1462 = vsel %vm1456, %v1453, %v1459
    %v1463 = vsel %vm1457, %v1454, %v1460
    %v1464 = vmul.f32 %v1345, 0.5
    %v1465 = vmul.f32 %v1348, 0.5
    %v1466 = vmul.f32 %v1351, 0.5
    %v1467 = vadd.f32 %v1461, 1.0
    %v1468 = vadd.f32 %v1462, 1.0
    %v1469 = vadd.f32 %v1463, 1.0
    %v1470 = vmul.f32 %v1464, %v1467
    %v1471 = vmul.f32 %v1465, %v1468
    %v1472 = vmul.f32 %v1466, %v1469
    %v1473 = vld [vmem:[%s29] sm:$0xff]
    %v1474 = vld [vmem:[%s29 + $0x8] sm:$0xff]
    %v1475 = vld [vmem:[%s29 + $0x10] sm:$0xff]
    %v1476 = vld [vmem:[%s29 + $0x18] sm:$0xff]
    %v1477 = vld [vmem:[%s31] sm:$0x1]
    %v1479 = vperm.slane %v1477, 0
    %vm1481 = vcmask 261120
    %v1483 = vsel %vm1481, %v1470, 0
    %v1486 = vsel %vm1481, %v1471, 0
    %v1489 = vsel %vm1481, %v1472, 0
    %1491 = vmatpush.msra.mxu0 0.0
    %1492 = vmatpush.msra.mxu0 0.0
    %1493 = vmatpush.msra.mxu0 0.0
    %1494 = vmatpush.msra.mxu0 0.0
    %1495 = vmatpush.msra.mxu0 0.0
    %1496 = vmatpush.msra.mxu0 0.0
    %1497 = vmatpush.msra.mxu0 0.0
    %1498 = vmatpush.msra.mxu0 0.0
    %1499 = vmatpush.msra.mxu0 0.0
    %1500 = vmatpush.msra.mxu0 0.0
    %1501 = vmatpush.msra.mxu0 0.0
    %1502 = vmatpush.msra.mxu0 0.0
    %1503 = vmatpush.msra.mxu0 %v1476
    %1504 = vmatpush.msra.mxu0 %v1475
    %1505 = vmatpush.msra.mxu0 %v1474
    %1506 = vmatpush.msra.mxu0 %v1473
    %1507 = vmatmul.f32.gmra.mxu0 %v1483
    %v1508 = vpop.f32.mrf.mxu0
    %v1509 = vadd.f32 %v1479, %v1508
    %1510 = vmatmul.f32.gmra.mxu0 %v1486
    %v1511 = vpop.f32.mrf.mxu0
    %v1512 = vadd.f32 %v1479, %v1511
    %1513 = vmatmul.f32.gmra.mxu0 %v1489
    %v1514 = vpop.f32.mrf.mxu0
    %v1515 = vadd.f32 %v1479, %v1514
    %1516 = vdwg.mxu0
    %v1517 = vadd.f32 %v1309, %v1509
    %v1518 = vadd.f32 %v1310, %v1512
    %v1519 = vadd.f32 %v1311, %v1515
    %v1520 = vld [vmem:[%s37] sm:$0x1]
    %v1521 = vld [vmem:[%s39] sm:$0x1]
    %v1522 = vsel %vm129, %v1517, 0.0
    %1523 = vadd.xlane.f32.xlu0 %v1522
    %v1524 = vpop.xlane.xlu0 %1523
    %v1525 = vsel %vm129, %v1518, 0.0
    %1526 = vadd.xlane.f32.xlu0 %v1525
    %v1527 = vpop.xlane.xlu0 %1526
    %v1528 = vsel %vm121, %v1519, 0.0
    %1529 = vadd.xlane.f32.xlu0 %v1528
    %v1530 = vpop.xlane.xlu0 %1529
    %v1531 = vmul.f32 %v1524, %v1242
    %v1532 = vmul.f32 %v1527, %v1242
    %v1533 = vmul.f32 %v1530, %v1242
    %v1534 = vsub.f32 %v1517, %v1531
    %v1535 = vsub.f32 %v1518, %v1532
    %v1536 = vsub.f32 %v1519, %v1533
    %v1537 = vmul.f32 %v1534, %v1534
    %v1538 = vmul.f32 %v1535, %v1535
    %v1539 = vmul.f32 %v1536, %v1536
    %v1540 = vsel %vm129, %v1537, 0.0
    %1541 = vadd.xlane.f32.xlu0 %v1540
    %v1542 = vpop.xlane.xlu0 %1541
    %v1543 = vsel %vm129, %v1538, 0.0
    %1544 = vadd.xlane.f32.xlu0 %v1543
    %v1545 = vpop.xlane.xlu0 %1544
    %v1546 = vsel %vm121, %v1539, 0.0
    %1547 = vadd.xlane.f32.xlu0 %v1546
    %v1548 = vpop.xlane.xlu0 %1547
    %v1549 = vmul.f32 %v1542, %v1242
    %v1550 = vmul.f32 %v1545, %v1242
    %v1551 = vmul.f32 %v1548, %v1242
    %v1552 = vadd.f32 %v1549, 1e-05
    %v1553 = vadd.f32 %v1550, 1e-05
    %v1554 = vadd.f32 %v1551, 1e-05
    %v1555 = vrsqrt.pop %v1552
    %v1556 = vmul.f32 %v1555, %v1552
    %v1557 = vmul.f32 %v1556, %v1555
    %v1558 = vmul.f32 0.5, %v1557
    %v1559 = vsub.f32 1.5, %v1558
    %v1560 = vmul.f32 %v1555, %v1559
    %vm1561 = vweird.f32 %v1552
    %vm1562 = vweird.f32 %v1555
    %vm1563 = vmor %vm1561, %vm1562
    %v1564 = vsel %vm1563, %v1555, %v1560
    %v1565 = vrsqrt.pop %v1553
    %v1566 = vmul.f32 %v1565, %v1553
    %v1567 = vmul.f32 %v1566, %v1565
    %v1568 = vmul.f32 0.5, %v1567
    %v1569 = vsub.f32 1.5, %v1568
    %v1570 = vmul.f32 %v1565, %v1569
    %vm1571 = vweird.f32 %v1553
    %vm1572 = vweird.f32 %v1565
    %vm1573 = vmor %vm1571, %vm1572
    %v1574 = vsel %vm1573, %v1565, %v1570
    %v1575 = vrsqrt.pop %v1554
    %v1576 = vmul.f32 %v1575, %v1554
    %v1577 = vmul.f32 %v1576, %v1575
    %v1578 = vmul.f32 0.5, %v1577
    %v1579 = vsub.f32 1.5, %v1578
    %v1580 = vmul.f32 %v1575, %v1579
    %vm1581 = vweird.f32 %v1554
    %vm1582 = vweird.f32 %v1575
    %vm1583 = vmor %vm1581, %vm1582
    %v1584 = vsel %vm1583, %v1575, %v1580
    %v1585 = vmul.f32 %v1534, %v1564
    %v1586 = vmul.f32 %v1535, %v1574
    %v1587 = vmul.f32 %v1536, %v1584
    %v1589 = vperm.slane %v1520, 0
    %v1591 = vmul.f32 %v1585, %v1589
    %v1592 = vmul.f32 %v1586, %v1589
    %v1593 = vmul.f32 %v1587, %v1589
    %v1595 = vperm.slane %v1521, 0
    %v1597 = vadd.f32 %v1591, %v1595
    %v1598 = vadd.f32 %v1592, %v1595
    %v1599 = vadd.f32 %v1593, %v1595
    %s1600 = scalar_lea.vmem %s9, 64
    %v1601 = vld [vmem:[%s1600] sm:$0xff]
    %v1602 = vld [vmem:[%s1600 + $0x8] sm:$0xff]
    %s1603 = scalar_lea.vmem %s11, 4
    %v1604 = vld [vmem:[%s1603] sm:$0x1]
    %v1606 = vperm.slane %v1604, 0
    %v1609 = vsel %vm129, %v1597, 0
    %v1612 = vsel %vm129, %v1598, 0
    %v1615 = vsel %vm129, %v1599, 0
    %1617 = vmatpush.msra.mxu0 0.0
    %1618 = vmatpush.msra.mxu0 0.0
    %1619 = vmatpush.msra.mxu0 0.0
    %1620 = vmatpush.msra.mxu0 0.0
    %1621 = vmatpush.msra.mxu0 0.0
    %1622 = vmatpush.msra.mxu0 0.0
    %1623 = vmatpush.msra.mxu0 0.0
    %1624 = vmatpush.msra.mxu0 0.0
    %1625 = vmatpush.msra.mxu0 0.0
    %1626 = vmatpush.msra.mxu0 0.0
    %1627 = vmatpush.msra.mxu0 0.0
    %1628 = vmatpush.msra.mxu0 0.0
    %1629 = vmatpush.msra.mxu0 0.0
    %1630 = vmatpush.msra.mxu0 0.0
    %1631 = vmatpush.msra.mxu0 %v1602
    %1632 = vmatpush.msra.mxu0 %v1601
    %1633 = vmatmul.f32.gmra.mxu0 %v1609
    %v1634 = vpop.f32.mrf.mxu0
    %v1635 = vadd.f32 %v1606, %v1634
    %1636 = vmatmul.f32.gmra.mxu0 %v1612
    %v1637 = vpop.f32.mrf.mxu0
    %v1638 = vadd.f32 %v1606, %v1637
    %1639 = vmatmul.f32.gmra.mxu0 %v1615
    %v1640 = vpop.f32.mrf.mxu0
    %v1641 = vadd.f32 %v1606, %v1640
    %1642 = vdwg.mxu0
    %s1643 = scalar_lea.vmem %s13, 64
    %v1644 = vld [vmem:[%s1643] sm:$0xff]
    %v1645 = vld [vmem:[%s1643 + $0x8] sm:$0xff]
    %s1646 = scalar_lea.vmem %s15, 4
    %v1647 = vld [vmem:[%s1646] sm:$0x1]
    %v1649 = vperm.slane %v1647, 0
    %1651 = vmatpush.msra.mxu0 0.0
    %1652 = vmatpush.msra.mxu0 0.0
    %1653 = vmatpush.msra.mxu0 0.0
    %1654 = vmatpush.msra.mxu0 0.0
    %1655 = vmatpush.msra.mxu0 0.0
    %1656 = vmatpush.msra.mxu0 0.0
    %1657 = vmatpush.msra.mxu0 0.0
    %1658 = vmatpush.msra.mxu0 0.0
    %1659 = vmatpush.msra.mxu0 0.0
    %1660 = vmatpush.msra.mxu0 0.0
    %1661 = vmatpush.msra.mxu0 0.0
    %1662 = vmatpush.msra.mxu0 0.0
    %1663 = vmatpush.msra.mxu0 0.0
    %1664 = vmatpush.msra.mxu0 0.0
    %1665 = vmatpush.msra.mxu0 %v1645
    %1666 = vmatpush.msra.mxu0 %v1644
    %1667 = vmatmul.f32.gmra.mxu0 %v1609
    %v1668 = vpop.f32.mrf.mxu0
    %v1669 = vadd.f32 %v1649, %v1668
    %1670 = vmatmul.f32.gmra.mxu0 %v1612
    %v1671 = vpop.f32.mrf.mxu0
    %v1672 = vadd.f32 %v1649, %v1671
    %1673 = vmatmul.f32.gmra.mxu0 %v1615
    %v1674 = vpop.f32.mrf.mxu0
    %v1675 = vadd.f32 %v1649, %v1674
    %1676 = vdwg.mxu0
    %s1677 = scalar_lea.vmem %s17, 64
    %v1678 = vld [vmem:[%s1677] sm:$0xff]
    %v1679 = vld [vmem:[%s1677 + $0x8] sm:$0xff]
    %s1680 = scalar_lea.vmem %s19, 4
    %v1681 = vld [vmem:[%s1680] sm:$0x1]
    %v1683 = vperm.slane %v1681, 0
    %1685 = vmatpush.msra.mxu0 0.0
    %1686 = vmatpush.msra.mxu0 0.0
    %1687 = vmatpush.msra.mxu0 0.0
    %1688 = vmatpush.msra.mxu0 0.0
    %1689 = vmatpush.msra.mxu0 0.0
    %1690 = vmatpush.msra.mxu0 0.0
    %1691 = vmatpush.msra.mxu0 0.0
    %1692 = vmatpush.msra.mxu0 0.0
    %1693 = vmatpush.msra.mxu0 0.0
    %1694 = vmatpush.msra.mxu0 0.0
    %1695 = vmatpush.msra.mxu0 0.0
    %1696 = vmatpush.msra.mxu0 0.0
    %1697 = vmatpush.msra.mxu0 0.0
    %1698 = vmatpush.msra.mxu0 0.0
    %1699 = vmatpush.msra.mxu0 %v1679
    %1700 = vmatpush.msra.mxu0 %v1678
    %1701 = vmatmul.f32.gmra.mxu0 %v1609
    %v1702 = vpop.f32.mrf.mxu0
    %v1703 = vadd.f32 %v1683, %v1702
    %1704 = vmatmul.f32.gmra.mxu0 %v1612
    %v1705 = vpop.f32.mrf.mxu0
    %v1706 = vadd.f32 %v1683, %v1705
    %1707 = vmatmul.f32.gmra.mxu0 %v1615
    %v1708 = vpop.f32.mrf.mxu0
    %v1709 = vadd.f32 %v1683, %v1708
    %1710 = vdwg.mxu0
    %v1712 = vsel %vm243, %v1635, 0
    %v1715 = vsel %vm243, %v1638, 0
    %v1718 = vsel %vm243, %v1641, 0
    %v1721 = vsel %vm243, %v1669, 0
    %v1724 = vsel %vm243, %v1672, 0
    %v1727 = vsel %vm243, %v1675, 0
    %1729 = vmatpush.xpose.msra.mxu0 0.0
    %1730 = vmatpush.xpose.msra.mxu0 0.0
    %1731 = vmatpush.xpose.msra.mxu0 0.0
    %1732 = vmatpush.xpose.msra.mxu0 0.0
    %1733 = vmatpush.xpose.msra.mxu0 0.0
    %1734 = vmatpush.xpose.msra.mxu0 0.0
    %1735 = vmatpush.xpose.msra.mxu0 0.0
    %1736 = vmatpush.xpose.msra.mxu0 0.0
    %1737 = vmatpush.xpose.msra.mxu0 0.0
    %1738 = vmatpush.xpose.msra.mxu0 0.0
    %1739 = vmatpush.xpose.msra.mxu0 0.0
    %1740 = vmatpush.xpose.msra.mxu0 0.0
    %1741 = vmatpush.xpose.msra.mxu0 0.0
    %1742 = vmatpush.xpose.msra.mxu0 %v1727
    %1743 = vmatpush.xpose.msra.mxu0 %v1724
    %1744 = vmatpush.xpose.msra.mxu0 %v1721
    %1745 = vmatmul.f32.gmra.mxu0 %v1712
    %v1746 = vpop.f32.mrf.mxu0
    %v1747 = vadd.f32 %v135, %v1746
    %1748 = vmatmul.f32.gmra.mxu0 %v1715
    %v1749 = vpop.f32.mrf.mxu0
    %v1750 = vadd.f32 %v136, %v1749
    %1751 = vmatmul.f32.gmra.mxu0 %v1718
    %v1752 = vpop.f32.mrf.mxu0
    %v1753 = vadd.f32 %v137, %v1752
    %1754 = vdwg.mxu0
    %v1755 = vsel %vm288, %v1747, -inf
    %1756 = vmax.xlane.f32.xlu0 %v1755
    %v1757 = vpop.xlane.xlu0 %1756
    %v1758 = vsel %vm288, %v1750, -inf
    %1759 = vmax.xlane.f32.xlu0 %v1758
    %v1760 = vpop.xlane.xlu0 %1759
    %v1761 = vsel %vm295, %v1753, -inf
    %1762 = vmax.xlane.f32.xlu0 %v1761
    %v1763 = vpop.xlane.xlu0 %1762
    %v1764 = vsub.f32 %v1747, %v1757
    %v1765 = vsub.f32 %v1750, %v1760
    %v1766 = vsub.f32 %v1753, %v1763
    %v1767 = vmul.f32 %v1764, 1.442695
    %v1768 = vpow.pop %v1767
    %v1769 = vmul.f32 %v1765, 1.442695
    %v1770 = vpow.pop %v1769
    %v1771 = vmul.f32 %v1766, 1.442695
    %v1772 = vpow.pop %v1771
    %v1773 = vsel %vm288, %v1768, 0.0
    %1774 = vadd.xlane.f32.xlu0 %v1773
    %v1775 = vpop.xlane.xlu0 %1774
    %v1776 = vsel %vm288, %v1770, 0.0
    %1777 = vadd.xlane.f32.xlu0 %v1776
    %v1778 = vpop.xlane.xlu0 %1777
    %v1779 = vsel %vm295, %v1772, 0.0
    %1780 = vadd.xlane.f32.xlu0 %v1779
    %v1781 = vpop.xlane.xlu0 %1780
    %v1782 = vrcp.pop %v1775
    %v1783 = vrcp.pop %v1778
    %v1784 = vrcp.pop %v1781
    %v1785 = vmul.f32 %v1775, %v1782
    %v1786 = vmul.f32 %v1778, %v1783
    %v1787 = vmul.f32 %v1781, %v1784
    %v1788 = vsub.f32 2.0, %v1785
    %v1789 = vsub.f32 2.0, %v1786
    %v1790 = vsub.f32 2.0, %v1787
    %v1791 = vmul.f32 %v1782, %v1788
    %v1792 = vmul.f32 %v1783, %v1789
    %v1793 = vmul.f32 %v1784, %v1790
    %v1794 = vmul.f32 %v1768, %v1791
    %v1795 = vmul.f32 %v1770, %v1792
    %v1796 = vmul.f32 %v1772, %v1793
    %v1798 = vsel %vm288, %v1794, 0
    %v1801 = vsel %vm288, %v1795, 0
    %v1804 = vsel %vm288, %v1796, 0
    %v1807 = vsel %vm341, %v1709, 0
    %1809 = vmatpush.msra.mxu0 0.0
    %1810 = vmatpush.msra.mxu0 0.0
    %1811 = vmatpush.msra.mxu0 0.0
    %1812 = vmatpush.msra.mxu0 0.0
    %1813 = vmatpush.msra.mxu0 0.0
    %1814 = vmatpush.msra.mxu0 0.0
    %1815 = vmatpush.msra.mxu0 0.0
    %1816 = vmatpush.msra.mxu0 0.0
    %1817 = vmatpush.msra.mxu0 0.0
    %1818 = vmatpush.msra.mxu0 0.0
    %1819 = vmatpush.msra.mxu0 0.0
    %1820 = vmatpush.msra.mxu0 0.0
    %1821 = vmatpush.msra.mxu0 0.0
    %1822 = vmatpush.msra.mxu0 %v1807
    %1823 = vmatpush.msra.mxu0 %v1706
    %1824 = vmatpush.msra.mxu0 %v1703
    %1825 = vmatmul.f32.gmra.mxu0 %v1798
    %v1826 = vpop.f32.mrf.mxu0
    %v1827 = vadd.f32 0.0, %v1826
    %1828 = vmatmul.f32.gmra.mxu0 %v1801
    %v1829 = vpop.f32.mrf.mxu0
    %v1830 = vadd.f32 0.0, %v1829
    %1831 = vmatmul.f32.gmra.mxu0 %v1804
    %v1832 = vpop.f32.mrf.mxu0
    %v1833 = vadd.f32 0.0, %v1832
    %1834 = vdwg.mxu0
    %s1835 = scalar_lea.vmem %s21, 16
    %v1836 = vld [vmem:[%s1835] sm:$0xf]
    %s1837 = scalar_lea.vmem %s9, 80
    %v1838 = vld [vmem:[%s1837] sm:$0xff]
    %v1839 = vld [vmem:[%s1837 + $0x8] sm:$0xff]
    %s1840 = scalar_lea.vmem %s11, 5
    %v1841 = vld [vmem:[%s1840] sm:$0x1]
    %v1843 = vperm.slane %v1841, 0
    %1845 = vmatpush.msra.mxu0 0.0
    %1846 = vmatpush.msra.mxu0 0.0
    %1847 = vmatpush.msra.mxu0 0.0
    %1848 = vmatpush.msra.mxu0 0.0
    %1849 = vmatpush.msra.mxu0 0.0
    %1850 = vmatpush.msra.mxu0 0.0
    %1851 = vmatpush.msra.mxu0 0.0
    %1852 = vmatpush.msra.mxu0 0.0
    %1853 = vmatpush.msra.mxu0 0.0
    %1854 = vmatpush.msra.mxu0 0.0
    %1855 = vmatpush.msra.mxu0 0.0
    %1856 = vmatpush.msra.mxu0 0.0
    %1857 = vmatpush.msra.mxu0 0.0
    %1858 = vmatpush.msra.mxu0 0.0
    %1859 = vmatpush.msra.mxu0 %v1839
    %1860 = vmatpush.msra.mxu0 %v1838
    %1861 = vmatmul.f32.gmra.mxu0 %v1609
    %v1862 = vpop.f32.mrf.mxu0
    %v1863 = vadd.f32 %v1843, %v1862
    %1864 = vmatmul.f32.gmra.mxu0 %v1612
    %v1865 = vpop.f32.mrf.mxu0
    %v1866 = vadd.f32 %v1843, %v1865
    %1867 = vmatmul.f32.gmra.mxu0 %v1615
    %v1868 = vpop.f32.mrf.mxu0
    %v1869 = vadd.f32 %v1843, %v1868
    %1870 = vdwg.mxu0
    %s1871 = scalar_lea.vmem %s13, 80
    %v1872 = vld [vmem:[%s1871] sm:$0xff]
    %v1873 = vld [vmem:[%s1871 + $0x8] sm:$0xff]
    %s1874 = scalar_lea.vmem %s15, 5
    %v1875 = vld [vmem:[%s1874] sm:$0x1]
    %v1877 = vperm.slane %v1875, 0
    %1879 = vmatpush.msra.mxu0 0.0
    %1880 = vmatpush.msra.mxu0 0.0
    %1881 = vmatpush.msra.mxu0 0.0
    %1882 = vmatpush.msra.mxu0 0.0
    %1883 = vmatpush.msra.mxu0 0.0
    %1884 = vmatpush.msra.mxu0 0.0
    %1885 = vmatpush.msra.mxu0 0.0
    %1886 = vmatpush.msra.mxu0 0.0
    %1887 = vmatpush.msra.mxu0 0.0
    %1888 = vmatpush.msra.mxu0 0.0
    %1889 = vmatpush.msra.mxu0 0.0
    %1890 = vmatpush.msra.mxu0 0.0
    %1891 = vmatpush.msra.mxu0 0.0
    %1892 = vmatpush.msra.mxu0 0.0
    %1893 = vmatpush.msra.mxu0 %v1873
    %1894 = vmatpush.msra.mxu0 %v1872
    %1895 = vmatmul.f32.gmra.mxu0 %v1609
    %v1896 = vpop.f32.mrf.mxu0
    %v1897 = vadd.f32 %v1877, %v1896
    %1898 = vmatmul.f32.gmra.mxu0 %v1612
    %v1899 = vpop.f32.mrf.mxu0
    %v1900 = vadd.f32 %v1877, %v1899
    %1901 = vmatmul.f32.gmra.mxu0 %v1615
    %v1902 = vpop.f32.mrf.mxu0
    %v1903 = vadd.f32 %v1877, %v1902
    %1904 = vdwg.mxu0
    %s1905 = scalar_lea.vmem %s17, 80
    %v1906 = vld [vmem:[%s1905] sm:$0xff]
    %v1907 = vld [vmem:[%s1905 + $0x8] sm:$0xff]
    %s1908 = scalar_lea.vmem %s19, 5
    %v1909 = vld [vmem:[%s1908] sm:$0x1]
    %v1911 = vperm.slane %v1909, 0
    %1913 = vmatpush.msra.mxu0 0.0
    %1914 = vmatpush.msra.mxu0 0.0
    %1915 = vmatpush.msra.mxu0 0.0
    %1916 = vmatpush.msra.mxu0 0.0
    %1917 = vmatpush.msra.mxu0 0.0
    %1918 = vmatpush.msra.mxu0 0.0
    %1919 = vmatpush.msra.mxu0 0.0
    %1920 = vmatpush.msra.mxu0 0.0
    %1921 = vmatpush.msra.mxu0 0.0
    %1922 = vmatpush.msra.mxu0 0.0
    %1923 = vmatpush.msra.mxu0 0.0
    %1924 = vmatpush.msra.mxu0 0.0
    %1925 = vmatpush.msra.mxu0 0.0
    %1926 = vmatpush.msra.mxu0 0.0
    %1927 = vmatpush.msra.mxu0 %v1907
    %1928 = vmatpush.msra.mxu0 %v1906
    %1929 = vmatmul.f32.gmra.mxu0 %v1609
    %v1930 = vpop.f32.mrf.mxu0
    %v1931 = vadd.f32 %v1911, %v1930
    %1932 = vmatmul.f32.gmra.mxu0 %v1612
    %v1933 = vpop.f32.mrf.mxu0
    %v1934 = vadd.f32 %v1911, %v1933
    %1935 = vmatmul.f32.gmra.mxu0 %v1615
    %v1936 = vpop.f32.mrf.mxu0
    %v1937 = vadd.f32 %v1911, %v1936
    %1938 = vdwg.mxu0
    %v1940 = vsel %vm243, %v1863, 0
    %v1943 = vsel %vm243, %v1866, 0
    %v1946 = vsel %vm243, %v1869, 0
    %v1949 = vsel %vm243, %v1897, 0
    %v1952 = vsel %vm243, %v1900, 0
    %v1955 = vsel %vm243, %v1903, 0
    %1957 = vmatpush.xpose.msra.mxu0 0.0
    %1958 = vmatpush.xpose.msra.mxu0 0.0
    %1959 = vmatpush.xpose.msra.mxu0 0.0
    %1960 = vmatpush.xpose.msra.mxu0 0.0
    %1961 = vmatpush.xpose.msra.mxu0 0.0
    %1962 = vmatpush.xpose.msra.mxu0 0.0
    %1963 = vmatpush.xpose.msra.mxu0 0.0
    %1964 = vmatpush.xpose.msra.mxu0 0.0
    %1965 = vmatpush.xpose.msra.mxu0 0.0
    %1966 = vmatpush.xpose.msra.mxu0 0.0
    %1967 = vmatpush.xpose.msra.mxu0 0.0
    %1968 = vmatpush.xpose.msra.mxu0 0.0
    %1969 = vmatpush.xpose.msra.mxu0 0.0
    %1970 = vmatpush.xpose.msra.mxu0 %v1955
    %1971 = vmatpush.xpose.msra.mxu0 %v1952
    %1972 = vmatpush.xpose.msra.mxu0 %v1949
    %1973 = vmatmul.f32.gmra.mxu0 %v1940
    %v1974 = vpop.f32.mrf.mxu0
    %v1975 = vadd.f32 %v135, %v1974
    %1976 = vmatmul.f32.gmra.mxu0 %v1943
    %v1977 = vpop.f32.mrf.mxu0
    %v1978 = vadd.f32 %v136, %v1977
    %1979 = vmatmul.f32.gmra.mxu0 %v1946
    %v1980 = vpop.f32.mrf.mxu0
    %v1981 = vadd.f32 %v137, %v1980
    %1982 = vdwg.mxu0
    %v1983 = vsel %vm288, %v1975, -inf
    %1984 = vmax.xlane.f32.xlu0 %v1983
    %v1985 = vpop.xlane.xlu0 %1984
    %v1986 = vsel %vm288, %v1978, -inf
    %1987 = vmax.xlane.f32.xlu0 %v1986
    %v1988 = vpop.xlane.xlu0 %1987
    %v1989 = vsel %vm295, %v1981, -inf
    %1990 = vmax.xlane.f32.xlu0 %v1989
    %v1991 = vpop.xlane.xlu0 %1990
    %v1992 = vsub.f32 %v1975, %v1985
    %v1993 = vsub.f32 %v1978, %v1988
    %v1994 = vsub.f32 %v1981, %v1991
    %v1995 = vmul.f32 %v1992, 1.442695
    %v1996 = vpow.pop %v1995
    %v1997 = vmul.f32 %v1993, 1.442695
    %v1998 = vpow.pop %v1997
    %v1999 = vmul.f32 %v1994, 1.442695
    %v2000 = vpow.pop %v1999
    %v2001 = vsel %vm288, %v1996, 0.0
    %2002 = vadd.xlane.f32.xlu0 %v2001
    %v2003 = vpop.xlane.xlu0 %2002
    %v2004 = vsel %vm288, %v1998, 0.0
    %2005 = vadd.xlane.f32.xlu0 %v2004
    %v2006 = vpop.xlane.xlu0 %2005
    %v2007 = vsel %vm295, %v2000, 0.0
    %2008 = vadd.xlane.f32.xlu0 %v2007
    %v2009 = vpop.xlane.xlu0 %2008
    %v2010 = vrcp.pop %v2003
    %v2011 = vrcp.pop %v2006
    %v2012 = vrcp.pop %v2009
    %v2013 = vmul.f32 %v2003, %v2010
    %v2014 = vmul.f32 %v2006, %v2011
    %v2015 = vmul.f32 %v2009, %v2012
    %v2016 = vsub.f32 2.0, %v2013
    %v2017 = vsub.f32 2.0, %v2014
    %v2018 = vsub.f32 2.0, %v2015
    %v2019 = vmul.f32 %v2010, %v2016
    %v2020 = vmul.f32 %v2011, %v2017
    %v2021 = vmul.f32 %v2012, %v2018
    %v2022 = vmul.f32 %v1996, %v2019
    %v2023 = vmul.f32 %v1998, %v2020
    %v2024 = vmul.f32 %v2000, %v2021
    %v2026 = vsel %vm288, %v2022, 0
    %v2029 = vsel %vm288, %v2023, 0
    %v2032 = vsel %vm288, %v2024, 0
    %v2035 = vsel %vm341, %v1937, 0
    %2037 = vmatpush.msra.mxu0 0.0
    %2038 = vmatpush.msra.mxu0 0.0
    %2039 = vmatpush.msra.mxu0 0.0
    %2040 = vmatpush.msra.mxu0 0.0
    %2041 = vmatpush.msra.mxu0 0.0
    %2042 = vmatpush.msra.mxu0 0.0
    %2043 = vmatpush.msra.mxu0 0.0
    %2044 = vmatpush.msra.mxu0 0.0
    %2045 = vmatpush.msra.mxu0 0.0
    %2046 = vmatpush.msra.mxu0 0.0
    %2047 = vmatpush.msra.mxu0 0.0
    %2048 = vmatpush.msra.mxu0 0.0
    %2049 = vmatpush.msra.mxu0 0.0
    %2050 = vmatpush.msra.mxu0 %v2035
    %2051 = vmatpush.msra.mxu0 %v1934
    %2052 = vmatpush.msra.mxu0 %v1931
    %2053 = vmatmul.f32.gmra.mxu0 %v2026
    %v2054 = vpop.f32.mrf.mxu0
    %v2055 = vadd.f32 0.0, %v2054
    %2056 = vmatmul.f32.gmra.mxu0 %v2029
    %v2057 = vpop.f32.mrf.mxu0
    %v2058 = vadd.f32 0.0, %v2057
    %2059 = vmatmul.f32.gmra.mxu0 %v2032
    %v2060 = vpop.f32.mrf.mxu0
    %v2061 = vadd.f32 0.0, %v2060
    %2062 = vdwg.mxu0
    %s2063 = scalar_lea.vmem %s21, 20
    %v2064 = vld [vmem:[%s2063] sm:$0xf]
    %v2066 = vsel %vm243, %v2055, 0
    %v2069 = vsel %vm243, %v2058, 0
    %v2072 = vsel %vm243, %v2061, 0
    %v2075 = vsel %vm609, %v2064, 0
    %2077 = vmatpush.msra.mxu0 0.0
    %2078 = vmatpush.msra.mxu0 0.0
    %2079 = vmatpush.msra.mxu0 0.0
    %2080 = vmatpush.msra.mxu0 0.0
    %2081 = vmatpush.msra.mxu0 0.0
    %2082 = vmatpush.msra.mxu0 0.0
    %2083 = vmatpush.msra.mxu0 0.0
    %2084 = vmatpush.msra.mxu0 0.0
    %2085 = vmatpush.msra.mxu0 0.0
    %2086 = vmatpush.msra.mxu0 0.0
    %2087 = vmatpush.msra.mxu0 0.0
    %2088 = vmatpush.msra.mxu0 0.0
    %2089 = vmatpush.msra.mxu0 0.0
    %2090 = vmatpush.msra.mxu0 0.0
    %2091 = vmatpush.msra.mxu0 0.0
    %2092 = vmatpush.msra.mxu0 %v2075
    %2093 = vmatmul.f32.gmra.mxu0 %v2066
    %v2094 = vpop.f32.mrf.mxu0
    %v2095 = vadd.f32 0.0, %v2094
    %2096 = vmatmul.f32.gmra.mxu0 %v2069
    %v2097 = vpop.f32.mrf.mxu0
    %v2098 = vadd.f32 0.0, %v2097
    %2099 = vmatmul.f32.gmra.mxu0 %v2072
    %v2100 = vpop.f32.mrf.mxu0
    %v2101 = vadd.f32 0.0, %v2100
    %2102 = vdwg.mxu0
    %v2104 = vsel %vm243, %v1827, 0
    %v2107 = vsel %vm243, %v1830, 0
    %v2110 = vsel %vm243, %v1833, 0
    %v2113 = vsel %vm609, %v1836, 0
    %2115 = vmatpush.msra.mxu0 0.0
    %2116 = vmatpush.msra.mxu0 0.0
    %2117 = vmatpush.msra.mxu0 0.0
    %2118 = vmatpush.msra.mxu0 0.0
    %2119 = vmatpush.msra.mxu0 0.0
    %2120 = vmatpush.msra.mxu0 0.0
    %2121 = vmatpush.msra.mxu0 0.0
    %2122 = vmatpush.msra.mxu0 0.0
    %2123 = vmatpush.msra.mxu0 0.0
    %2124 = vmatpush.msra.mxu0 0.0
    %2125 = vmatpush.msra.mxu0 0.0
    %2126 = vmatpush.msra.mxu0 0.0
    %2127 = vmatpush.msra.mxu0 0.0
    %2128 = vmatpush.msra.mxu0 0.0
    %2129 = vmatpush.msra.mxu0 0.0
    %2130 = vmatpush.msra.mxu0 %v2113
    %2131 = vmatmul.f32.gmra.mxu0 %v2104
    %v2132 = vpop.f32.mrf.mxu0
    %v2133 = vadd.f32 %v2095, %v2132
    %2134 = vmatmul.f32.gmra.mxu0 %v2107
    %v2135 = vpop.f32.mrf.mxu0
    %v2136 = vadd.f32 %v2098, %v2135
    %2137 = vmatmul.f32.gmra.mxu0 %v2110
    %v2138 = vpop.f32.mrf.mxu0
    %v2139 = vadd.f32 %v2101, %v2138
    %2140 = vdwg.mxu0
    %s2141 = scalar_lea.vmem %s9, 96
    %v2142 = vld [vmem:[%s2141] sm:$0xff]
    %v2143 = vld [vmem:[%s2141 + $0x8] sm:$0xff]
    %s2144 = scalar_lea.vmem %s11, 6
    %v2145 = vld [vmem:[%s2144] sm:$0x1]
    %v2147 = vperm.slane %v2145, 0
    %2149 = vmatpush.msra.mxu0 0.0
    %2150 = vmatpush.msra.mxu0 0.0
    %2151 = vmatpush.msra.mxu0 0.0
    %2152 = vmatpush.msra.mxu0 0.0
    %2153 = vmatpush.msra.mxu0 0.0
    %2154 = vmatpush.msra.mxu0 0.0
    %2155 = vmatpush.msra.mxu0 0.0
    %2156 = vmatpush.msra.mxu0 0.0
    %2157 = vmatpush.msra.mxu0 0.0
    %2158 = vmatpush.msra.mxu0 0.0
    %2159 = vmatpush.msra.mxu0 0.0
    %2160 = vmatpush.msra.mxu0 0.0
    %2161 = vmatpush.msra.mxu0 0.0
    %2162 = vmatpush.msra.mxu0 0.0
    %2163 = vmatpush.msra.mxu0 %v2143
    %2164 = vmatpush.msra.mxu0 %v2142
    %2165 = vmatmul.f32.gmra.mxu0 %v1609
    %v2166 = vpop.f32.mrf.mxu0
    %v2167 = vadd.f32 %v2147, %v2166
    %2168 = vmatmul.f32.gmra.mxu0 %v1612
    %v2169 = vpop.f32.mrf.mxu0
    %v2170 = vadd.f32 %v2147, %v2169
    %2171 = vmatmul.f32.gmra.mxu0 %v1615
    %v2172 = vpop.f32.mrf.mxu0
    %v2173 = vadd.f32 %v2147, %v2172
    %2174 = vdwg.mxu0
    %s2175 = scalar_lea.vmem %s13, 96
    %v2176 = vld [vmem:[%s2175] sm:$0xff]
    %v2177 = vld [vmem:[%s2175 + $0x8] sm:$0xff]
    %s2178 = scalar_lea.vmem %s15, 6
    %v2179 = vld [vmem:[%s2178] sm:$0x1]
    %v2181 = vperm.slane %v2179, 0
    %2183 = vmatpush.msra.mxu0 0.0
    %2184 = vmatpush.msra.mxu0 0.0
    %2185 = vmatpush.msra.mxu0 0.0
    %2186 = vmatpush.msra.mxu0 0.0
    %2187 = vmatpush.msra.mxu0 0.0
    %2188 = vmatpush.msra.mxu0 0.0
    %2189 = vmatpush.msra.mxu0 0.0
    %2190 = vmatpush.msra.mxu0 0.0
    %2191 = vmatpush.msra.mxu0 0.0
    %2192 = vmatpush.msra.mxu0 0.0
    %2193 = vmatpush.msra.mxu0 0.0
    %2194 = vmatpush.msra.mxu0 0.0
    %2195 = vmatpush.msra.mxu0 0.0
    %2196 = vmatpush.msra.mxu0 0.0
    %2197 = vmatpush.msra.mxu0 %v2177
    %2198 = vmatpush.msra.mxu0 %v2176
    %2199 = vmatmul.f32.gmra.mxu0 %v1609
    %v2200 = vpop.f32.mrf.mxu0
    %v2201 = vadd.f32 %v2181, %v2200
    %2202 = vmatmul.f32.gmra.mxu0 %v1612
    %v2203 = vpop.f32.mrf.mxu0
    %v2204 = vadd.f32 %v2181, %v2203
    %2205 = vmatmul.f32.gmra.mxu0 %v1615
    %v2206 = vpop.f32.mrf.mxu0
    %v2207 = vadd.f32 %v2181, %v2206
    %2208 = vdwg.mxu0
    %s2209 = scalar_lea.vmem %s17, 96
    %v2210 = vld [vmem:[%s2209] sm:$0xff]
    %v2211 = vld [vmem:[%s2209 + $0x8] sm:$0xff]
    %s2212 = scalar_lea.vmem %s19, 6
    %v2213 = vld [vmem:[%s2212] sm:$0x1]
    %v2215 = vperm.slane %v2213, 0
    %2217 = vmatpush.msra.mxu0 0.0
    %2218 = vmatpush.msra.mxu0 0.0
    %2219 = vmatpush.msra.mxu0 0.0
    %2220 = vmatpush.msra.mxu0 0.0
    %2221 = vmatpush.msra.mxu0 0.0
    %2222 = vmatpush.msra.mxu0 0.0
    %2223 = vmatpush.msra.mxu0 0.0
    %2224 = vmatpush.msra.mxu0 0.0
    %2225 = vmatpush.msra.mxu0 0.0
    %2226 = vmatpush.msra.mxu0 0.0
    %2227 = vmatpush.msra.mxu0 0.0
    %2228 = vmatpush.msra.mxu0 0.0
    %2229 = vmatpush.msra.mxu0 0.0
    %2230 = vmatpush.msra.mxu0 0.0
    %2231 = vmatpush.msra.mxu0 %v2211
    %2232 = vmatpush.msra.mxu0 %v2210
    %2233 = vmatmul.f32.gmra.mxu0 %v1609
    %v2234 = vpop.f32.mrf.mxu0
    %v2235 = vadd.f32 %v2215, %v2234
    %2236 = vmatmul.f32.gmra.mxu0 %v1612
    %v2237 = vpop.f32.mrf.mxu0
    %v2238 = vadd.f32 %v2215, %v2237
    %2239 = vmatmul.f32.gmra.mxu0 %v1615
    %v2240 = vpop.f32.mrf.mxu0
    %v2241 = vadd.f32 %v2215, %v2240
    %2242 = vdwg.mxu0
    %v2244 = vsel %vm243, %v2167, 0
    %v2247 = vsel %vm243, %v2170, 0
    %v2250 = vsel %vm243, %v2173, 0
    %v2253 = vsel %vm243, %v2201, 0
    %v2256 = vsel %vm243, %v2204, 0
    %v2259 = vsel %vm243, %v2207, 0
    %2261 = vmatpush.xpose.msra.mxu0 0.0
    %2262 = vmatpush.xpose.msra.mxu0 0.0
    %2263 = vmatpush.xpose.msra.mxu0 0.0
    %2264 = vmatpush.xpose.msra.mxu0 0.0
    %2265 = vmatpush.xpose.msra.mxu0 0.0
    %2266 = vmatpush.xpose.msra.mxu0 0.0
    %2267 = vmatpush.xpose.msra.mxu0 0.0
    %2268 = vmatpush.xpose.msra.mxu0 0.0
    %2269 = vmatpush.xpose.msra.mxu0 0.0
    %2270 = vmatpush.xpose.msra.mxu0 0.0
    %2271 = vmatpush.xpose.msra.mxu0 0.0
    %2272 = vmatpush.xpose.msra.mxu0 0.0
    %2273 = vmatpush.xpose.msra.mxu0 0.0
    %2274 = vmatpush.xpose.msra.mxu0 %v2259
    %2275 = vmatpush.xpose.msra.mxu0 %v2256
    %2276 = vmatpush.xpose.msra.mxu0 %v2253
    %2277 = vmatmul.f32.gmra.mxu0 %v2244
    %v2278 = vpop.f32.mrf.mxu0
    %v2279 = vadd.f32 %v135, %v2278
    %2280 = vmatmul.f32.gmra.mxu0 %v2247
    %v2281 = vpop.f32.mrf.mxu0
    %v2282 = vadd.f32 %v136, %v2281
    %2283 = vmatmul.f32.gmra.mxu0 %v2250
    %v2284 = vpop.f32.mrf.mxu0
    %v2285 = vadd.f32 %v137, %v2284
    %2286 = vdwg.mxu0
    %v2287 = vsel %vm288, %v2279, -inf
    %2288 = vmax.xlane.f32.xlu0 %v2287
    %v2289 = vpop.xlane.xlu0 %2288
    %v2290 = vsel %vm288, %v2282, -inf
    %2291 = vmax.xlane.f32.xlu0 %v2290
    %v2292 = vpop.xlane.xlu0 %2291
    %v2293 = vsel %vm295, %v2285, -inf
    %2294 = vmax.xlane.f32.xlu0 %v2293
    %v2295 = vpop.xlane.xlu0 %2294
    %v2296 = vsub.f32 %v2279, %v2289
    %v2297 = vsub.f32 %v2282, %v2292
    %v2298 = vsub.f32 %v2285, %v2295
    %v2299 = vmul.f32 %v2296, 1.442695
    %v2300 = vpow.pop %v2299
    %v2301 = vmul.f32 %v2297, 1.442695
    %v2302 = vpow.pop %v2301
    %v2303 = vmul.f32 %v2298, 1.442695
    %v2304 = vpow.pop %v2303
    %v2305 = vsel %vm288, %v2300, 0.0
    %2306 = vadd.xlane.f32.xlu0 %v2305
    %v2307 = vpop.xlane.xlu0 %2306
    %v2308 = vsel %vm288, %v2302, 0.0
    %2309 = vadd.xlane.f32.xlu0 %v2308
    %v2310 = vpop.xlane.xlu0 %2309
    %v2311 = vsel %vm295, %v2304, 0.0
    %2312 = vadd.xlane.f32.xlu0 %v2311
    %v2313 = vpop.xlane.xlu0 %2312
    %v2314 = vrcp.pop %v2307
    %v2315 = vrcp.pop %v2310
    %v2316 = vrcp.pop %v2313
    %v2317 = vmul.f32 %v2307, %v2314
    %v2318 = vmul.f32 %v2310, %v2315
    %v2319 = vmul.f32 %v2313, %v2316
    %v2320 = vsub.f32 2.0, %v2317
    %v2321 = vsub.f32 2.0, %v2318
    %v2322 = vsub.f32 2.0, %v2319
    %v2323 = vmul.f32 %v2314, %v2320
    %v2324 = vmul.f32 %v2315, %v2321
    %v2325 = vmul.f32 %v2316, %v2322
    %v2326 = vmul.f32 %v2300, %v2323
    %v2327 = vmul.f32 %v2302, %v2324
    %v2328 = vmul.f32 %v2304, %v2325
    %v2330 = vsel %vm288, %v2326, 0
    %v2333 = vsel %vm288, %v2327, 0
    %v2336 = vsel %vm288, %v2328, 0
    %v2339 = vsel %vm341, %v2241, 0
    %2341 = vmatpush.msra.mxu0 0.0
    %2342 = vmatpush.msra.mxu0 0.0
    %2343 = vmatpush.msra.mxu0 0.0
    %2344 = vmatpush.msra.mxu0 0.0
    %2345 = vmatpush.msra.mxu0 0.0
    %2346 = vmatpush.msra.mxu0 0.0
    %2347 = vmatpush.msra.mxu0 0.0
    %2348 = vmatpush.msra.mxu0 0.0
    %2349 = vmatpush.msra.mxu0 0.0
    %2350 = vmatpush.msra.mxu0 0.0
    %2351 = vmatpush.msra.mxu0 0.0
    %2352 = vmatpush.msra.mxu0 0.0
    %2353 = vmatpush.msra.mxu0 0.0
    %2354 = vmatpush.msra.mxu0 %v2339
    %2355 = vmatpush.msra.mxu0 %v2238
    %2356 = vmatpush.msra.mxu0 %v2235
    %2357 = vmatmul.f32.gmra.mxu0 %v2330
    %v2358 = vpop.f32.mrf.mxu0
    %v2359 = vadd.f32 0.0, %v2358
    %2360 = vmatmul.f32.gmra.mxu0 %v2333
    %v2361 = vpop.f32.mrf.mxu0
    %v2362 = vadd.f32 0.0, %v2361
    %2363 = vmatmul.f32.gmra.mxu0 %v2336
    %v2364 = vpop.f32.mrf.mxu0
    %v2365 = vadd.f32 0.0, %v2364
    %2366 = vdwg.mxu0
    %s2367 = scalar_lea.vmem %s21, 24
    %v2368 = vld [vmem:[%s2367] sm:$0xf]
    %v2370 = vsel %vm243, %v2359, 0
    %v2373 = vsel %vm243, %v2362, 0
    %v2376 = vsel %vm243, %v2365, 0
    %v2379 = vsel %vm609, %v2368, 0
    %2381 = vmatpush.msra.mxu0 0.0
    %2382 = vmatpush.msra.mxu0 0.0
    %2383 = vmatpush.msra.mxu0 0.0
    %2384 = vmatpush.msra.mxu0 0.0
    %2385 = vmatpush.msra.mxu0 0.0
    %2386 = vmatpush.msra.mxu0 0.0
    %2387 = vmatpush.msra.mxu0 0.0
    %2388 = vmatpush.msra.mxu0 0.0
    %2389 = vmatpush.msra.mxu0 0.0
    %2390 = vmatpush.msra.mxu0 0.0
    %2391 = vmatpush.msra.mxu0 0.0
    %2392 = vmatpush.msra.mxu0 0.0
    %2393 = vmatpush.msra.mxu0 0.0
    %2394 = vmatpush.msra.mxu0 0.0
    %2395 = vmatpush.msra.mxu0 0.0
    %2396 = vmatpush.msra.mxu0 %v2379
    %2397 = vmatmul.f32.gmra.mxu0 %v2370
    %v2398 = vpop.f32.mrf.mxu0
    %v2399 = vadd.f32 0.0, %v2398
    %2400 = vmatmul.f32.gmra.mxu0 %v2373
    %v2401 = vpop.f32.mrf.mxu0
    %v2402 = vadd.f32 0.0, %v2401
    %2403 = vmatmul.f32.gmra.mxu0 %v2376
    %v2404 = vpop.f32.mrf.mxu0
    %v2405 = vadd.f32 0.0, %v2404
    %2406 = vdwg.mxu0
    %v2407 = vadd.f32 %v2133, %v2399
    %v2408 = vadd.f32 %v2136, %v2402
    %v2409 = vadd.f32 %v2139, %v2405
    %s2410 = scalar_lea.vmem %s9, 112
    %v2411 = vld [vmem:[%s2410] sm:$0xff]
    %v2412 = vld [vmem:[%s2410 + $0x8] sm:$0xff]
    %s2413 = scalar_lea.vmem %s11, 7
    %v2414 = vld [vmem:[%s2413] sm:$0x1]
    %v2416 = vperm.slane %v2414, 0
    %2418 = vmatpush.msra.mxu0 0.0
    %2419 = vmatpush.msra.mxu0 0.0
    %2420 = vmatpush.msra.mxu0 0.0
    %2421 = vmatpush.msra.mxu0 0.0
    %2422 = vmatpush.msra.mxu0 0.0
    %2423 = vmatpush.msra.mxu0 0.0
    %2424 = vmatpush.msra.mxu0 0.0
    %2425 = vmatpush.msra.mxu0 0.0
    %2426 = vmatpush.msra.mxu0 0.0
    %2427 = vmatpush.msra.mxu0 0.0
    %2428 = vmatpush.msra.mxu0 0.0
    %2429 = vmatpush.msra.mxu0 0.0
    %2430 = vmatpush.msra.mxu0 0.0
    %2431 = vmatpush.msra.mxu0 0.0
    %2432 = vmatpush.msra.mxu0 %v2412
    %2433 = vmatpush.msra.mxu0 %v2411
    %2434 = vmatmul.f32.gmra.mxu0 %v1609
    %v2435 = vpop.f32.mrf.mxu0
    %v2436 = vadd.f32 %v2416, %v2435
    %2437 = vmatmul.f32.gmra.mxu0 %v1612
    %v2438 = vpop.f32.mrf.mxu0
    %v2439 = vadd.f32 %v2416, %v2438
    %2440 = vmatmul.f32.gmra.mxu0 %v1615
    %v2441 = vpop.f32.mrf.mxu0
    %v2442 = vadd.f32 %v2416, %v2441
    %2443 = vdwg.mxu0
    %s2444 = scalar_lea.vmem %s13, 112
    %v2445 = vld [vmem:[%s2444] sm:$0xff]
    %v2446 = vld [vmem:[%s2444 + $0x8] sm:$0xff]
    %s2447 = scalar_lea.vmem %s15, 7
    %v2448 = vld [vmem:[%s2447] sm:$0x1]
    %v2450 = vperm.slane %v2448, 0
    %2452 = vmatpush.msra.mxu0 0.0
    %2453 = vmatpush.msra.mxu0 0.0
    %2454 = vmatpush.msra.mxu0 0.0
    %2455 = vmatpush.msra.mxu0 0.0
    %2456 = vmatpush.msra.mxu0 0.0
    %2457 = vmatpush.msra.mxu0 0.0
    %2458 = vmatpush.msra.mxu0 0.0
    %2459 = vmatpush.msra.mxu0 0.0
    %2460 = vmatpush.msra.mxu0 0.0
    %2461 = vmatpush.msra.mxu0 0.0
    %2462 = vmatpush.msra.mxu0 0.0
    %2463 = vmatpush.msra.mxu0 0.0
    %2464 = vmatpush.msra.mxu0 0.0
    %2465 = vmatpush.msra.mxu0 0.0
    %2466 = vmatpush.msra.mxu0 %v2446
    %2467 = vmatpush.msra.mxu0 %v2445
    %2468 = vmatmul.f32.gmra.mxu0 %v1609
    %v2469 = vpop.f32.mrf.mxu0
    %v2470 = vadd.f32 %v2450, %v2469
    %2471 = vmatmul.f32.gmra.mxu0 %v1612
    %v2472 = vpop.f32.mrf.mxu0
    %v2473 = vadd.f32 %v2450, %v2472
    %2474 = vmatmul.f32.gmra.mxu0 %v1615
    %v2475 = vpop.f32.mrf.mxu0
    %v2476 = vadd.f32 %v2450, %v2475
    %2477 = vdwg.mxu0
    %s2478 = scalar_lea.vmem %s17, 112
    %v2479 = vld [vmem:[%s2478] sm:$0xff]
    %v2480 = vld [vmem:[%s2478 + $0x8] sm:$0xff]
    %s2481 = scalar_lea.vmem %s19, 7
    %v2482 = vld [vmem:[%s2481] sm:$0x1]
    %v2484 = vperm.slane %v2482, 0
    %2486 = vmatpush.msra.mxu0 0.0
    %2487 = vmatpush.msra.mxu0 0.0
    %2488 = vmatpush.msra.mxu0 0.0
    %2489 = vmatpush.msra.mxu0 0.0
    %2490 = vmatpush.msra.mxu0 0.0
    %2491 = vmatpush.msra.mxu0 0.0
    %2492 = vmatpush.msra.mxu0 0.0
    %2493 = vmatpush.msra.mxu0 0.0
    %2494 = vmatpush.msra.mxu0 0.0
    %2495 = vmatpush.msra.mxu0 0.0
    %2496 = vmatpush.msra.mxu0 0.0
    %2497 = vmatpush.msra.mxu0 0.0
    %2498 = vmatpush.msra.mxu0 0.0
    %2499 = vmatpush.msra.mxu0 0.0
    %2500 = vmatpush.msra.mxu0 %v2480
    %2501 = vmatpush.msra.mxu0 %v2479
    %2502 = vmatmul.f32.gmra.mxu0 %v1609
    %v2503 = vpop.f32.mrf.mxu0
    %v2504 = vadd.f32 %v2484, %v2503
    %2505 = vmatmul.f32.gmra.mxu0 %v1612
    %v2506 = vpop.f32.mrf.mxu0
    %v2507 = vadd.f32 %v2484, %v2506
    %2508 = vmatmul.f32.gmra.mxu0 %v1615
    %v2509 = vpop.f32.mrf.mxu0
    %v2510 = vadd.f32 %v2484, %v2509
    %2511 = vdwg.mxu0
    %v2513 = vsel %vm243, %v2436, 0
    %v2516 = vsel %vm243, %v2439, 0
    %v2519 = vsel %vm243, %v2442, 0
    %v2522 = vsel %vm243, %v2470, 0
    %v2525 = vsel %vm243, %v2473, 0
    %v2528 = vsel %vm243, %v2476, 0
    %2530 = vmatpush.xpose.msra.mxu0 0.0
    %2531 = vmatpush.xpose.msra.mxu0 0.0
    %2532 = vmatpush.xpose.msra.mxu0 0.0
    %2533 = vmatpush.xpose.msra.mxu0 0.0
    %2534 = vmatpush.xpose.msra.mxu0 0.0
    %2535 = vmatpush.xpose.msra.mxu0 0.0
    %2536 = vmatpush.xpose.msra.mxu0 0.0
    %2537 = vmatpush.xpose.msra.mxu0 0.0
    %2538 = vmatpush.xpose.msra.mxu0 0.0
    %2539 = vmatpush.xpose.msra.mxu0 0.0
    %2540 = vmatpush.xpose.msra.mxu0 0.0
    %2541 = vmatpush.xpose.msra.mxu0 0.0
    %2542 = vmatpush.xpose.msra.mxu0 0.0
    %2543 = vmatpush.xpose.msra.mxu0 %v2528
    %2544 = vmatpush.xpose.msra.mxu0 %v2525
    %2545 = vmatpush.xpose.msra.mxu0 %v2522
    %2546 = vmatmul.f32.gmra.mxu0 %v2513
    %v2547 = vpop.f32.mrf.mxu0
    %v2548 = vadd.f32 %v135, %v2547
    %2549 = vmatmul.f32.gmra.mxu0 %v2516
    %v2550 = vpop.f32.mrf.mxu0
    %v2551 = vadd.f32 %v136, %v2550
    %2552 = vmatmul.f32.gmra.mxu0 %v2519
    %v2553 = vpop.f32.mrf.mxu0
    %v2554 = vadd.f32 %v137, %v2553
    %2555 = vdwg.mxu0
    %v2556 = vsel %vm288, %v2548, -inf
    %2557 = vmax.xlane.f32.xlu0 %v2556
    %v2558 = vpop.xlane.xlu0 %2557
    %v2559 = vsel %vm288, %v2551, -inf
    %2560 = vmax.xlane.f32.xlu0 %v2559
    %v2561 = vpop.xlane.xlu0 %2560
    %v2562 = vsel %vm295, %v2554, -inf
    %2563 = vmax.xlane.f32.xlu0 %v2562
    %v2564 = vpop.xlane.xlu0 %2563
    %v2565 = vsub.f32 %v2548, %v2558
    %v2566 = vsub.f32 %v2551, %v2561
    %v2567 = vsub.f32 %v2554, %v2564
    %v2568 = vmul.f32 %v2565, 1.442695
    %v2569 = vpow.pop %v2568
    %v2570 = vmul.f32 %v2566, 1.442695
    %v2571 = vpow.pop %v2570
    %v2572 = vmul.f32 %v2567, 1.442695
    %v2573 = vpow.pop %v2572
    %v2574 = vsel %vm288, %v2569, 0.0
    %2575 = vadd.xlane.f32.xlu0 %v2574
    %v2576 = vpop.xlane.xlu0 %2575
    %v2577 = vsel %vm288, %v2571, 0.0
    %2578 = vadd.xlane.f32.xlu0 %v2577
    %v2579 = vpop.xlane.xlu0 %2578
    %v2580 = vsel %vm295, %v2573, 0.0
    %2581 = vadd.xlane.f32.xlu0 %v2580
    %v2582 = vpop.xlane.xlu0 %2581
    %v2583 = vrcp.pop %v2576
    %v2584 = vrcp.pop %v2579
    %v2585 = vrcp.pop %v2582
    %v2586 = vmul.f32 %v2576, %v2583
    %v2587 = vmul.f32 %v2579, %v2584
    %v2588 = vmul.f32 %v2582, %v2585
    %v2589 = vsub.f32 2.0, %v2586
    %v2590 = vsub.f32 2.0, %v2587
    %v2591 = vsub.f32 2.0, %v2588
    %v2592 = vmul.f32 %v2583, %v2589
    %v2593 = vmul.f32 %v2584, %v2590
    %v2594 = vmul.f32 %v2585, %v2591
    %v2595 = vmul.f32 %v2569, %v2592
    %v2596 = vmul.f32 %v2571, %v2593
    %v2597 = vmul.f32 %v2573, %v2594
    %v2599 = vsel %vm288, %v2595, 0
    %v2602 = vsel %vm288, %v2596, 0
    %v2605 = vsel %vm288, %v2597, 0
    %v2608 = vsel %vm341, %v2510, 0
    %2610 = vmatpush.msra.mxu0 0.0
    %2611 = vmatpush.msra.mxu0 0.0
    %2612 = vmatpush.msra.mxu0 0.0
    %2613 = vmatpush.msra.mxu0 0.0
    %2614 = vmatpush.msra.mxu0 0.0
    %2615 = vmatpush.msra.mxu0 0.0
    %2616 = vmatpush.msra.mxu0 0.0
    %2617 = vmatpush.msra.mxu0 0.0
    %2618 = vmatpush.msra.mxu0 0.0
    %2619 = vmatpush.msra.mxu0 0.0
    %2620 = vmatpush.msra.mxu0 0.0
    %2621 = vmatpush.msra.mxu0 0.0
    %2622 = vmatpush.msra.mxu0 0.0
    %2623 = vmatpush.msra.mxu0 %v2608
    %2624 = vmatpush.msra.mxu0 %v2507
    %2625 = vmatpush.msra.mxu0 %v2504
    %2626 = vmatmul.f32.gmra.mxu0 %v2599
    %v2627 = vpop.f32.mrf.mxu0
    %v2628 = vadd.f32 0.0, %v2627
    %2629 = vmatmul.f32.gmra.mxu0 %v2602
    %v2630 = vpop.f32.mrf.mxu0
    %v2631 = vadd.f32 0.0, %v2630
    %2632 = vmatmul.f32.gmra.mxu0 %v2605
    %v2633 = vpop.f32.mrf.mxu0
    %v2634 = vadd.f32 0.0, %v2633
    %2635 = vdwg.mxu0
    %s2636 = scalar_lea.vmem %s21, 28
    %v2637 = vld [vmem:[%s2636] sm:$0xf]
    %v2639 = vsel %vm243, %v2628, 0
    %v2642 = vsel %vm243, %v2631, 0
    %v2645 = vsel %vm243, %v2634, 0
    %v2648 = vsel %vm609, %v2637, 0
    %2650 = vmatpush.msra.mxu0 0.0
    %2651 = vmatpush.msra.mxu0 0.0
    %2652 = vmatpush.msra.mxu0 0.0
    %2653 = vmatpush.msra.mxu0 0.0
    %2654 = vmatpush.msra.mxu0 0.0
    %2655 = vmatpush.msra.mxu0 0.0
    %2656 = vmatpush.msra.mxu0 0.0
    %2657 = vmatpush.msra.mxu0 0.0
    %2658 = vmatpush.msra.mxu0 0.0
    %2659 = vmatpush.msra.mxu0 0.0
    %2660 = vmatpush.msra.mxu0 0.0
    %2661 = vmatpush.msra.mxu0 0.0
    %2662 = vmatpush.msra.mxu0 0.0
    %2663 = vmatpush.msra.mxu0 0.0
    %2664 = vmatpush.msra.mxu0 0.0
    %2665 = vmatpush.msra.mxu0 %v2648
    %2666 = vmatmul.f32.gmra.mxu0 %v2639
    %v2667 = vpop.f32.mrf.mxu0
    %v2668 = vadd.f32 0.0, %v2667
    %2669 = vmatmul.f32.gmra.mxu0 %v2642
    %v2670 = vpop.f32.mrf.mxu0
    %v2671 = vadd.f32 0.0, %v2670
    %2672 = vmatmul.f32.gmra.mxu0 %v2645
    %v2673 = vpop.f32.mrf.mxu0
    %v2674 = vadd.f32 0.0, %v2673
    %2675 = vdwg.mxu0
    %v2676 = vadd.f32 %v2407, %v2668
    %v2677 = vadd.f32 %v2408, %v2671
    %v2678 = vadd.f32 %v2409, %v2674
    %s2679 = scalar_lea.vmem %s23, 1
    %v2680 = vld [vmem:[%s2679] sm:$0x1]
    %v2682 = vperm.slane %v2680, 0
    %v2684 = vadd.f32 %v2676, %v2682
    %v2685 = vadd.f32 %v2677, %v2682
    %v2686 = vadd.f32 %v2678, %v2682
    %v2687 = vadd.f32 %v1597, %v2684
    %v2688 = vadd.f32 %v1598, %v2685
    %v2689 = vadd.f32 %v1599, %v2686
    %s2690 = scalar_lea.vmem %s33, 1
    %v2691 = vld [vmem:[%s2690] sm:$0x1]
    %s2692 = scalar_lea.vmem %s35, 1
    %v2693 = vld [vmem:[%s2692] sm:$0x1]
    %v2694 = vsel %vm129, %v2687, 0.0
    %2695 = vadd.xlane.f32.xlu0 %v2694
    %v2696 = vpop.xlane.xlu0 %2695
    %v2697 = vsel %vm129, %v2688, 0.0
    %2698 = vadd.xlane.f32.xlu0 %v2697
    %v2699 = vpop.xlane.xlu0 %2698
    %v2700 = vsel %vm121, %v2689, 0.0
    %2701 = vadd.xlane.f32.xlu0 %v2700
    %v2702 = vpop.xlane.xlu0 %2701
    %v2703 = vmul.f32 %v2696, %v1242
    %v2704 = vmul.f32 %v2699, %v1242
    %v2705 = vmul.f32 %v2702, %v1242
    %v2706 = vsub.f32 %v2687, %v2703
    %v2707 = vsub.f32 %v2688, %v2704
    %v2708 = vsub.f32 %v2689, %v2705
    %v2709 = vmul.f32 %v2706, %v2706
    %v2710 = vmul.f32 %v2707, %v2707
    %v2711 = vmul.f32 %v2708, %v2708
    %v2712 = vsel %vm129, %v2709, 0.0
    %2713 = vadd.xlane.f32.xlu0 %v2712
    %v2714 = vpop.xlane.xlu0 %2713
    %v2715 = vsel %vm129, %v2710, 0.0
    %2716 = vadd.xlane.f32.xlu0 %v2715
    %v2717 = vpop.xlane.xlu0 %2716
    %v2718 = vsel %vm121, %v2711, 0.0
    %2719 = vadd.xlane.f32.xlu0 %v2718
    %v2720 = vpop.xlane.xlu0 %2719
    %v2721 = vmul.f32 %v2714, %v1242
    %v2722 = vmul.f32 %v2717, %v1242
    %v2723 = vmul.f32 %v2720, %v1242
    %v2724 = vadd.f32 %v2721, 1e-05
    %v2725 = vadd.f32 %v2722, 1e-05
    %v2726 = vadd.f32 %v2723, 1e-05
    %v2727 = vrsqrt.pop %v2724
    %v2728 = vmul.f32 %v2727, %v2724
    %v2729 = vmul.f32 %v2728, %v2727
    %v2730 = vmul.f32 0.5, %v2729
    %v2731 = vsub.f32 1.5, %v2730
    %v2732 = vmul.f32 %v2727, %v2731
    %vm2733 = vweird.f32 %v2724
    %vm2734 = vweird.f32 %v2727
    %vm2735 = vmor %vm2733, %vm2734
    %v2736 = vsel %vm2735, %v2727, %v2732
    %v2737 = vrsqrt.pop %v2725
    %v2738 = vmul.f32 %v2737, %v2725
    %v2739 = vmul.f32 %v2738, %v2737
    %v2740 = vmul.f32 0.5, %v2739
    %v2741 = vsub.f32 1.5, %v2740
    %v2742 = vmul.f32 %v2737, %v2741
    %vm2743 = vweird.f32 %v2725
    %vm2744 = vweird.f32 %v2737
    %vm2745 = vmor %vm2743, %vm2744
    %v2746 = vsel %vm2745, %v2737, %v2742
    %v2747 = vrsqrt.pop %v2726
    %v2748 = vmul.f32 %v2747, %v2726
    %v2749 = vmul.f32 %v2748, %v2747
    %v2750 = vmul.f32 0.5, %v2749
    %v2751 = vsub.f32 1.5, %v2750
    %v2752 = vmul.f32 %v2747, %v2751
    %vm2753 = vweird.f32 %v2726
    %vm2754 = vweird.f32 %v2747
    %vm2755 = vmor %vm2753, %vm2754
    %v2756 = vsel %vm2755, %v2747, %v2752
    %v2757 = vmul.f32 %v2706, %v2736
    %v2758 = vmul.f32 %v2707, %v2746
    %v2759 = vmul.f32 %v2708, %v2756
    %v2761 = vperm.slane %v2691, 0
    %v2763 = vmul.f32 %v2757, %v2761
    %v2764 = vmul.f32 %v2758, %v2761
    %v2765 = vmul.f32 %v2759, %v2761
    %v2767 = vperm.slane %v2693, 0
    %v2769 = vadd.f32 %v2763, %v2767
    %v2770 = vadd.f32 %v2764, %v2767
    %v2771 = vadd.f32 %v2765, %v2767
    %s2772 = scalar_lea.vmem %s25, 16
    %v2773 = vld [vmem:[%s2772] sm:$0xff]
    %v2774 = vld [vmem:[%s2772 + $0x8] sm:$0xff]
    %s2775 = scalar_lea.vmem %s27, 1
    %v2776 = vld [vmem:[%s2775] sm:$0x1]
    %v2778 = vperm.slane %v2776, 0
    %v2781 = vsel %vm129, %v2769, 0
    %v2784 = vsel %vm129, %v2770, 0
    %v2787 = vsel %vm129, %v2771, 0
    %2789 = vmatpush.msra.mxu0 0.0
    %2790 = vmatpush.msra.mxu0 0.0
    %2791 = vmatpush.msra.mxu0 0.0
    %2792 = vmatpush.msra.mxu0 0.0
    %2793 = vmatpush.msra.mxu0 0.0
    %2794 = vmatpush.msra.mxu0 0.0
    %2795 = vmatpush.msra.mxu0 0.0
    %2796 = vmatpush.msra.mxu0 0.0
    %2797 = vmatpush.msra.mxu0 0.0
    %2798 = vmatpush.msra.mxu0 0.0
    %2799 = vmatpush.msra.mxu0 0.0
    %2800 = vmatpush.msra.mxu0 0.0
    %2801 = vmatpush.msra.mxu0 0.0
    %2802 = vmatpush.msra.mxu0 0.0
    %2803 = vmatpush.msra.mxu0 %v2774
    %2804 = vmatpush.msra.mxu0 %v2773
    %2805 = vmatmul.f32.gmra.mxu0 %v2781
    %v2806 = vpop.f32.mrf.mxu0
    %v2807 = vadd.f32 %v2778, %v2806
    %2808 = vmatmul.f32.gmra.mxu0 %v2784
    %v2809 = vpop.f32.mrf.mxu0
    %v2810 = vadd.f32 %v2778, %v2809
    %2811 = vmatmul.f32.gmra.mxu0 %v2787
    %v2812 = vpop.f32.mrf.mxu0
    %v2813 = vadd.f32 %v2778, %v2812
    %2814 = vdwg.mxu0
    %v2815 = vmul.f32 %v2807, 0.70710677
    %v2816 = vmul.f32 %v2810, 0.70710677
    %v2817 = vmul.f32 %v2813, 0.70710677
    %v2818 = vand.u32 2147483647, %v2815
    %v2819 = vand.u32 2147483647, %v2816
    %v2820 = vand.u32 2147483647, %v2817
    %v2821 = vmul.f32 %v2818, 0.3275911
    %v2822 = vmul.f32 %v2819, 0.3275911
    %v2823 = vmul.f32 %v2820, 0.3275911
    %v2824 = vadd.f32 %v2821, 1.0
    %v2825 = vadd.f32 %v2822, 1.0
    %v2826 = vadd.f32 %v2823, 1.0
    %v2827 = vrcp.pop %v2824
    %v2828 = vmul.f32 %v2824, %v2827
    %v2829 = vsub.f32 1.0, %v2828
    %v2830 = vmul.f32 %v2827, %v2829
    %v2831 = vadd.f32 %v2827, %v2830
    %vm2832 = vweird.f32 %v2824
    %vm2833 = vweird.f32 %v2827
    %vm2834 = vmor %vm2832, %vm2833
    %v2835 = vsel %vm2834, %v2827, %v2831
    %v2836 = vand.u32 2147483647, %v2824
    %vm2837 = vcmp.eq.f32.partialorder %v2836, 8.507059e+37
    %v2838 = vand.u32 %v2824, 2147483648
    %v2839 = vor.u32 1.1754944e-38, %v2838
    %v2840 = vsel %vm2837, %v2839, %v2835
    %v2841 = vmul.f32 1.0, %v2840
    %v2842 = vrcp.pop %v2825
    %v2843 = vmul.f32 %v2825, %v2842
    %v2844 = vsub.f32 1.0, %v2843
    %v2845 = vmul.f32 %v2842, %v2844
    %v2846 = vadd.f32 %v2842, %v2845
    %vm2847 = vweird.f32 %v2825
    %vm2848 = vweird.f32 %v2842
    %vm2849 = vmor %vm2847, %vm2848
    %v2850 = vsel %vm2849, %v2842, %v2846
    %v2851 = vand.u32 2147483647, %v2825
    %vm2852 = vcmp.eq.f32.partialorder %v2851, 8.507059e+37
    %v2853 = vand.u32 %v2825, 2147483648
    %v2854 = vor.u32 1.1754944e-38, %v2853
    %v2855 = vsel %vm2852, %v2854, %v2850
    %v2856 = vmul.f32 1.0, %v2855
    %v2857 = vrcp.pop %v2826
    %v2858 = vmul.f32 %v2826, %v2857
    %v2859 = vsub.f32 1.0, %v2858
    %v2860 = vmul.f32 %v2857, %v2859
    %v2861 = vadd.f32 %v2857, %v2860
    %vm2862 = vweird.f32 %v2826
    %vm2863 = vweird.f32 %v2857
    %vm2864 = vmor %vm2862, %vm2863
    %v2865 = vsel %vm2864, %v2857, %v2861
    %v2866 = vand.u32 2147483647, %v2826
    %vm2867 = vcmp.eq.f32.partialorder %v2866, 8.507059e+37
    %v2868 = vand.u32 %v2826, 2147483648
    %v2869 = vor.u32 1.1754944e-38, %v2868
    %v2870 = vsel %vm2867, %v2869, %v2865
    %v2871 = vmul.f32 1.0, %v2870
    %v2872 = vmul.f32 %v2841, 1.0614054
    %v2873 = vmul.f32 %v2856, 1.0614054
    %v2874 = vmul.f32 %v2871, 1.0614054
    %v2875 = vadd.f32 %v2872, -1.4531521
    %v2876 = vadd.f32 %v2873, -1.4531521
    %v2877 = vadd.f32 %v2874, -1.4531521
    %v2878 = vmul.f32 %v2841, %v2875
    %v2879 = vmul.f32 %v2856, %v2876
    %v2880 = vmul.f32 %v2871, %v2877
    %v2881 = vadd.f32 %v2878, 1.4214138
    %v2882 = vadd.f32 %v2879, 1.4214138
    %v2883 = vadd.f32 %v2880, 1.4214138
    %v2884 = vmul.f32 %v2841, %v2881
    %v2885 = vmul.f32 %v2856, %v2882
    %v2886 = vmul.f32 %v2871, %v2883
    %v2887 = vadd.f32 %v2884, -0.28449672
    %v2888 = vadd.f32 %v2885, -0.28449672
    %v2889 = vadd.f32 %v2886, -0.28449672
    %v2890 = vmul.f32 %v2841, %v2887
    %v2891 = vmul.f32 %v2856, %v2888
    %v2892 = vmul.f32 %v2871, %v2889
    %v2893 = vadd.f32 %v2890, 0.2548296
    %v2894 = vadd.f32 %v2891, 0.2548296
    %v2895 = vadd.f32 %v2892, 0.2548296
    %v2896 = vmul.f32 %v2841, %v2893
    %v2897 = vmul.f32 %v2856, %v2894
    %v2898 = vmul.f32 %v2871, %v2895
    %v2899 = vsub.f32 0.0, %v2818
    %v2900 = vsub.f32 0.0, %v2819
    %v2901 = vsub.f32 0.0, %v2820
    %v2902 = vmul.f32 %v2899, %v2818
    %v2903 = vmul.f32 %v2900, %v2819
    %v2904 = vmul.f32 %v2901, %v2820
    %v2905 = vmul.f32 %v2902, 1.442695
    %v2906 = vpow.pop %v2905
    %v2907 = vmul.f32 %v2903, 1.442695
    %v2908 = vpow.pop %v2907
    %v2909 = vmul.f32 %v2904, 1.442695
    %v2910 = vpow.pop %v2909
    %v2911 = vmul.f32 %v2896, %v2906
    %v2912 = vmul.f32 %v2897, %v2908
    %v2913 = vmul.f32 %v2898, %v2910
    %v2914 = vsub.f32 1.0, %v2911
    %v2915 = vsub.f32 1.0, %v2912
    %v2916 = vsub.f32 1.0, %v2913
    %vm2917 = vcmp.ge.f32.partialorder %v2815, 0.0
    %vm2918 = vcmp.ge.f32.partialorder %v2816, 0.0
    %vm2919 = vcmp.ge.f32.partialorder %v2817, 0.0
    %v2920 = vsub.f32 0.0, %v2914
    %v2921 = vsub.f32 0.0, %v2915
    %v2922 = vsub.f32 0.0, %v2916
    %v2923 = vsel %vm2917, %v2914, %v2920
    %v2924 = vsel %vm2918, %v2915, %v2921
    %v2925 = vsel %vm2919, %v2916, %v2922
    %v2926 = vmul.f32 %v2807, 0.5
    %v2927 = vmul.f32 %v2810, 0.5
    %v2928 = vmul.f32 %v2813, 0.5
    %v2929 = vadd.f32 %v2923, 1.0
    %v2930 = vadd.f32 %v2924, 1.0
    %v2931 = vadd.f32 %v2925, 1.0
    %v2932 = vmul.f32 %v2926, %v2929
    %v2933 = vmul.f32 %v2927, %v2930
    %v2934 = vmul.f32 %v2928, %v2931
    %s2935 = scalar_lea.vmem %s29, 32
    %v2936 = vld [vmem:[%s2935] sm:$0xff]
    %v2937 = vld [vmem:[%s2935 + $0x8] sm:$0xff]
    %v2938 = vld [vmem:[%s2935 + $0x10] sm:$0xff]
    %v2939 = vld [vmem:[%s2935 + $0x18] sm:$0xff]
    %s2940 = scalar_lea.vmem %s31, 1
    %v2941 = vld [vmem:[%s2940] sm:$0x1]
    %v2943 = vperm.slane %v2941, 0
    %v2946 = vsel %vm1481, %v2932, 0
    %v2949 = vsel %vm1481, %v2933, 0
    %v2952 = vsel %vm1481, %v2934, 0
    %2954 = vmatpush.msra.mxu0 0.0
    %2955 = vmatpush.msra.mxu0 0.0
    %2956 = vmatpush.msra.mxu0 0.0
    %2957 = vmatpush.msra.mxu0 0.0
    %2958 = vmatpush.msra.mxu0 0.0
    %2959 = vmatpush.msra.mxu0 0.0
    %2960 = vmatpush.msra.mxu0 0.0
    %2961 = vmatpush.msra.mxu0 0.0
    %2962 = vmatpush.msra.mxu0 0.0
    %2963 = vmatpush.msra.mxu0 0.0
    %2964 = vmatpush.msra.mxu0 0.0
    %2965 = vmatpush.msra.mxu0 0.0
    %2966 = vmatpush.msra.mxu0 %v2939
    %2967 = vmatpush.msra.mxu0 %v2938
    %2968 = vmatpush.msra.mxu0 %v2937
    %2969 = vmatpush.msra.mxu0 %v2936
    %2970 = vmatmul.f32.gmra.mxu0 %v2946
    %v2971 = vpop.f32.mrf.mxu0
    %v2972 = vadd.f32 %v2943, %v2971
    %2973 = vmatmul.f32.gmra.mxu0 %v2949
    %v2974 = vpop.f32.mrf.mxu0
    %v2975 = vadd.f32 %v2943, %v2974
    %2976 = vmatmul.f32.gmra.mxu0 %v2952
    %v2977 = vpop.f32.mrf.mxu0
    %v2978 = vadd.f32 %v2943, %v2977
    %2979 = vdwg.mxu0
    %v2980 = vadd.f32 %v2769, %v2972
    %v2981 = vadd.f32 %v2770, %v2975
    %v2982 = vadd.f32 %v2771, %v2978
    %s2983 = scalar_lea.vmem %s37, 1
    %v2984 = vld [vmem:[%s2983] sm:$0x1]
    %s2985 = scalar_lea.vmem %s39, 1
    %v2986 = vld [vmem:[%s2985] sm:$0x1]
    %v2987 = vsel %vm129, %v2980, 0.0
    %2988 = vadd.xlane.f32.xlu0 %v2987
    %v2989 = vpop.xlane.xlu0 %2988
    %v2990 = vsel %vm129, %v2981, 0.0
    %2991 = vadd.xlane.f32.xlu0 %v2990
    %v2992 = vpop.xlane.xlu0 %2991
    %v2993 = vsel %vm121, %v2982, 0.0
    %2994 = vadd.xlane.f32.xlu0 %v2993
    %v2995 = vpop.xlane.xlu0 %2994
    %v2996 = vmul.f32 %v2989, %v1242
    %v2997 = vmul.f32 %v2992, %v1242
    %v2998 = vmul.f32 %v2995, %v1242
    %v2999 = vsub.f32 %v2980, %v2996
    %v3000 = vsub.f32 %v2981, %v2997
    %v3001 = vsub.f32 %v2982, %v2998
    %v3002 = vmul.f32 %v2999, %v2999
    %v3003 = vmul.f32 %v3000, %v3000
    %v3004 = vmul.f32 %v3001, %v3001
    %v3005 = vsel %vm129, %v3002, 0.0
    %3006 = vadd.xlane.f32.xlu0 %v3005
    %v3007 = vpop.xlane.xlu0 %3006
    %v3008 = vsel %vm129, %v3003, 0.0
    %3009 = vadd.xlane.f32.xlu0 %v3008
    %v3010 = vpop.xlane.xlu0 %3009
    %v3011 = vsel %vm121, %v3004, 0.0
    %3012 = vadd.xlane.f32.xlu0 %v3011
    %v3013 = vpop.xlane.xlu0 %3012
    %v3014 = vmul.f32 %v3007, %v1242
    %v3015 = vmul.f32 %v3010, %v1242
    %v3016 = vmul.f32 %v3013, %v1242
    %v3017 = vadd.f32 %v3014, 1e-05
    %v3018 = vadd.f32 %v3015, 1e-05
    %v3019 = vadd.f32 %v3016, 1e-05
    %v3020 = vrsqrt.pop %v3017
    %v3021 = vmul.f32 %v3020, %v3017
    %v3022 = vmul.f32 %v3021, %v3020
    %v3023 = vmul.f32 0.5, %v3022
    %v3024 = vsub.f32 1.5, %v3023
    %v3025 = vmul.f32 %v3020, %v3024
    %vm3026 = vweird.f32 %v3017
    %vm3027 = vweird.f32 %v3020
    %vm3028 = vmor %vm3026, %vm3027
    %v3029 = vsel %vm3028, %v3020, %v3025
    %v3030 = vrsqrt.pop %v3018
    %v3031 = vmul.f32 %v3030, %v3018
    %v3032 = vmul.f32 %v3031, %v3030
    %v3033 = vmul.f32 0.5, %v3032
    %v3034 = vsub.f32 1.5, %v3033
    %v3035 = vmul.f32 %v3030, %v3034
    %vm3036 = vweird.f32 %v3018
    %vm3037 = vweird.f32 %v3030
    %vm3038 = vmor %vm3036, %vm3037
    %v3039 = vsel %vm3038, %v3030, %v3035
    %v3040 = vrsqrt.pop %v3019
    %v3041 = vmul.f32 %v3040, %v3019
    %v3042 = vmul.f32 %v3041, %v3040
    %v3043 = vmul.f32 0.5, %v3042
    %v3044 = vsub.f32 1.5, %v3043
    %v3045 = vmul.f32 %v3040, %v3044
    %vm3046 = vweird.f32 %v3019
    %vm3047 = vweird.f32 %v3040
    %vm3048 = vmor %vm3046, %vm3047
    %v3049 = vsel %vm3048, %v3040, %v3045
    %v3050 = vmul.f32 %v2999, %v3029
    %v3051 = vmul.f32 %v3000, %v3039
    %v3052 = vmul.f32 %v3001, %v3049
    %v3054 = vperm.slane %v2984, 0
    %v3056 = vmul.f32 %v3050, %v3054
    %v3057 = vmul.f32 %v3051, %v3054
    %v3058 = vmul.f32 %v3052, %v3054
    %v3060 = vperm.slane %v2986, 0
    %v3062 = vadd.f32 %v3056, %v3060
    %v3063 = vadd.f32 %v3057, %v3060
    %v3064 = vadd.f32 %v3058, %v3060
    %v3065 = vld [vmem:[%s41] sm:$0x3]
    %v3067 = vsel %vm288, %v3065, 0
    %v3070 = vsel %vm341, %v3064, 0
    %3072 = vmatpush.msra.mxu0 0.0
    %3073 = vmatpush.msra.mxu0 0.0
    %3074 = vmatpush.msra.mxu0 0.0
    %3075 = vmatpush.msra.mxu0 0.0
    %3076 = vmatpush.msra.mxu0 0.0
    %3077 = vmatpush.msra.mxu0 0.0
    %3078 = vmatpush.msra.mxu0 0.0
    %3079 = vmatpush.msra.mxu0 0.0
    %3080 = vmatpush.msra.mxu0 0.0
    %3081 = vmatpush.msra.mxu0 0.0
    %3082 = vmatpush.msra.mxu0 0.0
    %3083 = vmatpush.msra.mxu0 0.0
    %3084 = vmatpush.msra.mxu0 0.0
    %3085 = vmatpush.msra.mxu0 %v3070
    %3086 = vmatpush.msra.mxu0 %v3063
    %3087 = vmatpush.msra.mxu0 %v3062
    %3088 = vmatmul.f32.gmra.mxu0 %v3067
    %v3089 = vpop.f32.mrf.mxu0
    %v3090 = vadd.f32 0.0, %v3089
    %3091 = vdwg.mxu0
    %v3092 = vld [vmem:[%s43] sm:$0xff]
    %v3093 = vld [vmem:[%s43 + $0x8] sm:$0xff]
    %v3094 = vld [vmem:[%s45] sm:$0x1]
    %v3096 = vperm.slane %v3094, 0
    %v3099 = vsel %vm129, %v3090, 0
    %3101 = vmatpush.msra.mxu0 0.0
    %3102 = vmatpush.msra.mxu0 0.0
    %3103 = vmatpush.msra.mxu0 0.0
    %3104 = vmatpush.msra.mxu0 0.0
    %3105 = vmatpush.msra.mxu0 0.0
    %3106 = vmatpush.msra.mxu0 0.0
    %3107 = vmatpush.msra.mxu0 0.0
    %3108 = vmatpush.msra.mxu0 0.0
    %3109 = vmatpush.msra.mxu0 0.0
    %3110 = vmatpush.msra.mxu0 0.0
    %3111 = vmatpush.msra.mxu0 0.0
    %3112 = vmatpush.msra.mxu0 0.0
    %3113 = vmatpush.msra.mxu0 0.0
    %3114 = vmatpush.msra.mxu0 0.0
    %3115 = vmatpush.msra.mxu0 %v3093
    %3116 = vmatpush.msra.mxu0 %v3092
    %3117 = vmatmul.f32.gmra.mxu0 %v3099
    %v3118 = vpop.f32.mrf.mxu0
    %v3119 = vadd.f32 %v3096, %v3118
    %3120 = vdwg.mxu0
    %vm3121 = vcmask 25600
    %3122 = vst.msk [vmem:[%s57] sm:$0x3] %vm3121, %v3119
    %v3123 = vld [vmem:[%s47] sm:$0xff]
    %v3124 = vld [vmem:[%s47 + $0x8] sm:$0xff]
    %v3125 = vld [vmem:[%s49] sm:$0x1]
    %v3127 = vperm.slane %v3125, 0
    %3129 = vmatpush.msra.mxu0 0.0
    %3130 = vmatpush.msra.mxu0 0.0
    %3131 = vmatpush.msra.mxu0 0.0
    %3132 = vmatpush.msra.mxu0 0.0
    %3133 = vmatpush.msra.mxu0 0.0
    %3134 = vmatpush.msra.mxu0 0.0
    %3135 = vmatpush.msra.mxu0 0.0
    %3136 = vmatpush.msra.mxu0 0.0
    %3137 = vmatpush.msra.mxu0 0.0
    %3138 = vmatpush.msra.mxu0 0.0
    %3139 = vmatpush.msra.mxu0 0.0
    %3140 = vmatpush.msra.mxu0 0.0
    %3141 = vmatpush.msra.mxu0 0.0
    %3142 = vmatpush.msra.mxu0 0.0
    %3143 = vmatpush.msra.mxu0 %v3124
    %3144 = vmatpush.msra.mxu0 %v3123
    %3145 = vmatmul.f32.gmra.mxu0 %v3099
    %v3146 = vpop.f32.mrf.mxu0
    %v3147 = vadd.f32 %v3127, %v3146
    %3148 = vdwg.mxu0
    %3149 = vst.msk [vmem:[#allocation3] sm:$0x3] %vm3121, %v3147
    %v3150 = vld [vmem:[%s51] sm:$0xff]
    %v3151 = vld [vmem:[%s51 + $0x8] sm:$0xff]
    %v3152 = vld [vmem:[%s53] sm:$0x1]
    %v3154 = vperm.slane %v3152, 0
    %3156 = vmatpush.msra.mxu0 0.0
    %3157 = vmatpush.msra.mxu0 0.0
    %3158 = vmatpush.msra.mxu0 0.0
    %3159 = vmatpush.msra.mxu0 0.0
    %3160 = vmatpush.msra.mxu0 0.0
    %3161 = vmatpush.msra.mxu0 0.0
    %3162 = vmatpush.msra.mxu0 0.0
    %3163 = vmatpush.msra.mxu0 0.0
    %3164 = vmatpush.msra.mxu0 0.0
    %3165 = vmatpush.msra.mxu0 0.0
    %3166 = vmatpush.msra.mxu0 0.0
    %3167 = vmatpush.msra.mxu0 0.0
    %3168 = vmatpush.msra.mxu0 0.0
    %3169 = vmatpush.msra.mxu0 0.0
    %3170 = vmatpush.msra.mxu0 %v3151
    %3171 = vmatpush.msra.mxu0 %v3150
    %3172 = vmatmul.f32.gmra.mxu0 %v3099
    %v3173 = vpop.f32.mrf.mxu0
    %v3174 = vadd.f32 %v3154, %v3173
    %3175 = vdwg.mxu0
    %3176 = vst [vmem:[%s55] sm:$0x3] %v3174
    // Predicated region
    $region110: #{forward.1} parent=1 // pred_check
      _
    $region111: #{forward.1} parent=1 // pred_check_branch
      %3178 = sbr.rel (0) target = $region113
    $region112: #{forward.1} parent=1 // pred_region
      _
    $region113: #{forward.1} parent=1 // pred_fallthru
      _
    // Predicated region
    $region114: #{forward.1} parent=1 // pred_check
      _
    $region115: #{forward.1} parent=1 // pred_check_branch
      %3180 = sbr.rel (0) target = $region117
    $region116: #{forward.1} parent=1 // pred_region
      _
    $region117: #{forward.1} parent=1 // pred_fallthru
      _
    // Predicated region
    $region118: #{forward.1} parent=1 // pred_check
      _
    $region119: #{forward.1} parent=1 // pred_check_branch
      %3182 = sbr.rel (0) target = $region121
    $region120: #{forward.1} parent=1 // pred_region
      %3184 = vsyncadd [#allocation4], 0
      %s3186 = sshll.u32 [#allocation3], 4
      %s3187 = int_to_ptr.vmem [resolvable:$true] %s3186
      %s3188 = sshll.u32 %s59, 4
      %s3189 = int_to_ptr.hbm [resolvable:$true] %s3188
      %3191 = dma.vmem_to_hbm [thread:$0]  %s3187, 32, %s3189, [#allocation4]
    $region121: #{forward.1} parent=1 // pred_fallthru
      _
    // Predicated region
    $region122: #{forward.1} parent=1 // pred_check
      _
    $region123: #{forward.1} parent=1 // pred_check_branch
      %3193 = sbr.rel (0) target = $region125
    $region124: #{forward.1} parent=1 // pred_region
      _
    $region125: #{forward.1} parent=1 // pred_fallthru
      _
    // Predicated region
    $region126: #{forward.1} parent=1 // pred_check
      _
    $region127: #{forward.1} parent=1 // pred_check_branch
      %3195 = sbr.rel (0) target = $region129
    $region128: #{forward.1} parent=1 // pred_region
      _
    $region129: #{forward.1} parent=1 // pred_fallthru
      _
    // Predicated region
    $region130: #{forward.1} parent=1 // pred_check
      _
    $region131: #{forward.1} parent=1 // pred_check_branch
      %3197 = sbr.rel (0) target = $region133
    $region132: #{forward.1} parent=1 // pred_region
      %3199 = dma.done [#allocation4], 32
    $region133: #{forward.1} parent=1 // pred_fallthru
      _
    %3200 = vsyncpa [#allocation4], 1

</llo_original>
